<compile_context>
chip_gen: v7x
topology: tpu7x:2x2x1
jax: 0.10.0
libtpu: 0.0.40
codegen_flags: <defaults>
</compile_context>

<pallas_src>
import math
from functools import partial

import numpy as np

import jax
import jax.numpy as jnp
from jax.experimental import pallas as pl
from jax.experimental.pallas import tpu as pltpu


# ------------------------------ Pallas kernel -------------------------------

def _lenet_kernel(x_ref, bm1_ref, b1_ref, l1_ref, r1_ref,
                  bm2_ref, b2_ref, l2_ref, r2_ref,
                  wfc1_ref, bfc1_ref, wfc2_ref, bfc2_ref,
                  wfc3_ref, bfc3_ref, out_ref):
    """One batch sample of LeNet; dense + hash streams fused in the lane dim."""
    f32, bf16 = jnp.float32, jnp.bfloat16
    k = bm1_ref.shape[0]               # conv kernel size (5)
    h_in = x_ref.shape[0]              # 32
    ho1 = h_in - k + 1                 # 28 (conv1 output height)
    hpool1 = ho1 // 2                  # 14
    ho2 = hpool1 - k + 1               # 10 (conv2 output height)
    n_fc_rows = wfc1_ref.shape[0]      # 5 (pooled rows feeding fc1)

    def mm(a, b):
        return jnp.dot(a, b, preferred_element_type=f32)   # f32 accumulation

    # ---- conv1 (dense|hash output channels concatenated; shared input x):
    #      a KxK conv == K block-Toeplitz matmuls, one per kernel row.
    acc1 = mm(x_ref[0:ho1, :], bm1_ref[0])
    for kh in range(1, k):
        acc1 = acc1 + mm(x_ref[kh:kh + ho1, :], bm1_ref[kh])
    a1 = jnp.maximum(acc1 + b1_ref[...], 0.0).astype(bf16)        # (28, 2*28*6)

    # ---- 2x2 max-pool: rows via left 0/1 matmuls, columns via right 0/1
    #      matmuls (streams stay fused in the lane dim).
    h1 = jnp.maximum(mm(l1_ref[0], a1), mm(l1_ref[1], a1)).astype(bf16)    # (14, 336)
    act2 = jnp.maximum(mm(h1, r1_ref[0]), mm(h1, r1_ref[1])).astype(bf16)  # (14, 2*14*6)

    # ---- conv2 (streams fused via block-diagonal Toeplitz weights) + relu
    acc2 = mm(act2[0:ho2, :], bm2_ref[0])
    for kh in range(1, k):
        acc2 = acc2 + mm(act2[kh:kh + ho2, :], bm2_ref[kh])
    a2 = jnp.maximum(acc2 + b2_ref[...], 0.0).astype(bf16)        # (10, 2*10*16)

    # ---- 2x2 max-pool
    h2 = jnp.maximum(mm(l2_ref[0], a2), mm(l2_ref[1], a2)).astype(bf16)    # (5, 320)
    p2 = jnp.maximum(mm(h2, r2_ref[0]), mm(h2, r2_ref[1])).astype(bf16)    # (5, 2*5*16)

    # ---- fc1 (PyTorch NCHW flatten folded into per-row weight blocks; both
    #      streams fused).
    # TODO(synk): collapsing these 5 row matmuls into one K=800 contraction
    # needs a (5,160)->(1,800) sublane->lane relayout whose Mosaic lowering is
    # not guaranteed; kept as 5 tiny matmuls (negligible share of the step).
    f1 = mm(p2[0:1, :], wfc1_ref[0])
    for h in range(1, n_fc_rows):
        f1 = f1 + mm(p2[h:h + 1, :], wfc1_ref[h])
    f1 = jnp.maximum(f1 + bfc1_ref[...], 0.0).astype(bf16)        # (1, 2*120)

    # ---- fc2 + relu, fc3 (fc3 weight shared by both streams, lane-padded so
    #      the final store is a full 128-lane row).
    f2 = jnp.maximum(mm(f1, wfc2_ref[...]) + bfc2_ref[...], 0.0).astype(bf16)  # (1, 2*84)
    out_ref[...] = mm(f2, wfc3_ref[...]) + bfc3_ref[...]          # (1, >=128) f32


# --------------------- operand preparation (runs once) ----------------------

def _conv_block_mats(w, w_in):
    """Conv weight (Cout, Cin, K, K) -> (K, W_in*Cin, W_out*Cout) block-Toeplitz
    matrices so that out[ho, wo*Cout+n] = sum_kh x_row[ho+kh] @ mat[kh]."""
    cout, cin, k, _ = w.shape
    w_out = w_in - k + 1
    # sel[kw, w, wo] = 1 iff w == wo + kw
    sel = (np.arange(w_in)[None, :, None] ==
           (np.arange(w_out)[None, None, :] + np.arange(k)[:, None, None]))
    blk = jnp.einsum('kwv,nchk->hwcvn', jnp.asarray(sel, np.float32), w)
    return blk.reshape(k, w_in * cin, w_out * cout)


def _fc1_block_mats(w, c, h, wd):
    """fc1 weight (Fout, C*H*W) in PyTorch NCHW-flatten order -> (H, W*C, Fout)
    so the kernel's (h, (w, c)) activation layout needs no transpose."""
    fout = w.shape[0]
    w4 = w.reshape(fout, c, h, wd)            # (o, c, h, w)
    blk = jnp.transpose(w4, (2, 3, 1, 0))     # (h, w, c, o)
    return blk.reshape(h, wd * c, fout)


def _stream_blockdiag(dense, hashed):
    """Block-diagonal fusion of the two streams along the last two dims."""
    d, h = jnp.asarray(dense), jnp.asarray(hashed)
    if d.ndim == 2:
        r, c = d.shape
        out = jnp.zeros((2 * r, 2 * c), d.dtype)
        return out.at[:r, :c].set(d).at[r:, c:].set(h)
    k, r, c = d.shape
    out = jnp.zeros((k, 2 * r, 2 * c), d.dtype)
    return out.at[:, :r, :c].set(d).at[:, r:, c:].set(h)


def _row_select(h_conv, parity):
    """(H/2, H) 0/1 matrix selecting rows 2j+parity (row direction of the pool)."""
    h_out = h_conv // 2
    m = np.zeros((h_out, h_conv), np.float32)
    m[np.arange(h_out), 2 * np.arange(h_out) + parity] = 1.0
    return m


def _col_pool_select(n_streams, w_conv, c, parity):
    """0/1 matrix for the W direction of the 2x2 pool on the fused
    (stream, w, channel) lane layout: s*W*C + w*C + ch -> s*(W/2)*C + wp*C + ch."""
    w_out = w_conv // 2
    m = np.zeros((n_streams * w_conv * c, n_streams * w_out * c), np.float32)
    for s in range(n_streams):
        for wp in range(w_out):
            w = 2 * wp + parity
            for ch in range(c):
                m[(s * w_conv + w) * c + ch, (s * w_out + wp) * c + ch] = 1.0
    return m


def prepare_operands(params, image_hw=32):
    """Build every VMEM-resident operand of the fused kernel from PyTorch-layout
    parameters.  Per-sample layouts only -- the batch is a Pallas grid axis."""
    bf16 = jnp.bfloat16
    c1w, c1h, c1b = params["conv1"]["w"], params["conv1"]["w_hash"], params["conv1"]["b"]
    c2w, c2h, c2b = params["conv2"]["w"], params["conv2"]["w_hash"], params["conv2"]["b"]
    f1w, f1h, f1b = params["fc1"]["w"], params["fc1"]["w_hash"], params["fc1"]["b"]
    f2w, f2h, f2b = params["fc2"]["w"], params["fc2"]["w_hash"], params["fc2"]["b"]
    f3w, f3b = params["fc3"]["w"], params["fc3"]["b"]

    k = c1w.shape[2]                 # 5
    co1 = c1w.shape[0]               # 6
    co2 = c2w.shape[0]               # 16
    n_out = f3w.shape[0]             # 10
    wo1 = image_hw - k + 1           # 28
    wp1 = wo1 // 2                   # 14
    wo2 = wp1 - k + 1                # 10
    wp2 = wo2 // 2                   # 5

    # conv1: dense|hash output channels concatenated along the lane dim
    # (shared input), producing the fused (stream, w, channel) lane layout.
    bm1 = jnp.concatenate([_conv_block_mats(c1w, image_hw),
                           _conv_block_mats(c1h, image_hw)], axis=2)     # (5, 96, 336)
    # conv2: one block-Toeplitz set per stream, fused block-diagonally.
    bm2 = _stream_blockdiag(_conv_block_mats(c2w, wp1),
                            _conv_block_mats(c2h, wp1))                  # (5, 168, 320)

    # 0/1 pooling matrices (static constants; exact in bf16).
    l1 = jnp.asarray(np.stack([_row_select(wo1, p) for p in (0, 1)]))
    r1 = jnp.asarray(np.stack([_col_pool_select(2, wo1, co1, p) for p in (0, 1)]))
    l2 = jnp.asarray(np.stack([_row_select(wo2, p) for p in (0, 1)]))
    r2 = jnp.asarray(np.stack([_col_pool_select(2, wo2, co2, p) for p in (0, 1)]))

    # fc weights: NCHW flatten folded into a row permutation; streams fused.
    wfc1 = _stream_blockdiag(_fc1_block_mats(f1w, co2, wp2, wp2),
                             _fc1_block_mats(f1h, co2, wp2, wp2))        # (5, 160, 240)
    wfc2 = _stream_blockdiag(f2w.T, f2h.T)                               # (240, 168)
    # fc3: same weight for both streams; pad the output lanes to a multiple of
    # 128 so the final matmul / store / HBM write-back are lane-dense.
    ncol = max(128, ((2 * n_out + 127) // 128) * 128)
    wfc3 = jnp.zeros((2 * f3w.shape[1], ncol), jnp.float32)
    wfc3 = wfc3.at[:, :2 * n_out].set(_stream_blockdiag(f3w.T, f3w.T))   # (168, 128)
    bfc3 = (jnp.zeros((1, ncol), jnp.float32)
            .at[0, :n_out].set(f3b).at[0, n_out:2 * n_out].set(f3b))

    return dict(
        # bf16 matmul operands (accumulation stays f32 inside the kernel)
        bm1=bm1.astype(bf16), bm2=bm2.astype(bf16),
        l1=l1.astype(bf16), r1=r1.astype(bf16),
        l2=l2.astype(bf16), r2=r2.astype(bf16),
        wfc1=wfc1.astype(bf16), wfc2=wfc2.astype(bf16), wfc3=wfc3.astype(bf16),
        # f32 biases (tiny; added to the f32 accumulators)
        b1=jnp.tile(c1b, 2 * wo1)[None, :],
        b2=jnp.tile(c2b, 2 * wo2)[None, :],
        bfc1=jnp.tile(f1b, 2)[None, :],
        bfc2=jnp.tile(f2b, 2)[None, :],
        bfc3=bfc3,
    )


# ------------------------------ forward pass --------------------------------

@partial(jax.jit, static_argnames=("n_outputs",))
def lenet_apply(ops, x_nchw, *, n_outputs=10):
    """Fused Pallas kernel gridded over the batch; returns (out, out_hash)."""
    B, C, H, W = x_nchw.shape
    # NCHW -> per-sample (H, W*C) rows so every conv is a chain of 2-D matmuls.
    x_k = jnp.transpose(x_nchw, (0, 2, 3, 1)).reshape(B, H, W * C).astype(jnp.bfloat16)
    ncol = ops["wfc3"].shape[1]

    weight_names = ("bm1", "b1", "l1", "r1", "bm2", "b2", "l2", "r2",
                    "wfc1", "bfc1", "wfc2", "bfc2", "wfc3", "bfc3")

    def resident(name):
        a = ops[name]
        zeros = (0,) * a.ndim
        # Constant block index: fetched into VMEM once, reused by every step.
        return pl.BlockSpec(a.shape, lambda b: zeros)

    out = pl.pallas_call(
        _lenet_kernel,
        out_shape=jax.ShapeDtypeStruct((B, 1, ncol), jnp.float32),
        grid=(B,),
        in_specs=[pl.BlockSpec((None, H, W * C), lambda b: (b, 0, 0))]
                 + [resident(nm) for nm in weight_names],
        out_specs=pl.BlockSpec((None, 1, ncol), lambda b: (b, 0, 0)),
        compiler_params=pltpu.CompilerParams(
            dimension_semantics=("parallel",),        # shard batch on v7x's 2 TCs
            vmem_limit_bytes=24 * 1024 * 1024),       # ~2.5 MiB actual + headroom
    )(x_k, *(ops[nm] for nm in weight_names))

    out = out.reshape(B, ncol)
    return out[:, :n_outputs], out[:, n_outputs:2 * n_outputs]


# ----------------------------- parameter init -------------------------------

def _poly_hash_bucket(n, buckets):
    # TODO(synk): HashedConv2d / HashedLinear source is not in the snippet; we
    # assume HashedNet-style weight sharing: each weight slot maps to one of
    # `buckets` values via a deterministic polynomial hash of its flat index.
    idx = jnp.arange(n, dtype=jnp.int32)
    h = (idx * 131 + (idx % 97) * 7 + 3) % 100003
    return (h % buckets).astype(jnp.int32)


def make_hashed_conv(key, cin, cout, ksize, buckets=16):
    kw_, kh_, kb_ = jax.random.split(key, 3)
    fan_in = cin * ksize * ksize
    w = jax.random.normal(kw_, (cout, cin, ksize, ksize), jnp.float32) / math.sqrt(fan_in)
    vals = jax.random.normal(kh_, (buckets,), jnp.float32) / math.sqrt(fan_in)
    bidx = _poly_hash_bucket(cout * cin * ksize * ksize, buckets)
    w_hash = vals[bidx].reshape(cout, cin, ksize, ksize)
    # NOTE: the bias is shared by the dense and hashed streams.
    b = jax.random.normal(kb_, (cout,), jnp.float32) * 0.01
    return dict(w=w, w_hash=w_hash, b=b)


def make_hashed_linear(key, fin, fout, buckets=16):
    kw_, kh_, kb_ = jax.random.split(key, 3)
    w = jax.random.normal(kw_, (fout, fin), jnp.float32) / math.sqrt(fin)
    vals = jax.random.normal(kh_, (buckets,), jnp.float32) / math.sqrt(fin)
    bidx = _poly_hash_bucket(fin * fout, buckets)
    w_hash = vals[bidx].reshape(fout, fin)
    b = jax.random.normal(kb_, (fout,), jnp.float32) * 0.01
    return dict(w=w, w_hash=w_hash, b=b)


def make_linear_xavier(key, fin, fout, gain=1.414):
    kw_, _ = jax.random.split(key)
    std = gain * math.sqrt(2.0 / (fin + fout))
    w = jax.random.normal(kw_, (fout, fin), jnp.float32) * std
    b = jnp.zeros((fout,), jnp.float32)
    return dict(w=w, b=b)


def init_lenet_params(key, n_channels=3, n_outputs=10):
    k1, k2, k3, k4, k5 = jax.random.split(key, 5)
    return dict(
        conv1=make_hashed_conv(k1, n_channels, 6, 5, buckets=16),
        conv2=make_hashed_conv(k2, 6, 16, 5, buckets=16),
        fc1=make_hashed_linear(k3, 16 * 5 * 5, 120, buckets=16),
        fc2=make_hashed_linear(k4, 120, 84, buckets=16),
        fc3=make_linear_xavier(k5, 84, n_outputs),
    )


# --------------------------- pure-JAX reference -----------------------------

def lenet_reference(params, x_nchw):
    x = x_nchw.astype(jnp.float32)

    def conv(inp, w, b):
        y = jax.lax.conv_general_dilated(
            inp, w, window_strides=(1, 1), padding="VALID",
            dimension_numbers=("NCHW", "OIHW", "NCHW"))
        return y + b[None, :, None, None]

    def pool(inp):
        return jax.lax.reduce_window(inp, -jnp.inf, jax.lax.max,
                                     (1, 1, 2, 2), (1, 1, 2, 2), "VALID")

    relu = jax.nn.relu
    c1, c2 = params["conv1"], params["conv2"]
    f1, f2, f3 = params["fc1"], params["fc2"], params["fc3"]
    o = pool(relu(conv(x, c1["w"], c1["b"])))
    h = pool(relu(conv(x, c1["w_hash"], c1["b"])))
    o = pool(relu(conv(o, c2["w"], c2["b"])))
    h = pool(relu(conv(h, c2["w_hash"], c2["b"])))
    o = o.reshape(o.shape[0], -1)
    h = h.reshape(h.shape[0], -1)
    o = relu(o @ f1["w"].T + f1["b"])
    h = relu(h @ f1["w_hash"].T + f1["b"])
    o = relu(o @ f2["w"].T + f2["b"])
    h = relu(h @ f2["w_hash"].T + f2["b"])
    return o @ f3["w"].T + f3["b"], h @ f3["w"].T + f3["b"]


if __name__ == "__main__":
    key = jax.random.PRNGKey(0)
    kp, kx = jax.random.split(key)
    params = init_lenet_params(kp, n_channels=3, n_outputs=10)
    # fc1 expects 16*5*5 = 400 features -> 32x32 inputs (CIFAR-10), batch = 2.
    x = jax.random.normal(kx, (2, 3, 32, 32), jnp.float32)

    ops = prepare_operands(params, image_hw=x.shape[2])
    out, out_hash = lenet_apply(ops, x, n_outputs=10)
    jax.block_until_ready((out, out_hash))
    assert out.shape == (2, 10) and out_hash.shape == (2, 10)

    # Numerical check against a plain-JAX f32 reference (kernel runs in bf16
    # with f32 accumulation).
    ref_out, ref_hash = lenet_reference(params, x)
    np.testing.assert_allclose(np.asarray(out), np.asarray(ref_out),
                               rtol=5e-2, atol=5e-2)
    np.testing.assert_allclose(np.asarray(out_hash), np.asarray(ref_hash),
                               rtol=5e-2, atol=5e-2)
    print("KERNEL_OK")
</pallas_src>

<mosaic_0001>
module attributes {stable_mosaic.version = 11 : i64} {
  func.func @_lenet_kernel(%arg0: i32, %arg1: memref<1x32x96xbf16, #tpu.memory_space<vmem>>, %arg2: memref<5x96x336xbf16, #tpu.memory_space<vmem>>, %arg3: memref<1x336xf32, #tpu.memory_space<vmem>>, %arg4: memref<2x14x28xbf16, #tpu.memory_space<vmem>>, %arg5: memref<2x336x168xbf16, #tpu.memory_space<vmem>>, %arg6: memref<5x168x320xbf16, #tpu.memory_space<vmem>>, %arg7: memref<1x320xf32, #tpu.memory_space<vmem>>, %arg8: memref<2x5x10xbf16, #tpu.memory_space<vmem>>, %arg9: memref<2x320x160xbf16, #tpu.memory_space<vmem>>, %arg10: memref<5x160x240xbf16, #tpu.memory_space<vmem>>, %arg11: memref<1x240xf32, #tpu.memory_space<vmem>>, %arg12: memref<240x168xbf16, #tpu.memory_space<vmem>>, %arg13: memref<1x168xf32, #tpu.memory_space<vmem>>, %arg14: memref<168x128xbf16, #tpu.memory_space<vmem>>, %arg15: memref<1x128xf32, #tpu.memory_space<vmem>>, %arg16: memref<1x1x128xf32, #tpu.memory_space<vmem>>) attributes {dimension_semantics = [#tpu.dimension_semantics<parallel>], iteration_bounds = array<i64: 2>, scalar_prefetch = 0 : i64, scratch_operands = 0 : i64, tpu.core_type = #tpu.core_type<tc>, window_params = [{transform_indices = @transform_0, window_bounds = array<i64: 1, 32, 96>}, {pipeline_mode = #tpu.pipeline_mode<synchronous>, transform_indices = @transform_1, window_bounds = array<i64: 5, 96, 336>}, {pipeline_mode = #tpu.pipeline_mode<synchronous>, transform_indices = @transform_2, window_bounds = array<i64: 1, 336>}, {pipeline_mode = #tpu.pipeline_mode<synchronous>, transform_indices = @transform_3, window_bounds = array<i64: 2, 14, 28>}, {pipeline_mode = #tpu.pipeline_mode<synchronous>, transform_indices = @transform_4, window_bounds = array<i64: 2, 336, 168>}, {pipeline_mode = #tpu.pipeline_mode<synchronous>, transform_indices = @transform_5, window_bounds = array<i64: 5, 168, 320>}, {pipeline_mode = #tpu.pipeline_mode<synchronous>, transform_indices = @transform_6, window_bounds = array<i64: 1, 320>}, {pipeline_mode = #tpu.pipeline_mode<synchronous>, transform_indices = @transform_7, window_bounds = array<i64: 2, 5, 10>}, {pipeline_mode = #tpu.pipeline_mode<synchronous>, transform_indices = @transform_8, window_bounds = array<i64: 2, 320, 160>}, {pipeline_mode = #tpu.pipeline_mode<synchronous>, transform_indices = @transform_9, window_bounds = array<i64: 5, 160, 240>}, {pipeline_mode = #tpu.pipeline_mode<synchronous>, transform_indices = @transform_10, window_bounds = array<i64: 1, 240>}, {pipeline_mode = #tpu.pipeline_mode<synchronous>, transform_indices = @transform_11, window_bounds = array<i64: 240, 168>}, {pipeline_mode = #tpu.pipeline_mode<synchronous>, transform_indices = @transform_12, window_bounds = array<i64: 1, 168>}, {pipeline_mode = #tpu.pipeline_mode<synchronous>, transform_indices = @transform_13, window_bounds = array<i64: 168, 128>}, {pipeline_mode = #tpu.pipeline_mode<synchronous>, transform_indices = @transform_14, window_bounds = array<i64: 1, 128>}, {transform_indices = @transform_15, window_bounds = array<i64: 1, 1, 128>}]} {
    %c0 = arith.constant 0 : index
    %c0_0 = arith.constant 0 : index
    %c0_1 = arith.constant 0 : index
    %0 = vector.load %arg1[%c0, %c0_0, %c0_1] : memref<1x32x96xbf16, #tpu.memory_space<vmem>>, vector<1x28x96xbf16>
    %1 = vector.shape_cast %0 : vector<1x28x96xbf16> to vector<28x96xbf16>
    %c0_2 = arith.constant 0 : index
    %c0_3 = arith.constant 0 : index
    %c0_4 = arith.constant 0 : index
    %2 = vector.load %arg2[%c0_2, %c0_3, %c0_4] : memref<5x96x336xbf16, #tpu.memory_space<vmem>>, vector<1x96x336xbf16>
    %3 = vector.shape_cast %2 : vector<1x96x336xbf16> to vector<96x336xbf16>
    %cst = arith.constant dense<0.000000e+00> : vector<28x336xf32>
    %4 = tpu.matmul %1, %3, %cst {dimension_numbers = #tpu.dot_dimension_numbers<[1], [0], [0], [1], [0, 0, 1, 1], [], []>} : vector<28x96xbf16>, vector<96x336xbf16>, vector<28x336xf32> -> vector<28x336xf32>
    %c0_5 = arith.constant 0 : index
    %c1 = arith.constant 1 : index
    %c0_6 = arith.constant 0 : index
    %5 = vector.load %arg1[%c0_5, %c1, %c0_6] : memref<1x32x96xbf16, #tpu.memory_space<vmem>>, vector<1x28x96xbf16>
    %6 = vector.shape_cast %5 : vector<1x28x96xbf16> to vector<28x96xbf16>
    %c1_7 = arith.constant 1 : index
    %c0_8 = arith.constant 0 : index
    %c0_9 = arith.constant 0 : index
    %7 = vector.load %arg2[%c1_7, %c0_8, %c0_9] : memref<5x96x336xbf16, #tpu.memory_space<vmem>>, vector<1x96x336xbf16>
    %8 = vector.shape_cast %7 : vector<1x96x336xbf16> to vector<96x336xbf16>
    %cst_10 = arith.constant dense<0.000000e+00> : vector<28x336xf32>
    %9 = tpu.matmul %6, %8, %cst_10 {dimension_numbers = #tpu.dot_dimension_numbers<[1], [0], [0], [1], [0, 0, 1, 1], [], []>} : vector<28x96xbf16>, vector<96x336xbf16>, vector<28x336xf32> -> vector<28x336xf32>
    %10 = arith.addf %4, %9 : vector<28x336xf32>
    %c0_11 = arith.constant 0 : index
    %c2 = arith.constant 2 : index
    %c0_12 = arith.constant 0 : index
    %11 = vector.load %arg1[%c0_11, %c2, %c0_12] : memref<1x32x96xbf16, #tpu.memory_space<vmem>>, vector<1x28x96xbf16>
    %12 = vector.shape_cast %11 : vector<1x28x96xbf16> to vector<28x96xbf16>
    %c2_13 = arith.constant 2 : index
    %c0_14 = arith.constant 0 : index
    %c0_15 = arith.constant 0 : index
    %13 = vector.load %arg2[%c2_13, %c0_14, %c0_15] : memref<5x96x336xbf16, #tpu.memory_space<vmem>>, vector<1x96x336xbf16>
    %14 = vector.shape_cast %13 : vector<1x96x336xbf16> to vector<96x336xbf16>
    %cst_16 = arith.constant dense<0.000000e+00> : vector<28x336xf32>
    %15 = tpu.matmul %12, %14, %cst_16 {dimension_numbers = #tpu.dot_dimension_numbers<[1], [0], [0], [1], [0, 0, 1, 1], [], []>} : vector<28x96xbf16>, vector<96x336xbf16>, vector<28x336xf32> -> vector<28x336xf32>
    %16 = arith.addf %10, %15 : vector<28x336xf32>
    %c0_17 = arith.constant 0 : index
    %c3 = arith.constant 3 : index
    %c0_18 = arith.constant 0 : index
    %17 = vector.load %arg1[%c0_17, %c3, %c0_18] : memref<1x32x96xbf16, #tpu.memory_space<vmem>>, vector<1x28x96xbf16>
    %18 = vector.shape_cast %17 : vector<1x28x96xbf16> to vector<28x96xbf16>
    %c3_19 = arith.constant 3 : index
    %c0_20 = arith.constant 0 : index
    %c0_21 = arith.constant 0 : index
    %19 = vector.load %arg2[%c3_19, %c0_20, %c0_21] : memref<5x96x336xbf16, #tpu.memory_space<vmem>>, vector<1x96x336xbf16>
    %20 = vector.shape_cast %19 : vector<1x96x336xbf16> to vector<96x336xbf16>
    %cst_22 = arith.constant dense<0.000000e+00> : vector<28x336xf32>
    %21 = tpu.matmul %18, %20, %cst_22 {dimension_numbers = #tpu.dot_dimension_numbers<[1], [0], [0], [1], [0, 0, 1, 1], [], []>} : vector<28x96xbf16>, vector<96x336xbf16>, vector<28x336xf32> -> vector<28x336xf32>
    %22 = arith.addf %16, %21 : vector<28x336xf32>
    %c0_23 = arith.constant 0 : index
    %c4 = arith.constant 4 : index
    %c0_24 = arith.constant 0 : index
    %23 = vector.load %arg1[%c0_23, %c4, %c0_24] : memref<1x32x96xbf16, #tpu.memory_space<vmem>>, vector<1x28x96xbf16>
    %24 = vector.shape_cast %23 : vector<1x28x96xbf16> to vector<28x96xbf16>
    %c4_25 = arith.constant 4 : index
    %c0_26 = arith.constant 0 : index
    %c0_27 = arith.constant 0 : index
    %25 = vector.load %arg2[%c4_25, %c0_26, %c0_27] : memref<5x96x336xbf16, #tpu.memory_space<vmem>>, vector<1x96x336xbf16>
    %26 = vector.shape_cast %25 : vector<1x96x336xbf16> to vector<96x336xbf16>
    %cst_28 = arith.constant dense<0.000000e+00> : vector<28x336xf32>
    %27 = tpu.matmul %24, %26, %cst_28 {dimension_numbers = #tpu.dot_dimension_numbers<[1], [0], [0], [1], [0, 0, 1, 1], [], []>} : vector<28x96xbf16>, vector<96x336xbf16>, vector<28x336xf32> -> vector<28x336xf32>
    %28 = arith.addf %22, %27 : vector<28x336xf32>
    %c0_29 = arith.constant 0 : index
    %c0_30 = arith.constant 0 : index
    %29 = vector.load %arg3[%c0_29, %c0_30] : memref<1x336xf32, #tpu.memory_space<vmem>>, vector<1x336xf32>
    %30 = vector.broadcast %29 : vector<1x336xf32> to vector<28x336xf32>
    %31 = arith.addf %28, %30 : vector<28x336xf32>
    %cst_31 = arith.constant 0.000000e+00 : f32
    %32 = vector.broadcast %cst_31 : f32 to vector<28x336xf32>
    %33 = arith.maximumf %31, %32 : vector<28x336xf32>
    %34 = arith.truncf %33 : vector<28x336xf32> to vector<28x336xbf16>
    %c0_32 = arith.constant 0 : index
    %c0_33 = arith.constant 0 : index
    %c0_34 = arith.constant 0 : index
    %35 = vector.load %arg4[%c0_32, %c0_33, %c0_34] : memref<2x14x28xbf16, #tpu.memory_space<vmem>>, vector<1x14x28xbf16>
    %36 = vector.shape_cast %35 : vector<1x14x28xbf16> to vector<14x28xbf16>
    %cst_35 = arith.constant dense<0.000000e+00> : vector<14x336xf32>
    %37 = tpu.matmul %36, %34, %cst_35 {dimension_numbers = #tpu.dot_dimension_numbers<[1], [0], [0], [1], [0, 0, 1, 1], [], []>} : vector<14x28xbf16>, vector<28x336xbf16>, vector<14x336xf32> -> vector<14x336xf32>
    %c1_36 = arith.constant 1 : index
    %c0_37 = arith.constant 0 : index
    %c0_38 = arith.constant 0 : index
    %38 = vector.load %arg4[%c1_36, %c0_37, %c0_38] : memref<2x14x28xbf16, #tpu.memory_space<vmem>>, vector<1x14x28xbf16>
    %39 = vector.shape_cast %38 : vector<1x14x28xbf16> to vector<14x28xbf16>
    %cst_39 = arith.constant dense<0.000000e+00> : vector<14x336xf32>
    %40 = tpu.matmul %39, %34, %cst_39 {dimension_numbers = #tpu.dot_dimension_numbers<[1], [0], [0], [1], [0, 0, 1, 1], [], []>} : vector<14x28xbf16>, vector<28x336xbf16>, vector<14x336xf32> -> vector<14x336xf32>
    %41 = arith.maximumf %37, %40 : vector<14x336xf32>
    %42 = arith.truncf %41 : vector<14x336xf32> to vector<14x336xbf16>
    %c0_40 = arith.constant 0 : index
    %c0_41 = arith.constant 0 : index
    %c0_42 = arith.constant 0 : index
    %43 = vector.load %arg5[%c0_40, %c0_41, %c0_42] : memref<2x336x168xbf16, #tpu.memory_space<vmem>>, vector<1x336x168xbf16>
    %44 = vector.shape_cast %43 : vector<1x336x168xbf16> to vector<336x168xbf16>
    %cst_43 = arith.constant dense<0.000000e+00> : vector<14x168xf32>
    %45 = tpu.matmul %42, %44, %cst_43 {dimension_numbers = #tpu.dot_dimension_numbers<[1], [0], [0], [1], [0, 0, 1, 1], [], []>} : vector<14x336xbf16>, vector<336x168xbf16>, vector<14x168xf32> -> vector<14x168xf32>
    %c1_44 = arith.constant 1 : index
    %c0_45 = arith.constant 0 : index
    %c0_46 = arith.constant 0 : index
    %46 = vector.load %arg5[%c1_44, %c0_45, %c0_46] : memref<2x336x168xbf16, #tpu.memory_space<vmem>>, vector<1x336x168xbf16>
    %47 = vector.shape_cast %46 : vector<1x336x168xbf16> to vector<336x168xbf16>
    %cst_47 = arith.constant dense<0.000000e+00> : vector<14x168xf32>
    %48 = tpu.matmul %42, %47, %cst_47 {dimension_numbers = #tpu.dot_dimension_numbers<[1], [0], [0], [1], [0, 0, 1, 1], [], []>} : vector<14x336xbf16>, vector<336x168xbf16>, vector<14x168xf32> -> vector<14x168xf32>
    %49 = arith.maximumf %45, %48 : vector<14x168xf32>
    %50 = arith.truncf %49 : vector<14x168xf32> to vector<14x168xbf16>
    %51 = vector.extract_strided_slice %50 {offsets = [0, 0], sizes = [10, 168], strides = [1, 1]} : vector<14x168xbf16> to vector<10x168xbf16>
    %c0_48 = arith.constant 0 : index
    %c0_49 = arith.constant 0 : index
    %c0_50 = arith.constant 0 : index
    %52 = vector.load %arg6[%c0_48, %c0_49, %c0_50] : memref<5x168x320xbf16, #tpu.memory_space<vmem>>, vector<1x168x320xbf16>
    %53 = vector.shape_cast %52 : vector<1x168x320xbf16> to vector<168x320xbf16>
    %cst_51 = arith.constant dense<0.000000e+00> : vector<10x320xf32>
    %54 = tpu.matmul %51, %53, %cst_51 {dimension_numbers = #tpu.dot_dimension_numbers<[1], [0], [0], [1], [0, 0, 1, 1], [], []>} : vector<10x168xbf16>, vector<168x320xbf16>, vector<10x320xf32> -> vector<10x320xf32>
    %55 = vector.extract_strided_slice %50 {offsets = [1, 0], sizes = [10, 168], strides = [1, 1]} : vector<14x168xbf16> to vector<10x168xbf16>
    %c1_52 = arith.constant 1 : index
    %c0_53 = arith.constant 0 : index
    %c0_54 = arith.constant 0 : index
    %56 = vector.load %arg6[%c1_52, %c0_53, %c0_54] : memref<5x168x320xbf16, #tpu.memory_space<vmem>>, vector<1x168x320xbf16>
    %57 = vector.shape_cast %56 : vector<1x168x320xbf16> to vector<168x320xbf16>
    %cst_55 = arith.constant dense<0.000000e+00> : vector<10x320xf32>
    %58 = tpu.matmul %55, %57, %cst_55 {dimension_numbers = #tpu.dot_dimension_numbers<[1], [0], [0], [1], [0, 0, 1, 1], [], []>} : vector<10x168xbf16>, vector<168x320xbf16>, vector<10x320xf32> -> vector<10x320xf32>
    %59 = arith.addf %54, %58 : vector<10x320xf32>
    %60 = vector.extract_strided_slice %50 {offsets = [2, 0], sizes = [10, 168], strides = [1, 1]} : vector<14x168xbf16> to vector<10x168xbf16>
    %c2_56 = arith.constant 2 : index
    %c0_57 = arith.constant 0 : index
    %c0_58 = arith.constant 0 : index
    %61 = vector.load %arg6[%c2_56, %c0_57, %c0_58] : memref<5x168x320xbf16, #tpu.memory_space<vmem>>, vector<1x168x320xbf16>
    %62 = vector.shape_cast %61 : vector<1x168x320xbf16> to vector<168x320xbf16>
    %cst_59 = arith.constant dense<0.000000e+00> : vector<10x320xf32>
    %63 = tpu.matmul %60, %62, %cst_59 {dimension_numbers = #tpu.dot_dimension_numbers<[1], [0], [0], [1], [0, 0, 1, 1], [], []>} : vector<10x168xbf16>, vector<168x320xbf16>, vector<10x320xf32> -> vector<10x320xf32>
    %64 = arith.addf %59, %63 : vector<10x320xf32>
    %65 = vector.extract_strided_slice %50 {offsets = [3, 0], sizes = [10, 168], strides = [1, 1]} : vector<14x168xbf16> to vector<10x168xbf16>
    %c3_60 = arith.constant 3 : index
    %c0_61 = arith.constant 0 : index
    %c0_62 = arith.constant 0 : index
    %66 = vector.load %arg6[%c3_60, %c0_61, %c0_62] : memref<5x168x320xbf16, #tpu.memory_space<vmem>>, vector<1x168x320xbf16>
    %67 = vector.shape_cast %66 : vector<1x168x320xbf16> to vector<168x320xbf16>
    %cst_63 = arith.constant dense<0.000000e+00> : vector<10x320xf32>
    %68 = tpu.matmul %65, %67, %cst_63 {dimension_numbers = #tpu.dot_dimension_numbers<[1], [0], [0], [1], [0, 0, 1, 1], [], []>} : vector<10x168xbf16>, vector<168x320xbf16>, vector<10x320xf32> -> vector<10x320xf32>
    %69 = arith.addf %64, %68 : vector<10x320xf32>
    %70 = vector.extract_strided_slice %50 {offsets = [4, 0], sizes = [10, 168], strides = [1, 1]} : vector<14x168xbf16> to vector<10x168xbf16>
    %c4_64 = arith.constant 4 : index
    %c0_65 = arith.constant 0 : index
    %c0_66 = arith.constant 0 : index
    %71 = vector.load %arg6[%c4_64, %c0_65, %c0_66] : memref<5x168x320xbf16, #tpu.memory_space<vmem>>, vector<1x168x320xbf16>
    %72 = vector.shape_cast %71 : vector<1x168x320xbf16> to vector<168x320xbf16>
    %cst_67 = arith.constant dense<0.000000e+00> : vector<10x320xf32>
    %73 = tpu.matmul %70, %72, %cst_67 {dimension_numbers = #tpu.dot_dimension_numbers<[1], [0], [0], [1], [0, 0, 1, 1], [], []>} : vector<10x168xbf16>, vector<168x320xbf16>, vector<10x320xf32> -> vector<10x320xf32>
    %74 = arith.addf %69, %73 : vector<10x320xf32>
    %c0_68 = arith.constant 0 : index
    %c0_69 = arith.constant 0 : index
    %75 = vector.load %arg7[%c0_68, %c0_69] : memref<1x320xf32, #tpu.memory_space<vmem>>, vector<1x320xf32>
    %76 = vector.broadcast %75 : vector<1x320xf32> to vector<10x320xf32>
    %77 = arith.addf %74, %76 : vector<10x320xf32>
    %cst_70 = arith.constant 0.000000e+00 : f32
    %78 = vector.broadcast %cst_70 : f32 to vector<10x320xf32>
    %79 = arith.maximumf %77, %78 : vector<10x320xf32>
    %80 = arith.truncf %79 : vector<10x320xf32> to vector<10x320xbf16>
    %c0_71 = arith.constant 0 : index
    %c0_72 = arith.constant 0 : index
    %c0_73 = arith.constant 0 : index
    %81 = vector.load %arg8[%c0_71, %c0_72, %c0_73] : memref<2x5x10xbf16, #tpu.memory_space<vmem>>, vector<1x5x10xbf16>
    %82 = vector.shape_cast %81 : vector<1x5x10xbf16> to vector<5x10xbf16>
    %cst_74 = arith.constant dense<0.000000e+00> : vector<5x320xf32>
    %83 = tpu.matmul %82, %80, %cst_74 {dimension_numbers = #tpu.dot_dimension_numbers<[1], [0], [0], [1], [0, 0, 1, 1], [], []>} : vector<5x10xbf16>, vector<10x320xbf16>, vector<5x320xf32> -> vector<5x320xf32>
    %c1_75 = arith.constant 1 : index
    %c0_76 = arith.constant 0 : index
    %c0_77 = arith.constant 0 : index
    %84 = vector.load %arg8[%c1_75, %c0_76, %c0_77] : memref<2x5x10xbf16, #tpu.memory_space<vmem>>, vector<1x5x10xbf16>
    %85 = vector.shape_cast %84 : vector<1x5x10xbf16> to vector<5x10xbf16>
    %cst_78 = arith.constant dense<0.000000e+00> : vector<5x320xf32>
    %86 = tpu.matmul %85, %80, %cst_78 {dimension_numbers = #tpu.dot_dimension_numbers<[1], [0], [0], [1], [0, 0, 1, 1], [], []>} : vector<5x10xbf16>, vector<10x320xbf16>, vector<5x320xf32> -> vector<5x320xf32>
    %87 = arith.maximumf %83, %86 : vector<5x320xf32>
    %88 = arith.truncf %87 : vector<5x320xf32> to vector<5x320xbf16>
    %c0_79 = arith.constant 0 : index
    %c0_80 = arith.constant 0 : index
    %c0_81 = arith.constant 0 : index
    %89 = vector.load %arg9[%c0_79, %c0_80, %c0_81] : memref<2x320x160xbf16, #tpu.memory_space<vmem>>, vector<1x320x160xbf16>
    %90 = vector.shape_cast %89 : vector<1x320x160xbf16> to vector<320x160xbf16>
    %cst_82 = arith.constant dense<0.000000e+00> : vector<5x160xf32>
    %91 = tpu.matmul %88, %90, %cst_82 {dimension_numbers = #tpu.dot_dimension_numbers<[1], [0], [0], [1], [0, 0, 1, 1], [], []>} : vector<5x320xbf16>, vector<320x160xbf16>, vector<5x160xf32> -> vector<5x160xf32>
    %c1_83 = arith.constant 1 : index
    %c0_84 = arith.constant 0 : index
    %c0_85 = arith.constant 0 : index
    %92 = vector.load %arg9[%c1_83, %c0_84, %c0_85] : memref<2x320x160xbf16, #tpu.memory_space<vmem>>, vector<1x320x160xbf16>
    %93 = vector.shape_cast %92 : vector<1x320x160xbf16> to vector<320x160xbf16>
    %cst_86 = arith.constant dense<0.000000e+00> : vector<5x160xf32>
    %94 = tpu.matmul %88, %93, %cst_86 {dimension_numbers = #tpu.dot_dimension_numbers<[1], [0], [0], [1], [0, 0, 1, 1], [], []>} : vector<5x320xbf16>, vector<320x160xbf16>, vector<5x160xf32> -> vector<5x160xf32>
    %95 = arith.maximumf %91, %94 : vector<5x160xf32>
    %96 = arith.truncf %95 : vector<5x160xf32> to vector<5x160xbf16>
    %97 = vector.extract_strided_slice %96 {offsets = [0, 0], sizes = [1, 160], strides = [1, 1]} : vector<5x160xbf16> to vector<1x160xbf16>
    %c0_87 = arith.constant 0 : index
    %c0_88 = arith.constant 0 : index
    %c0_89 = arith.constant 0 : index
    %98 = vector.load %arg10[%c0_87, %c0_88, %c0_89] : memref<5x160x240xbf16, #tpu.memory_space<vmem>>, vector<1x160x240xbf16>
    %99 = vector.shape_cast %98 : vector<1x160x240xbf16> to vector<160x240xbf16>
    %cst_90 = arith.constant dense<0.000000e+00> : vector<1x240xf32>
    %100 = tpu.matmul %97, %99, %cst_90 {dimension_numbers = #tpu.dot_dimension_numbers<[1], [0], [0], [1], [0, 0, 1, 1], [], []>} : vector<1x160xbf16>, vector<160x240xbf16>, vector<1x240xf32> -> vector<1x240xf32>
    %101 = vector.extract_strided_slice %96 {offsets = [1, 0], sizes = [1, 160], strides = [1, 1]} : vector<5x160xbf16> to vector<1x160xbf16>
    %c1_91 = arith.constant 1 : index
    %c0_92 = arith.constant 0 : index
    %c0_93 = arith.constant 0 : index
    %102 = vector.load %arg10[%c1_91, %c0_92, %c0_93] : memref<5x160x240xbf16, #tpu.memory_space<vmem>>, vector<1x160x240xbf16>
    %103 = vector.shape_cast %102 : vector<1x160x240xbf16> to vector<160x240xbf16>
    %cst_94 = arith.constant dense<0.000000e+00> : vector<1x240xf32>
    %104 = tpu.matmul %101, %103, %cst_94 {dimension_numbers = #tpu.dot_dimension_numbers<[1], [0], [0], [1], [0, 0, 1, 1], [], []>} : vector<1x160xbf16>, vector<160x240xbf16>, vector<1x240xf32> -> vector<1x240xf32>
    %105 = arith.addf %100, %104 : vector<1x240xf32>
    %106 = vector.extract_strided_slice %96 {offsets = [2, 0], sizes = [1, 160], strides = [1, 1]} : vector<5x160xbf16> to vector<1x160xbf16>
    %c2_95 = arith.constant 2 : index
    %c0_96 = arith.constant 0 : index
    %c0_97 = arith.constant 0 : index
    %107 = vector.load %arg10[%c2_95, %c0_96, %c0_97] : memref<5x160x240xbf16, #tpu.memory_space<vmem>>, vector<1x160x240xbf16>
    %108 = vector.shape_cast %107 : vector<1x160x240xbf16> to vector<160x240xbf16>
    %cst_98 = arith.constant dense<0.000000e+00> : vector<1x240xf32>
    %109 = tpu.matmul %106, %108, %cst_98 {dimension_numbers = #tpu.dot_dimension_numbers<[1], [0], [0], [1], [0, 0, 1, 1], [], []>} : vector<1x160xbf16>, vector<160x240xbf16>, vector<1x240xf32> -> vector<1x240xf32>
    %110 = arith.addf %105, %109 : vector<1x240xf32>
    %111 = vector.extract_strided_slice %96 {offsets = [3, 0], sizes = [1, 160], strides = [1, 1]} : vector<5x160xbf16> to vector<1x160xbf16>
    %c3_99 = arith.constant 3 : index
    %c0_100 = arith.constant 0 : index
    %c0_101 = arith.constant 0 : index
    %112 = vector.load %arg10[%c3_99, %c0_100, %c0_101] : memref<5x160x240xbf16, #tpu.memory_space<vmem>>, vector<1x160x240xbf16>
    %113 = vector.shape_cast %112 : vector<1x160x240xbf16> to vector<160x240xbf16>
    %cst_102 = arith.constant dense<0.000000e+00> : vector<1x240xf32>
    %114 = tpu.matmul %111, %113, %cst_102 {dimension_numbers = #tpu.dot_dimension_numbers<[1], [0], [0], [1], [0, 0, 1, 1], [], []>} : vector<1x160xbf16>, vector<160x240xbf16>, vector<1x240xf32> -> vector<1x240xf32>
    %115 = arith.addf %110, %114 : vector<1x240xf32>
    %116 = vector.extract_strided_slice %96 {offsets = [4, 0], sizes = [1, 160], strides = [1, 1]} : vector<5x160xbf16> to vector<1x160xbf16>
    %c4_103 = arith.constant 4 : index
    %c0_104 = arith.constant 0 : index
    %c0_105 = arith.constant 0 : index
    %117 = vector.load %arg10[%c4_103, %c0_104, %c0_105] : memref<5x160x240xbf16, #tpu.memory_space<vmem>>, vector<1x160x240xbf16>
    %118 = vector.shape_cast %117 : vector<1x160x240xbf16> to vector<160x240xbf16>
    %cst_106 = arith.constant dense<0.000000e+00> : vector<1x240xf32>
    %119 = tpu.matmul %116, %118, %cst_106 {dimension_numbers = #tpu.dot_dimension_numbers<[1], [0], [0], [1], [0, 0, 1, 1], [], []>} : vector<1x160xbf16>, vector<160x240xbf16>, vector<1x240xf32> -> vector<1x240xf32>
    %120 = arith.addf %115, %119 : vector<1x240xf32>
    %c0_107 = arith.constant 0 : index
    %c0_108 = arith.constant 0 : index
    %121 = vector.load %arg11[%c0_107, %c0_108] : memref<1x240xf32, #tpu.memory_space<vmem>>, vector<1x240xf32>
    %122 = arith.addf %120, %121 : vector<1x240xf32>
    %cst_109 = arith.constant 0.000000e+00 : f32
    %123 = vector.broadcast %cst_109 : f32 to vector<1x240xf32>
    %124 = arith.maximumf %122, %123 : vector<1x240xf32>
    %125 = arith.truncf %124 : vector<1x240xf32> to vector<1x240xbf16>
    %c0_110 = arith.constant 0 : index
    %c0_111 = arith.constant 0 : index
    %126 = vector.load %arg12[%c0_110, %c0_111] : memref<240x168xbf16, #tpu.memory_space<vmem>>, vector<240x168xbf16>
    %cst_112 = arith.constant dense<0.000000e+00> : vector<1x168xf32>
    %127 = tpu.matmul %125, %126, %cst_112 {dimension_numbers = #tpu.dot_dimension_numbers<[1], [0], [0], [1], [0, 0, 1, 1], [], []>} : vector<1x240xbf16>, vector<240x168xbf16>, vector<1x168xf32> -> vector<1x168xf32>
    %c0_113 = arith.constant 0 : index
    %c0_114 = arith.constant 0 : index
    %128 = vector.load %arg13[%c0_113, %c0_114] : memref<1x168xf32, #tpu.memory_space<vmem>>, vector<1x168xf32>
    %129 = arith.addf %127, %128 : vector<1x168xf32>
    %cst_115 = arith.constant 0.000000e+00 : f32
    %130 = vector.broadcast %cst_115 : f32 to vector<1x168xf32>
    %131 = arith.maximumf %129, %130 : vector<1x168xf32>
    %132 = arith.truncf %131 : vector<1x168xf32> to vector<1x168xbf16>
    %c0_116 = arith.constant 0 : index
    %c0_117 = arith.constant 0 : index
    %133 = vector.load %arg14[%c0_116, %c0_117] : memref<168x128xbf16, #tpu.memory_space<vmem>>, vector<168x128xbf16>
    %cst_118 = arith.constant dense<0.000000e+00> : vector<1x128xf32>
    %134 = tpu.matmul %132, %133, %cst_118 {dimension_numbers = #tpu.dot_dimension_numbers<[1], [0], [0], [1], [0, 0, 1, 1], [], []>} : vector<1x168xbf16>, vector<168x128xbf16>, vector<1x128xf32> -> vector<1x128xf32>
    %c0_119 = arith.constant 0 : index
    %c0_120 = arith.constant 0 : index
    %135 = vector.load %arg15[%c0_119, %c0_120] : memref<1x128xf32, #tpu.memory_space<vmem>>, vector<1x128xf32>
    %136 = arith.addf %134, %135 : vector<1x128xf32>
    %c0_121 = arith.constant 0 : index
    %c0_122 = arith.constant 0 : index
    %c0_123 = arith.constant 0 : index
    %137 = vector.load %arg16[%c0_121, %c0_122, %c0_123] : memref<1x1x128xf32, #tpu.memory_space<vmem>>, vector<1x1x128xf32>
    %138 = vector.shape_cast %137 : vector<1x1x128xf32> to vector<1x128xf32>
    %139 = vector.shape_cast %136 : vector<1x128xf32> to vector<1x1x128xf32>
    tpu.vector_store %arg16[%c0_121, %c0_122, %c0_123], %139 {strides = array<i32>} : memref<1x1x128xf32, #tpu.memory_space<vmem>>, vector<1x1x128xf32>,
    return
  }
  func.func @transform_0(%arg0: i32) -> (i32, i32, i32) {
    %c0_i32 = arith.constant 0 : i32
    %c0_i32_0 = arith.constant 0 : i32
    %c0_i32_1 = arith.constant 0 : i32
    return %arg0, %c0_i32, %c0_i32_0 : i32, i32, i32
  }
  func.func @transform_1(%arg0: i32) -> (i32, i32, i32) {
    %c0_i32 = arith.constant 0 : i32
    %c0_i32_0 = arith.constant 0 : i32
    %c0_i32_1 = arith.constant 0 : i32
    %c0_i32_2 = arith.constant 0 : i32
    return %c0_i32, %c0_i32_0, %c0_i32_1 : i32, i32, i32
  }
  func.func @transform_2(%arg0: i32) -> (i32, i32) {
    %c0_i32 = arith.constant 0 : i32
    %c0_i32_0 = arith.constant 0 : i32
    %c0_i32_1 = arith.constant 0 : i32
    return %c0_i32, %c0_i32_0 : i32, i32
  }
  func.func @transform_3(%arg0: i32) -> (i32, i32, i32) {
    %c0_i32 = arith.constant 0 : i32
    %c0_i32_0 = arith.constant 0 : i32
    %c0_i32_1 = arith.constant 0 : i32
    %c0_i32_2 = arith.constant 0 : i32
    return %c0_i32, %c0_i32_0, %c0_i32_1 : i32, i32, i32
  }
  func.func @transform_4(%arg0: i32) -> (i32, i32, i32) {
    %c0_i32 = arith.constant 0 : i32
    %c0_i32_0 = arith.constant 0 : i32
    %c0_i32_1 = arith.constant 0 : i32
    %c0_i32_2 = arith.constant 0 : i32
    return %c0_i32, %c0_i32_0, %c0_i32_1 : i32, i32, i32
  }
  func.func @transform_5(%arg0: i32) -> (i32, i32, i32) {
    %c0_i32 = arith.constant 0 : i32
    %c0_i32_0 = arith.constant 0 : i32
    %c0_i32_1 = arith.constant 0 : i32
    %c0_i32_2 = arith.constant 0 : i32
    return %c0_i32, %c0_i32_0, %c0_i32_1 : i32, i32, i32
  }
  func.func @transform_6(%arg0: i32) -> (i32, i32) {
    %c0_i32 = arith.constant 0 : i32
    %c0_i32_0 = arith.constant 0 : i32
    %c0_i32_1 = arith.constant 0 : i32
    return %c0_i32, %c0_i32_0 : i32, i32
  }
  func.func @transform_7(%arg0: i32) -> (i32, i32, i32) {
    %c0_i32 = arith.constant 0 : i32
    %c0_i32_0 = arith.constant 0 : i32
    %c0_i32_1 = arith.constant 0 : i32
    %c0_i32_2 = arith.constant 0 : i32
    return %c0_i32, %c0_i32_0, %c0_i32_1 : i32, i32, i32
  }
  func.func @transform_8(%arg0: i32) -> (i32, i32, i32) {
    %c0_i32 = arith.constant 0 : i32
    %c0_i32_0 = arith.constant 0 : i32
    %c0_i32_1 = arith.constant 0 : i32
    %c0_i32_2 = arith.constant 0 : i32
    return %c0_i32, %c0_i32_0, %c0_i32_1 : i32, i32, i32
  }
  func.func @transform_9(%arg0: i32) -> (i32, i32, i32) {
    %c0_i32 = arith.constant 0 : i32
    %c0_i32_0 = arith.constant 0 : i32
    %c0_i32_1 = arith.constant 0 : i32
    %c0_i32_2 = arith.constant 0 : i32
    return %c0_i32, %c0_i32_0, %c0_i32_1 : i32, i32, i32
  }
  func.func @transform_10(%arg0: i32) -> (i32, i32) {
    %c0_i32 = arith.constant 0 : i32
    %c0_i32_0 = arith.constant 0 : i32
    %c0_i32_1 = arith.constant 0 : i32
    return %c0_i32, %c0_i32_0 : i32, i32
  }
  func.func @transform_11(%arg0: i32) -> (i32, i32) {
    %c0_i32 = arith.constant 0 : i32
    %c0_i32_0 = arith.constant 0 : i32
    %c0_i32_1 = arith.constant 0 : i32
    return %c0_i32, %c0_i32_0 : i32, i32
  }
  func.func @transform_12(%arg0: i32) -> (i32, i32) {
    %c0_i32 = arith.constant 0 : i32
    %c0_i32_0 = arith.constant 0 : i32
    %c0_i32_1 = arith.constant 0 : i32
    return %c0_i32, %c0_i32_0 : i32, i32
  }
  func.func @transform_13(%arg0: i32) -> (i32, i32) {
    %c0_i32 = arith.constant 0 : i32
    %c0_i32_0 = arith.constant 0 : i32
    %c0_i32_1 = arith.constant 0 : i32
    return %c0_i32, %c0_i32_0 : i32, i32
  }
  func.func @transform_14(%arg0: i32) -> (i32, i32) {
    %c0_i32 = arith.constant 0 : i32
    %c0_i32_0 = arith.constant 0 : i32
    %c0_i32_1 = arith.constant 0 : i32
    return %c0_i32, %c0_i32_0 : i32, i32
  }
  func.func @transform_15(%arg0: i32) -> (i32, i32, i32) {
    %c0_i32 = arith.constant 0 : i32
    %c0_i32_0 = arith.constant 0 : i32
    %c0_i32_1 = arith.constant 0 : i32
    return %arg0, %c0_i32, %c0_i32_0 : i32, i32, i32
  }
}

</mosaic_0001>

<llo_original>
// kernel: lenet_apply.1
$region0: #{lenet_apply.1}
  #allocation0 [shape = 'u32[]', space=smem, size = 0x4, offset = 0x4, fixed_abs, tag = 'smem constant byte address 0x4 - core index']
  #allocation1 [shape = 'u32[144,128]{1,0:T(1,128)}', space=vmem, size = 0x12000, scoped, tag = 'internal scratch']
  %s0 = inlined_call_operand.vmem [shape: bf16[2,32,96], index: 0, kind: input, shape index: {}]
  %s1 = inlined_call_operand.vmem [shape: bf16[5,96,336], index: 1, kind: input, shape index: {}]
  %s2 = inlined_call_operand.vmem [shape: f32[1,336], index: 2, kind: input, shape index: {}]
  %s3 = inlined_call_operand.vmem [shape: bf16[2,14,28], index: 3, kind: input, shape index: {}]
  %s4 = inlined_call_operand.vmem [shape: bf16[2,336,168], index: 4, kind: input, shape index: {}]
  %s5 = inlined_call_operand.vmem [shape: bf16[5,168,320], index: 5, kind: input, shape index: {}]
  %s6 = inlined_call_operand.vmem [shape: f32[1,320], index: 6, kind: input, shape index: {}]
  %s7 = inlined_call_operand.vmem [shape: bf16[2,5,10], index: 7, kind: input, shape index: {}]
  %s8 = inlined_call_operand.vmem [shape: bf16[2,320,160], index: 8, kind: input, shape index: {}]
  %s9 = inlined_call_operand.vmem [shape: bf16[5,160,240], index: 9, kind: input, shape index: {}]
  %s10 = inlined_call_operand.vmem [shape: f32[1,240], index: 10, kind: input, shape index: {}]
  %s11 = inlined_call_operand.vmem [shape: bf16[240,168], index: 11, kind: input, shape index: {}]
  %s12 = inlined_call_operand.vmem [shape: f32[1,168], index: 12, kind: input, shape index: {}]
  %s13 = inlined_call_operand.vmem [shape: bf16[168,128], index: 13, kind: input, shape index: {}]
  %s14 = inlined_call_operand.vmem [shape: f32[1,128], index: 14, kind: input, shape index: {}]
  %s15 = inlined_call_operand.vmem [shape: f32[2,1,128], index: 15, kind: output, shape index: {}]
  %s16 = sld [smem:[#allocation0]]
  $region93: #{lenet_apply.1} parent=0
    _
  %s18 = ssub.s32 1, %s16
  %s19 = scalar_select 0, %s18, %s16
  loop: start=0, step=1, limit=4
  $region2: #{lenet_apply.1} parent=0 // loop_pre_header
    _
  $region3: #{lenet_apply.1} parent=0 // loop_header
    %s21 = sphi 0, %s25
    %p22 = scmp.ge.s32.totalorder %s21, 4
    %s31 = sphi 0, %s33
    %s34 = sphi 0, %s31
    %s35 = sphi 0, %s34
    %s51 = sphi 0, %s35
    %s55 = sphi 0, %s55
    %s57 = sphi 0, %s55
    %s58 = sphi 0, %s57
    %s72 = sphi 0, %s58
    %s76 = sphi 0, %s76
    %s78 = sphi 0, %s76
    %s79 = sphi 0, %s78
    %s93 = sphi 0, %s79
    %s97 = sphi 0, %s97
    %s99 = sphi 0, %s97
    %s100 = sphi 0, %s99
    %s114 = sphi 0, %s100
    %s118 = sphi 0, %s118
    %s120 = sphi 0, %s118
    %s121 = sphi 0, %s120
    %s135 = sphi 0, %s121
    %s139 = sphi 0, %s139
    %s141 = sphi 0, %s139
    %s142 = sphi 0, %s141
    %s156 = sphi 0, %s142
    %s160 = sphi 0, %s160
    %s162 = sphi 0, %s160
    %s163 = sphi 0, %s162
    %s177 = sphi 0, %s163
    %s181 = sphi 0, %s181
    %s183 = sphi 0, %s181
    %s184 = sphi 0, %s183
    %s198 = sphi 0, %s184
    %s202 = sphi 0, %s202
    %s204 = sphi 0, %s202
    %s205 = sphi 0, %s204
    %s219 = sphi 0, %s205
    %s223 = sphi 0, %s223
    %s225 = sphi 0, %s223
    %s226 = sphi 0, %s225
    %s240 = sphi 0, %s226
    %s244 = sphi 0, %s244
    %s246 = sphi 0, %s244
    %s247 = sphi 0, %s246
    %s261 = sphi 0, %s247
    %s265 = sphi 0, %s265
    %s267 = sphi 0, %s265
    %s268 = sphi 0, %s267
    %s282 = sphi 0, %s268
    %s286 = sphi 0, %s286
    %s288 = sphi 0, %s286
    %s289 = sphi 0, %s288
    %s303 = sphi 0, %s289
    %s307 = sphi 0, %s307
    %s309 = sphi 0, %s307
    %s310 = sphi 0, %s309
    %s324 = sphi 0, %s310
    %s328 = sphi 0, %s328
    %s330 = sphi 0, %s328
    %s331 = sphi 0, %s330
    %s345 = sphi 0, %s331
    %s351 = sphi 0, %s353
    %s354 = sphi 0, %s351
    %s355 = sphi 0, %s354
    %s371 = sphi 0, %s355
  $region4: #{lenet_apply.1} parent=0 // loop_header_branch
    %24 = sbr.rel (%p22) target = $region8
  $region5: #{lenet_apply.1} parent=0 // loop_body
    %s26 = ssub.s32 %s21, 1
    %s27 = ssub.s32 %s21, 2
    %s28 = sadd.s32 %s21, 1
    %s29 = ssub.s32 %s21, %s28
    %p30 = scmp.eq.s32.totalorder %s29, 0
    %s32 = sadd.s32 %s31, 1
    %s33 = scalar_select %p30, %s31, %s32
    %p36 = pneg %p30
    %p37 = scmp.eq.s32.totalorder %s21, 1
    %p38 = por %p36, %p37
    %p39 = scmp.ne.s32.totalorder %s31, %s34
    %p40 = scmp.eq.s32.totalorder %s21, 0
    %p41 = por %p39, %p40
    %p42 = scmp.ne.s32.totalorder %s31, %s34
    %p43 = scmp.eq.s32.totalorder %s26, 1
    %p44 = por %p42, %p43
    %p45 = scmp.ne.s32.totalorder %s34, %s35
    %p46 = scmp.eq.s32.totalorder %s26, 0
    %p47 = por %p45, %p46
    %p48 = scmp.ne.s32.totalorder %s34, %s35
    %p49 = scmp.eq.s32.totalorder %s27, 1
    %p50 = por %p48, %p49
    %p52 = scmp.ne.s32.totalorder %s35, %s51
    %p53 = scmp.eq.s32.totalorder %s27, 0
    %p54 = por %p52, %p53
    %s56 = sadd.s32 %s55, 1
    %p59 = scmp.eq.s32.totalorder %s21, 1
    %p60 = scmp.ne.s32.totalorder %s55, %s57
    %p61 = scmp.eq.s32.totalorder %s21, 0
    %p62 = por %p60, %p61
    %p63 = scmp.ne.s32.totalorder %s55, %s57
    %p64 = scmp.eq.s32.totalorder %s26, 1
    %p65 = por %p63, %p64
    %p66 = scmp.ne.s32.totalorder %s57, %s58
    %p67 = scmp.eq.s32.totalorder %s26, 0
    %p68 = por %p66, %p67
    %p69 = scmp.ne.s32.totalorder %s57, %s58
    %p70 = scmp.eq.s32.totalorder %s27, 1
    %p71 = por %p69, %p70
    %p73 = scmp.ne.s32.totalorder %s58, %s72
    %p74 = scmp.eq.s32.totalorder %s27, 0
    %p75 = por %p73, %p74
    %s77 = sadd.s32 %s76, 1
    %p80 = scmp.eq.s32.totalorder %s21, 1
    %p81 = scmp.ne.s32.totalorder %s76, %s78
    %p82 = scmp.eq.s32.totalorder %s21, 0
    %p83 = por %p81, %p82
    %p84 = scmp.ne.s32.totalorder %s76, %s78
    %p85 = scmp.eq.s32.totalorder %s26, 1
    %p86 = por %p84, %p85
    %p87 = scmp.ne.s32.totalorder %s78, %s79
    %p88 = scmp.eq.s32.totalorder %s26, 0
    %p89 = por %p87, %p88
    %p90 = scmp.ne.s32.totalorder %s78, %s79
    %p91 = scmp.eq.s32.totalorder %s27, 1
    %p92 = por %p90, %p91
    %p94 = scmp.ne.s32.totalorder %s79, %s93
    %p95 = scmp.eq.s32.totalorder %s27, 0
    %p96 = por %p94, %p95
    %s98 = sadd.s32 %s97, 1
    %p101 = scmp.eq.s32.totalorder %s21, 1
    %p102 = scmp.ne.s32.totalorder %s97, %s99
    %p103 = scmp.eq.s32.totalorder %s21, 0
    %p104 = por %p102, %p103
    %p105 = scmp.ne.s32.totalorder %s97, %s99
    %p106 = scmp.eq.s32.totalorder %s26, 1
    %p107 = por %p105, %p106
    %p108 = scmp.ne.s32.totalorder %s99, %s100
    %p109 = scmp.eq.s32.totalorder %s26, 0
    %p110 = por %p108, %p109
    %p111 = scmp.ne.s32.totalorder %s99, %s100
    %p112 = scmp.eq.s32.totalorder %s27, 1
    %p113 = por %p111, %p112
    %p115 = scmp.ne.s32.totalorder %s100, %s114
    %p116 = scmp.eq.s32.totalorder %s27, 0
    %p117 = por %p115, %p116
    %s119 = sadd.s32 %s118, 1
    %p122 = scmp.eq.s32.totalorder %s21, 1
    %p123 = scmp.ne.s32.totalorder %s118, %s120
    %p124 = scmp.eq.s32.totalorder %s21, 0
    %p125 = por %p123, %p124
    %p126 = scmp.ne.s32.totalorder %s118, %s120
    %p127 = scmp.eq.s32.totalorder %s26, 1
    %p128 = por %p126, %p127
    %p129 = scmp.ne.s32.totalorder %s120, %s121
    %p130 = scmp.eq.s32.totalorder %s26, 0
    %p131 = por %p129, %p130
    %p132 = scmp.ne.s32.totalorder %s120, %s121
    %p133 = scmp.eq.s32.totalorder %s27, 1
    %p134 = por %p132, %p133
    %p136 = scmp.ne.s32.totalorder %s121, %s135
    %p137 = scmp.eq.s32.totalorder %s27, 0
    %p138 = por %p136, %p137
    %s140 = sadd.s32 %s139, 1
    %p143 = scmp.eq.s32.totalorder %s21, 1
    %p144 = scmp.ne.s32.totalorder %s139, %s141
    %p145 = scmp.eq.s32.totalorder %s21, 0
    %p146 = por %p144, %p145
    %p147 = scmp.ne.s32.totalorder %s139, %s141
    %p148 = scmp.eq.s32.totalorder %s26, 1
    %p149 = por %p147, %p148
    %p150 = scmp.ne.s32.totalorder %s141, %s142
    %p151 = scmp.eq.s32.totalorder %s26, 0
    %p152 = por %p150, %p151
    %p153 = scmp.ne.s32.totalorder %s141, %s142
    %p154 = scmp.eq.s32.totalorder %s27, 1
    %p155 = por %p153, %p154
    %p157 = scmp.ne.s32.totalorder %s142, %s156
    %p158 = scmp.eq.s32.totalorder %s27, 0
    %p159 = por %p157, %p158
    %s161 = sadd.s32 %s160, 1
    %p164 = scmp.eq.s32.totalorder %s21, 1
    %p165 = scmp.ne.s32.totalorder %s160, %s162
    %p166 = scmp.eq.s32.totalorder %s21, 0
    %p167 = por %p165, %p166
    %p168 = scmp.ne.s32.totalorder %s160, %s162
    %p169 = scmp.eq.s32.totalorder %s26, 1
    %p170 = por %p168, %p169
    %p171 = scmp.ne.s32.totalorder %s162, %s163
    %p172 = scmp.eq.s32.totalorder %s26, 0
    %p173 = por %p171, %p172
    %p174 = scmp.ne.s32.totalorder %s162, %s163
    %p175 = scmp.eq.s32.totalorder %s27, 1
    %p176 = por %p174, %p175
    %p178 = scmp.ne.s32.totalorder %s163, %s177
    %p179 = scmp.eq.s32.totalorder %s27, 0
    %p180 = por %p178, %p179
    %s182 = sadd.s32 %s181, 1
    %p185 = scmp.eq.s32.totalorder %s21, 1
    %p186 = scmp.ne.s32.totalorder %s181, %s183
    %p187 = scmp.eq.s32.totalorder %s21, 0
    %p188 = por %p186, %p187
    %p189 = scmp.ne.s32.totalorder %s181, %s183
    %p190 = scmp.eq.s32.totalorder %s26, 1
    %p191 = por %p189, %p190
    %p192 = scmp.ne.s32.totalorder %s183, %s184
    %p193 = scmp.eq.s32.totalorder %s26, 0
    %p194 = por %p192, %p193
    %p195 = scmp.ne.s32.totalorder %s183, %s184
    %p196 = scmp.eq.s32.totalorder %s27, 1
    %p197 = por %p195, %p196
    %p199 = scmp.ne.s32.totalorder %s184, %s198
    %p200 = scmp.eq.s32.totalorder %s27, 0
    %p201 = por %p199, %p200
    %s203 = sadd.s32 %s202, 1
    %p206 = scmp.eq.s32.totalorder %s21, 1
    %p207 = scmp.ne.s32.totalorder %s202, %s204
    %p208 = scmp.eq.s32.totalorder %s21, 0
    %p209 = por %p207, %p208
    %p210 = scmp.ne.s32.totalorder %s202, %s204
    %p211 = scmp.eq.s32.totalorder %s26, 1
    %p212 = por %p210, %p211
    %p213 = scmp.ne.s32.totalorder %s204, %s205
    %p214 = scmp.eq.s32.totalorder %s26, 0
    %p215 = por %p213, %p214
    %p216 = scmp.ne.s32.totalorder %s204, %s205
    %p217 = scmp.eq.s32.totalorder %s27, 1
    %p218 = por %p216, %p217
    %p220 = scmp.ne.s32.totalorder %s205, %s219
    %p221 = scmp.eq.s32.totalorder %s27, 0
    %p222 = por %p220, %p221
    %s224 = sadd.s32 %s223, 1
    %p227 = scmp.eq.s32.totalorder %s21, 1
    %p228 = scmp.ne.s32.totalorder %s223, %s225
    %p229 = scmp.eq.s32.totalorder %s21, 0
    %p230 = por %p228, %p229
    %p231 = scmp.ne.s32.totalorder %s223, %s225
    %p232 = scmp.eq.s32.totalorder %s26, 1
    %p233 = por %p231, %p232
    %p234 = scmp.ne.s32.totalorder %s225, %s226
    %p235 = scmp.eq.s32.totalorder %s26, 0
    %p236 = por %p234, %p235
    %p237 = scmp.ne.s32.totalorder %s225, %s226
    %p238 = scmp.eq.s32.totalorder %s27, 1
    %p239 = por %p237, %p238
    %p241 = scmp.ne.s32.totalorder %s226, %s240
    %p242 = scmp.eq.s32.totalorder %s27, 0
    %p243 = por %p241, %p242
    %s245 = sadd.s32 %s244, 1
    %p248 = scmp.eq.s32.totalorder %s21, 1
    %p249 = scmp.ne.s32.totalorder %s244, %s246
    %p250 = scmp.eq.s32.totalorder %s21, 0
    %p251 = por %p249, %p250
    %p252 = scmp.ne.s32.totalorder %s244, %s246
    %p253 = scmp.eq.s32.totalorder %s26, 1
    %p254 = por %p252, %p253
    %p255 = scmp.ne.s32.totalorder %s246, %s247
    %p256 = scmp.eq.s32.totalorder %s26, 0
    %p257 = por %p255, %p256
    %p258 = scmp.ne.s32.totalorder %s246, %s247
    %p259 = scmp.eq.s32.totalorder %s27, 1
    %p260 = por %p258, %p259
    %p262 = scmp.ne.s32.totalorder %s247, %s261
    %p263 = scmp.eq.s32.totalorder %s27, 0
    %p264 = por %p262, %p263
    %s266 = sadd.s32 %s265, 1
    %p269 = scmp.eq.s32.totalorder %s21, 1
    %p270 = scmp.ne.s32.totalorder %s265, %s267
    %p271 = scmp.eq.s32.totalorder %s21, 0
    %p272 = por %p270, %p271
    %p273 = scmp.ne.s32.totalorder %s265, %s267
    %p274 = scmp.eq.s32.totalorder %s26, 1
    %p275 = por %p273, %p274
    %p276 = scmp.ne.s32.totalorder %s267, %s268
    %p277 = scmp.eq.s32.totalorder %s26, 0
    %p278 = por %p276, %p277
    %p279 = scmp.ne.s32.totalorder %s267, %s268
    %p280 = scmp.eq.s32.totalorder %s27, 1
    %p281 = por %p279, %p280
    %p283 = scmp.ne.s32.totalorder %s268, %s282
    %p284 = scmp.eq.s32.totalorder %s27, 0
    %p285 = por %p283, %p284
    %s287 = sadd.s32 %s286, 1
    %p290 = scmp.eq.s32.totalorder %s21, 1
    %p291 = scmp.ne.s32.totalorder %s286, %s288
    %p292 = scmp.eq.s32.totalorder %s21, 0
    %p293 = por %p291, %p292
    %p294 = scmp.ne.s32.totalorder %s286, %s288
    %p295 = scmp.eq.s32.totalorder %s26, 1
    %p296 = por %p294, %p295
    %p297 = scmp.ne.s32.totalorder %s288, %s289
    %p298 = scmp.eq.s32.totalorder %s26, 0
    %p299 = por %p297, %p298
    %p300 = scmp.ne.s32.totalorder %s288, %s289
    %p301 = scmp.eq.s32.totalorder %s27, 1
    %p302 = por %p300, %p301
    %p304 = scmp.ne.s32.totalorder %s289, %s303
    %p305 = scmp.eq.s32.totalorder %s27, 0
    %p306 = por %p304, %p305
    %s308 = sadd.s32 %s307, 1
    %p311 = scmp.eq.s32.totalorder %s21, 1
    %p312 = scmp.ne.s32.totalorder %s307, %s309
    %p313 = scmp.eq.s32.totalorder %s21, 0
    %p314 = por %p312, %p313
    %p315 = scmp.ne.s32.totalorder %s307, %s309
    %p316 = scmp.eq.s32.totalorder %s26, 1
    %p317 = por %p315, %p316
    %p318 = scmp.ne.s32.totalorder %s309, %s310
    %p319 = scmp.eq.s32.totalorder %s26, 0
    %p320 = por %p318, %p319
    %p321 = scmp.ne.s32.totalorder %s309, %s310
    %p322 = scmp.eq.s32.totalorder %s27, 1
    %p323 = por %p321, %p322
    %p325 = scmp.ne.s32.totalorder %s310, %s324
    %p326 = scmp.eq.s32.totalorder %s27, 0
    %p327 = por %p325, %p326
    %s329 = sadd.s32 %s328, 1
    %p332 = scmp.eq.s32.totalorder %s21, 1
    %p333 = scmp.ne.s32.totalorder %s328, %s330
    %p334 = scmp.eq.s32.totalorder %s21, 0
    %p335 = por %p333, %p334
    %p336 = scmp.ne.s32.totalorder %s328, %s330
    %p337 = scmp.eq.s32.totalorder %s26, 1
    %p338 = por %p336, %p337
    %p339 = scmp.ne.s32.totalorder %s330, %s331
    %p340 = scmp.eq.s32.totalorder %s26, 0
    %p341 = por %p339, %p340
    %p342 = scmp.ne.s32.totalorder %s330, %s331
    %p343 = scmp.eq.s32.totalorder %s27, 1
    %p344 = por %p342, %p343
    %p346 = scmp.ne.s32.totalorder %s331, %s345
    %p347 = scmp.eq.s32.totalorder %s27, 0
    %p348 = por %p346, %p347
    %s349 = ssub.s32 %s21, %s28
    %p350 = scmp.eq.s32.totalorder %s349, 0
    %s352 = sadd.s32 %s351, 1
    %s353 = scalar_select %p350, %s351, %s352
    %p356 = pneg %p350
    %p357 = scmp.eq.s32.totalorder %s21, 1
    %p358 = por %p356, %p357
    %p359 = scmp.ne.s32.totalorder %s351, %s354
    %p360 = scmp.eq.s32.totalorder %s21, 0
    %p361 = por %p359, %p360
    %p362 = scmp.ne.s32.totalorder %s351, %s354
    %p363 = scmp.eq.s32.totalorder %s26, 1
    %p364 = por %p362, %p363
    %p365 = scmp.ne.s32.totalorder %s354, %s355
    %p366 = scmp.eq.s32.totalorder %s26, 0
    %p367 = por %p365, %p366
    %p368 = scmp.ne.s32.totalorder %s354, %s355
    %p369 = scmp.eq.s32.totalorder %s27, 1
    %p370 = por %p368, %p369
    %p372 = scmp.ne.s32.totalorder %s355, %s371
    %p373 = scmp.eq.s32.totalorder %s27, 0
    %p374 = por %p372, %p373
    %p375 = scmp.le.s32.totalorder 1, %s21
    %p376 = scmp.lt.s32.totalorder %s21, 3
    %p377 = pnand %p375, %p376
    %p378 = pneg %p377
    // Predicated region
    $region9: #{lenet_apply.1} parent=5 // pred_check
      _
    $region10: #{lenet_apply.1} parent=5 // pred_check_branch
      %380 = sbr.rel (%p377) target = $region12
    $region11: #{lenet_apply.1} parent=5 // pred_region
      %s381 = ssub.s32 %s21, 1
      // Predicated region
      $region13: #{lenet_apply.1} parent=11 // pred_check
        %p382 = pneg %p68
      $region14: #{lenet_apply.1} parent=11 // pred_check_branch
        %384 = sbr.rel (%p382) target = $region16
      $region15: #{lenet_apply.1} parent=11 // pred_region
        _
      $region16: #{lenet_apply.1} parent=11 // pred_fallthru
        _
      // Predicated region
      $region17: #{lenet_apply.1} parent=11 // pred_check
        %p385 = pneg %p89
      $region18: #{lenet_apply.1} parent=11 // pred_check_branch
        %387 = sbr.rel (%p385) target = $region20
      $region19: #{lenet_apply.1} parent=11 // pred_region
        _
      $region20: #{lenet_apply.1} parent=11 // pred_fallthru
        _
      // Predicated region
      $region21: #{lenet_apply.1} parent=11 // pred_check
        %p388 = pneg %p110
      $region22: #{lenet_apply.1} parent=11 // pred_check_branch
        %390 = sbr.rel (%p388) target = $region24
      $region23: #{lenet_apply.1} parent=11 // pred_region
        _
      $region24: #{lenet_apply.1} parent=11 // pred_fallthru
        _
      // Predicated region
      $region25: #{lenet_apply.1} parent=11 // pred_check
        %p391 = pneg %p131
      $region26: #{lenet_apply.1} parent=11 // pred_check_branch
        %393 = sbr.rel (%p391) target = $region28
      $region27: #{lenet_apply.1} parent=11 // pred_region
        _
      $region28: #{lenet_apply.1} parent=11 // pred_fallthru
        _
      // Predicated region
      $region29: #{lenet_apply.1} parent=11 // pred_check
        %p394 = pneg %p152
      $region30: #{lenet_apply.1} parent=11 // pred_check_branch
        %396 = sbr.rel (%p394) target = $region32
      $region31: #{lenet_apply.1} parent=11 // pred_region
        _
      $region32: #{lenet_apply.1} parent=11 // pred_fallthru
        _
      // Predicated region
      $region33: #{lenet_apply.1} parent=11 // pred_check
        %p397 = pneg %p173
      $region34: #{lenet_apply.1} parent=11 // pred_check_branch
        %399 = sbr.rel (%p397) target = $region36
      $region35: #{lenet_apply.1} parent=11 // pred_region
        _
      $region36: #{lenet_apply.1} parent=11 // pred_fallthru
        _
      // Predicated region
      $region37: #{lenet_apply.1} parent=11 // pred_check
        %p400 = pneg %p194
      $region38: #{lenet_apply.1} parent=11 // pred_check_branch
        %402 = sbr.rel (%p400) target = $region40
      $region39: #{lenet_apply.1} parent=11 // pred_region
        _
      $region40: #{lenet_apply.1} parent=11 // pred_fallthru
        _
      // Predicated region
      $region41: #{lenet_apply.1} parent=11 // pred_check
        %p403 = pneg %p215
      $region42: #{lenet_apply.1} parent=11 // pred_check_branch
        %405 = sbr.rel (%p403) target = $region44
      $region43: #{lenet_apply.1} parent=11 // pred_region
        _
      $region44: #{lenet_apply.1} parent=11 // pred_fallthru
        _
      // Predicated region
      $region45: #{lenet_apply.1} parent=11 // pred_check
        %p406 = pneg %p236
      $region46: #{lenet_apply.1} parent=11 // pred_check_branch
        %408 = sbr.rel (%p406) target = $region48
      $region47: #{lenet_apply.1} parent=11 // pred_region
        _
      $region48: #{lenet_apply.1} parent=11 // pred_fallthru
        _
      // Predicated region
      $region49: #{lenet_apply.1} parent=11 // pred_check
        %p409 = pneg %p257
      $region50: #{lenet_apply.1} parent=11 // pred_check_branch
        %411 = sbr.rel (%p409) target = $region52
      $region51: #{lenet_apply.1} parent=11 // pred_region
        _
      $region52: #{lenet_apply.1} parent=11 // pred_fallthru
        _
      // Predicated region
      $region53: #{lenet_apply.1} parent=11 // pred_check
        %p412 = pneg %p278
      $region54: #{lenet_apply.1} parent=11 // pred_check_branch
        %414 = sbr.rel (%p412) target = $region56
      $region55: #{lenet_apply.1} parent=11 // pred_region
        _
      $region56: #{lenet_apply.1} parent=11 // pred_fallthru
        _
      // Predicated region
      $region57: #{lenet_apply.1} parent=11 // pred_check
        %p415 = pneg %p299
      $region58: #{lenet_apply.1} parent=11 // pred_check_branch
        %417 = sbr.rel (%p415) target = $region60
      $region59: #{lenet_apply.1} parent=11 // pred_region
        _
      $region60: #{lenet_apply.1} parent=11 // pred_fallthru
        _
      // Predicated region
      $region61: #{lenet_apply.1} parent=11 // pred_check
        %p418 = pneg %p320
      $region62: #{lenet_apply.1} parent=11 // pred_check_branch
        %420 = sbr.rel (%p418) target = $region64
      $region63: #{lenet_apply.1} parent=11 // pred_region
        _
      $region64: #{lenet_apply.1} parent=11 // pred_fallthru
        _
      // Predicated region
      $region65: #{lenet_apply.1} parent=11 // pred_check
        %p421 = pneg %p341
      $region66: #{lenet_apply.1} parent=11 // pred_check_branch
        %423 = sbr.rel (%p421) target = $region68
      $region67: #{lenet_apply.1} parent=11 // pred_region
        _
      $region68: #{lenet_apply.1} parent=11 // pred_fallthru
        _
    $region12: #{lenet_apply.1} parent=5 // pred_fallthru
      _
    %p424 = scmp.lt.s32.totalorder %s21, 2
    // Predicated region
    $region69: #{lenet_apply.1} parent=5 // pred_check
      %p425 = pneg %p424
    $region70: #{lenet_apply.1} parent=5 // pred_check_branch
      %427 = sbr.rel (%p425) target = $region72
    $region71: #{lenet_apply.1} parent=5 // pred_region
      // Predicated region
      $region73: #{lenet_apply.1} parent=71 // pred_check
        %p428 = pneg %p41
      $region74: #{lenet_apply.1} parent=71 // pred_check_branch
        %430 = sbr.rel (%p428) target = $region76
      $region75: #{lenet_apply.1} parent=71 // pred_region
        %p431 = scmp.lt.s32.totalorder %s21, 1
        %s432 = scalar_select %p431, %s21, 1
        %s433 = smul.addr %s432, 4
        %s434 = smul.addr %s433, 4
        %s435 = scalar_lea.vmem %s0, %s434
      $region76: #{lenet_apply.1} parent=71 // pred_fallthru
        _
    $region72: #{lenet_apply.1} parent=5 // pred_fallthru
      _
    %p436 = scmp.le.s32.totalorder 1, %s21
    %p437 = scmp.lt.s32.totalorder %s21, 3
    %p438 = pnand %p436, %p437
    %p439 = pneg %p438
    // Predicated region
    $region77: #{lenet_apply.1} parent=5 // pred_check
      _
    $region78: #{lenet_apply.1} parent=5 // pred_check_branch
      %441 = sbr.rel (%p438) target = $region80
    $region79: #{lenet_apply.1} parent=5 // pred_region
      %s442 = ssub.s32 %s21, 1
      %p443 = scmp.lt.s32.totalorder %s26, 1
      %s444 = scalar_select %p443, %s26, 1
      %s445 = smul.addr %s444, 4
      %s446 = smul.addr %s445, 4
      %s447 = scalar_lea.vmem %s0, %s446
      %p448 = pneg %p47
      %p449 = pneg %p44
      %p450 = pneg %p68
      %p451 = pneg %p65
      %p452 = pneg %p89
      %p453 = pneg %p86
      %p454 = pneg %p110
      %p455 = pneg %p107
      %p456 = pneg %p131
      %p457 = pneg %p128
      %p458 = pneg %p152
      %p459 = pneg %p149
      %p460 = pneg %p173
      %p461 = pneg %p170
      %p462 = pneg %p194
      %p463 = pneg %p191
      %p464 = pneg %p215
      %p465 = pneg %p212
      %p466 = pneg %p236
      %p467 = pneg %p233
      %p468 = pneg %p257
      %p469 = pneg %p254
      %p470 = pneg %p278
      %p471 = pneg %p275
      %p472 = pneg %p299
      %p473 = pneg %p296
      %p474 = pneg %p320
      %p475 = pneg %p317
      %p476 = pneg %p341
      %p477 = pneg %p338
      %p478 = pneg %p367
      %p479 = pneg %p364
      %p480 = scmp.lt.s32.totalorder %s26, 1
      %s481 = scalar_select %p480, %s26, 1
      %s482 = scalar_lea.vmem %s15, %s481
      %p483 = scmp.lt.s32.totalorder %s26, 1
      %s484 = scalar_select %p483, %s26, 1
      %s485 = smul.addr %s484, 4
      %s486 = smul.addr %s485, 4
      %s487 = scalar_lea.vmem %s0, %s486
      %p488 = scmp.lt.s32.totalorder %s26, 1
      %s489 = scalar_select %p488, %s26, 1
      %s490 = scalar_lea.vmem %s15, %s489
      %v492 = vld [vmem:[%s487] sm:$0xf]
      %v493 = vld [vmem:[%s487 + $0x4] sm:$0xf]
      %v494 = vld [vmem:[%s487 + $0x8] sm:$0xf]
      %v495 = vld [vmem:[%s487 + $0xc] sm:$0x3]
      %v496 = vld [vmem:[%s1] sm:$0xff]
      %v497 = vld [vmem:[%s1 + $0x8] sm:$0xf]
      %v498 = vld [vmem:[%s1 + $0xc] sm:$0xff]
      %v499 = vld [vmem:[%s1 + $0x14] sm:$0xf]
      %v500 = vld [vmem:[%s1 + $0x18] sm:$0xff]
      %v501 = vld [vmem:[%s1 + $0x20] sm:$0xf]
      %v502 = vld [vmem:[%s1 + $0x24] sm:$0xff]
      %v503 = vld [vmem:[%s1 + $0x2c] sm:$0xf]
      %v504 = vld [vmem:[%s1 + $0x30] sm:$0xff]
      %v505 = vld [vmem:[%s1 + $0x38] sm:$0xf]
      %v506 = vld [vmem:[%s1 + $0x3c] sm:$0xff]
      %v507 = vld [vmem:[%s1 + $0x44] sm:$0xf]
      %v508 = vld [vmem:[%s1 + $0x48] sm:$0xff]
      %v509 = vld [vmem:[%s1 + $0x50] sm:$0xf]
      %v510 = vld [vmem:[%s1 + $0x54] sm:$0xff]
      %v511 = vld [vmem:[%s1 + $0x5c] sm:$0xf]
      %v512 = vld [vmem:[%s1 + $0x60] sm:$0xff]
      %v513 = vld [vmem:[%s1 + $0x68] sm:$0xf]
      %v514 = vld [vmem:[%s1 + $0x6c] sm:$0xff]
      %v515 = vld [vmem:[%s1 + $0x74] sm:$0xf]
      %v516 = vld [vmem:[%s1 + $0x78] sm:$0xff]
      %v517 = vld [vmem:[%s1 + $0x80] sm:$0xf]
      %v518 = vld [vmem:[%s1 + $0x84] sm:$0xff]
      %v519 = vld [vmem:[%s1 + $0x8c] sm:$0xf]
      %v520 = vld [vmem:[%s487 + $0xc] sm:$0x7]
      %s521 = scalar_lea.vmem %s1, 144
      %v522 = vld [vmem:[%s521] sm:$0xff]
      %v523 = vld [vmem:[%s521 + $0x8] sm:$0xf]
      %v524 = vld [vmem:[%s521 + $0xc] sm:$0xff]
      %v525 = vld [vmem:[%s521 + $0x14] sm:$0xf]
      %v526 = vld [vmem:[%s521 + $0x18] sm:$0xff]
      %v527 = vld [vmem:[%s521 + $0x20] sm:$0xf]
      %v528 = vld [vmem:[%s521 + $0x24] sm:$0xff]
      %v529 = vld [vmem:[%s521 + $0x2c] sm:$0xf]
      %v530 = vld [vmem:[%s521 + $0x30] sm:$0xff]
      %v531 = vld [vmem:[%s521 + $0x38] sm:$0xf]
      %v532 = vld [vmem:[%s521 + $0x3c] sm:$0xff]
      %v533 = vld [vmem:[%s521 + $0x44] sm:$0xf]
      %v534 = vld [vmem:[%s521 + $0x48] sm:$0xff]
      %v535 = vld [vmem:[%s521 + $0x50] sm:$0xf]
      %v536 = vld [vmem:[%s521 + $0x54] sm:$0xff]
      %v537 = vld [vmem:[%s521 + $0x5c] sm:$0xf]
      %v538 = vld [vmem:[%s521 + $0x60] sm:$0xff]
      %v539 = vld [vmem:[%s521 + $0x68] sm:$0xf]
      %v540 = vld [vmem:[%s521 + $0x6c] sm:$0xff]
      %v541 = vld [vmem:[%s521 + $0x74] sm:$0xf]
      %v542 = vld [vmem:[%s521 + $0x78] sm:$0xff]
      %v543 = vld [vmem:[%s521 + $0x80] sm:$0xf]
      %v544 = vld [vmem:[%s521 + $0x84] sm:$0xff]
      %v545 = vld [vmem:[%s521 + $0x8c] sm:$0xf]
      %v550 = vunpack.c.l.b16 %v492
      %v551 = vunpack.c.l.b16 %v493
      %v552 = vunpack.c.l.b16 %v494
      %v553 = vunpack.c.l.b16 %v520
      %v554 = vpack.c.b16 %v551, %v550
      %v555 = vpack.c.b16 %v553, %v552
      %vm556 = vsmask.f32 7424
      %v558 = vshrl.u32 %v554, 16
      %v560 = vshll.u32 %v554, 16
      %v562 = vrot.slane %v560, 1
      %v563 = vor.u32 %v558, %v562
      %v565 = vshll.u32 %v555, 16
      %v567 = vrot.slane %v565, 1
      %v568 = vsel %vm556, %v563, %v567
      %v569 = vshrl.u32 %v555, 16
      %v571 = vor.u32 %v569, %v567
      %v596 = vunpack.c.l.b16 %v522
      %v597 = vunpack.c.h.b16 %v522
      %v598 = vunpack.c.l.b16 %v523
      %v599 = vunpack.c.l.b16 %v524
      %v600 = vunpack.c.h.b16 %v524
      %v601 = vunpack.c.l.b16 %v525
      %v602 = vunpack.c.l.b16 %v526
      %v603 = vunpack.c.h.b16 %v526
      %v604 = vunpack.c.l.b16 %v527
      %v605 = vunpack.c.l.b16 %v528
      %v606 = vunpack.c.h.b16 %v528
      %v607 = vunpack.c.l.b16 %v529
      %v608 = vunpack.c.l.b16 %v530
      %v609 = vunpack.c.h.b16 %v530
      %v610 = vunpack.c.l.b16 %v531
      %v611 = vunpack.c.l.b16 %v532
      %v612 = vunpack.c.h.b16 %v532
      %v613 = vunpack.c.l.b16 %v533
      %v614 = vunpack.c.l.b16 %v534
      %v615 = vunpack.c.h.b16 %v534
      %v616 = vunpack.c.l.b16 %v535
      %v617 = vunpack.c.l.b16 %v536
      %v618 = vunpack.c.h.b16 %v536
      %v619 = vunpack.c.l.b16 %v537
      %v620 = vunpack.c.l.b16 %v538
      %v621 = vunpack.c.h.b16 %v538
      %v622 = vunpack.c.l.b16 %v539
      %v623 = vunpack.c.l.b16 %v540
      %v624 = vunpack.c.h.b16 %v540
      %v625 = vunpack.c.l.b16 %v541
      %v626 = vunpack.c.l.b16 %v542
      %v627 = vunpack.c.h.b16 %v542
      %v628 = vunpack.c.l.b16 %v543
      %v629 = vunpack.c.l.b16 %v544
      %v630 = vunpack.c.h.b16 %v544
      %v631 = vunpack.c.l.b16 %v545
      %v632 = vpack.c.b16 %v599, %v596
      %v633 = vpack.c.b16 %v600, %v597
      %v634 = vpack.c.b16 %v601, %v598
      %v635 = vpack.c.b16 %v605, %v602
      %v636 = vpack.c.b16 %v606, %v603
      %v637 = vpack.c.b16 %v607, %v604
      %v638 = vpack.c.b16 %v611, %v608
      %v639 = vpack.c.b16 %v612, %v609
      %v640 = vpack.c.b16 %v613, %v610
      %v641 = vpack.c.b16 %v617, %v614
      %v642 = vpack.c.b16 %v618, %v615
      %v643 = vpack.c.b16 %v619, %v616
      %v644 = vpack.c.b16 %v623, %v620
      %v645 = vpack.c.b16 %v624, %v621
      %v646 = vpack.c.b16 %v625, %v622
      %v647 = vpack.c.b16 %v629, %v626
      %v648 = vpack.c.b16 %v630, %v627
      %v649 = vpack.c.b16 %v631, %v628
      %vm668 = vcmask 785408
      %v670 = vsel %vm668, %v568, 0
      %v673 = vsel %vm668, %v571, 0
      %675 = vmatprep.subr.bf16.mxu0 %v633
      %676 = vmatpush1.bf16.msra.mxu0 %v632
      %677 = vmatprep.subr.bf16.mxu0 %v636
      %678 = vmatpush1.bf16.msra.mxu0 %v635
      %679 = vmatprep.subr.bf16.mxu0 %v639
      %680 = vmatpush1.bf16.msra.mxu0 %v638
      %681 = vmatprep.subr.bf16.mxu0 %v642
      %682 = vmatpush1.bf16.msra.mxu0 %v641
      %683 = vmatprep.subr.bf16.mxu0 %v645
      %684 = vmatpush1.bf16.msra.mxu0 %v644
      %685 = vmatprep.subr.bf16.mxu0 %v648
      %686 = vmatpush1.bf16.msra.mxu0 %v647
      %687 = vmatprep.subr.bf16.mxu0 0
      %688 = vmatpush1.bf16.msra.mxu0 0
      %689 = vmatprep.subr.bf16.mxu0 0
      %690 = vmatpush1.bf16.msra.mxu0 0
      %691 = vmatprep.subr.bf16.mxu0 0
      %692 = vmatpush1.bf16.msra.mxu0 0
      %693 = vmatprep.subr.bf16.mxu0 0
      %694 = vmatpush1.bf16.msra.mxu0 0
      %695 = vmatprep.subr.bf16.mxu0 0
      %696 = vmatpush1.bf16.msra.mxu0 0
      %697 = vmatprep.subr.bf16.mxu0 0
      %698 = vmatpush1.bf16.msra.mxu0 0
      %699 = vmatprep.subr.bf16.mxu0 0
      %700 = vmatpush1.bf16.msra.mxu0 0
      %701 = vmatprep.subr.bf16.mxu0 0
      %702 = vmatpush1.bf16.msra.mxu0 0
      %703 = vmatprep.subr.bf16.mxu0 0
      %704 = vmatpush1.bf16.msra.mxu0 0
      %705 = vmatprep.subr.bf16.mxu0 0
      %706 = vmatpush1.bf16.msra.mxu0 0
      %707 = vmatprep.mubr.bf16.mxu0 0
      %708 = vmatmul.mubr.bf16.gmra.mrb[0].mxu0 %v670
      %v709 = vpop.f32.mrb[0].mxu0
      %v710 = vadd.f32 0.0, %v709
      %v711 = vpop.f32.mrb[0].mxu0
      %v712 = vadd.f32 0.0, %v711
      %v713 = vpop.f32.mrb[0].mxu0
      %v714 = vadd.f32 0.0, %v713
      %v715 = vpop.f32.mrb[0].mxu0
      %v716 = vadd.f32 0.0, %v715
      %717 = vmatprep.mubr.bf16.mxu0 0
      %718 = vmatmul.mubr.bf16.gmra.mrb[0].mxu0 %v673
      %v719 = vpop.f32.mrb[0].mxu0
      %v720 = vadd.f32 0.0, %v719
      %v721 = vpop.f32.mrb[0].mxu0
      %v722 = vadd.f32 0.0, %v721
      %v723 = vpop.f32.mrb[0].mxu0
      %v724 = vadd.f32 0.0, %v723
      %v725 = vpop.f32.mrb[0].mxu0
      %v726 = vadd.f32 0.0, %v725
      %727 = vdwg.mxu0
      %728 = vmatprep.subr.bf16.mxu0 0
      %729 = vmatpush1.bf16.msra.mxu0 %v634
      %730 = vmatprep.subr.bf16.mxu0 0
      %731 = vmatpush1.bf16.msra.mxu0 %v637
      %732 = vmatprep.subr.bf16.mxu0 0
      %733 = vmatpush1.bf16.msra.mxu0 %v640
      %734 = vmatprep.subr.bf16.mxu0 0
      %735 = vmatpush1.bf16.msra.mxu0 %v643
      %736 = vmatprep.subr.bf16.mxu0 0
      %737 = vmatpush1.bf16.msra.mxu0 %v646
      %738 = vmatprep.subr.bf16.mxu0 0
      %739 = vmatpush1.bf16.msra.mxu0 %v649
      %740 = vmatprep.subr.bf16.mxu0 0
      %741 = vmatpush1.bf16.msra.mxu0 0
      %742 = vmatprep.subr.bf16.mxu0 0
      %743 = vmatpush1.bf16.msra.mxu0 0
      %744 = vmatprep.subr.bf16.mxu0 0
      %745 = vmatpush1.bf16.msra.mxu0 0
      %746 = vmatprep.subr.bf16.mxu0 0
      %747 = vmatpush1.bf16.msra.mxu0 0
      %748 = vmatprep.subr.bf16.mxu0 0
      %749 = vmatpush1.bf16.msra.mxu0 0
      %750 = vmatprep.subr.bf16.mxu0 0
      %751 = vmatpush1.bf16.msra.mxu0 0
      %752 = vmatprep.subr.bf16.mxu0 0
      %753 = vmatpush1.bf16.msra.mxu0 0
      %754 = vmatprep.subr.bf16.mxu0 0
      %755 = vmatpush1.bf16.msra.mxu0 0
      %756 = vmatprep.subr.bf16.mxu0 0
      %757 = vmatpush1.bf16.msra.mxu0 0
      %758 = vmatprep.subr.bf16.mxu0 0
      %759 = vmatpush1.bf16.msra.mxu0 0
      %760 = vmatprep.mubr.bf16.mxu0 0
      %761 = vmatmul.mubr.bf16.gmra.mrb[0].mxu0 %v670
      %v762 = vpop.f32.mrb[0].mxu0
      %v763 = vadd.f32 0.0, %v762
      %v764 = vpop.f32.mrb[0].mxu0
      %v765 = vpop.f32.mrb[0].mxu0
      %v766 = vadd.f32 0.0, %v765
      %v767 = vpop.f32.mrb[0].mxu0
      %768 = vmatprep.mubr.bf16.mxu0 0
      %769 = vmatmul.mubr.bf16.gmra.mrb[0].mxu0 %v673
      %v770 = vpop.f32.mrb[0].mxu0
      %v771 = vadd.f32 0.0, %v770
      %v772 = vpop.f32.mrb[0].mxu0
      %v773 = vpop.f32.mrb[0].mxu0
      %v774 = vadd.f32 0.0, %v773
      %v775 = vpop.f32.mrb[0].mxu0
      %776 = vdwg.mxu0
      %v778 = vunpack.c.l.b16 %v495
      %v779 = vpack.c.b16 %v778, %v552
      %v804 = vunpack.c.l.b16 %v496
      %v805 = vunpack.c.h.b16 %v496
      %v806 = vunpack.c.l.b16 %v497
      %v807 = vunpack.c.l.b16 %v498
      %v808 = vunpack.c.h.b16 %v498
      %v809 = vunpack.c.l.b16 %v499
      %v810 = vunpack.c.l.b16 %v500
      %v811 = vunpack.c.h.b16 %v500
      %v812 = vunpack.c.l.b16 %v501
      %v813 = vunpack.c.l.b16 %v502
      %v814 = vunpack.c.h.b16 %v502
      %v815 = vunpack.c.l.b16 %v503
      %v816 = vunpack.c.l.b16 %v504
      %v817 = vunpack.c.h.b16 %v504
      %v818 = vunpack.c.l.b16 %v505
      %v819 = vunpack.c.l.b16 %v506
      %v820 = vunpack.c.h.b16 %v506
      %v821 = vunpack.c.l.b16 %v507
      %v822 = vunpack.c.l.b16 %v508
      %v823 = vunpack.c.h.b16 %v508
      %v824 = vunpack.c.l.b16 %v509
      %v825 = vunpack.c.l.b16 %v510
      %v826 = vunpack.c.h.b16 %v510
      %v827 = vunpack.c.l.b16 %v511
      %v828 = vunpack.c.l.b16 %v512
      %v829 = vunpack.c.h.b16 %v512
      %v830 = vunpack.c.l.b16 %v513
      %v831 = vunpack.c.l.b16 %v514
      %v832 = vunpack.c.h.b16 %v514
      %v833 = vunpack.c.l.b16 %v515
      %v834 = vunpack.c.l.b16 %v516
      %v835 = vunpack.c.h.b16 %v516
      %v836 = vunpack.c.l.b16 %v517
      %v837 = vunpack.c.l.b16 %v518
      %v838 = vunpack.c.h.b16 %v518
      %v839 = vunpack.c.l.b16 %v519
      %v840 = vpack.c.b16 %v807, %v804
      %v841 = vpack.c.b16 %v808, %v805
      %v842 = vpack.c.b16 %v809, %v806
      %v843 = vpack.c.b16 %v813, %v810
      %v844 = vpack.c.b16 %v814, %v811
      %v845 = vpack.c.b16 %v815, %v812
      %v846 = vpack.c.b16 %v819, %v816
      %v847 = vpack.c.b16 %v820, %v817
      %v848 = vpack.c.b16 %v821, %v818
      %v849 = vpack.c.b16 %v825, %v822
      %v850 = vpack.c.b16 %v826, %v823
      %v851 = vpack.c.b16 %v827, %v824
      %v852 = vpack.c.b16 %v831, %v828
      %v853 = vpack.c.b16 %v832, %v829
      %v854 = vpack.c.b16 %v833, %v830
      %v855 = vpack.c.b16 %v837, %v834
      %v856 = vpack.c.b16 %v838, %v835
      %v857 = vpack.c.b16 %v839, %v836
      %v876 = vsel %vm668, %v554, 0
      %v879 = vsel %vm668, %v779, 0
      %881 = vmatprep.subr.bf16.mxu0 %v841
      %882 = vmatpush1.bf16.msra.mxu0 %v840
      %883 = vmatprep.subr.bf16.mxu0 %v844
      %884 = vmatpush1.bf16.msra.mxu0 %v843
      %885 = vmatprep.subr.bf16.mxu0 %v847
      %886 = vmatpush1.bf16.msra.mxu0 %v846
      %887 = vmatprep.subr.bf16.mxu0 %v850
      %888 = vmatpush1.bf16.msra.mxu0 %v849
      %889 = vmatprep.subr.bf16.mxu0 %v853
      %890 = vmatpush1.bf16.msra.mxu0 %v852
      %891 = vmatprep.subr.bf16.mxu0 %v856
      %892 = vmatpush1.bf16.msra.mxu0 %v855
      %893 = vmatprep.subr.bf16.mxu0 0
      %894 = vmatpush1.bf16.msra.mxu0 0
      %895 = vmatprep.subr.bf16.mxu0 0
      %896 = vmatpush1.bf16.msra.mxu0 0
      %897 = vmatprep.subr.bf16.mxu0 0
      %898 = vmatpush1.bf16.msra.mxu0 0
      %899 = vmatprep.subr.bf16.mxu0 0
      %900 = vmatpush1.bf16.msra.mxu0 0
      %901 = vmatprep.subr.bf16.mxu0 0
      %902 = vmatpush1.bf16.msra.mxu0 0
      %903 = vmatprep.subr.bf16.mxu0 0
      %904 = vmatpush1.bf16.msra.mxu0 0
      %905 = vmatprep.subr.bf16.mxu0 0
      %906 = vmatpush1.bf16.msra.mxu0 0
      %907 = vmatprep.subr.bf16.mxu0 0
      %908 = vmatpush1.bf16.msra.mxu0 0
      %909 = vmatprep.subr.bf16.mxu0 0
      %910 = vmatpush1.bf16.msra.mxu0 0
      %911 = vmatprep.subr.bf16.mxu0 0
      %912 = vmatpush1.bf16.msra.mxu0 0
      %913 = vmatprep.mubr.bf16.mxu0 0
      %914 = vmatmul.mubr.bf16.gmra.mrb[0].mxu0 %v876
      %v915 = vpop.f32.mrb[0].mxu0
      %v916 = vadd.f32 %v710, %v915
      %v917 = vpop.f32.mrb[0].mxu0
      %v918 = vadd.f32 %v712, %v917
      %v919 = vpop.f32.mrb[0].mxu0
      %v920 = vadd.f32 %v714, %v919
      %v921 = vpop.f32.mrb[0].mxu0
      %v922 = vadd.f32 %v716, %v921
      %923 = vmatprep.mubr.bf16.mxu0 0
      %924 = vmatmul.mubr.bf16.gmra.mrb[0].mxu0 %v879
      %v925 = vpop.f32.mrb[0].mxu0
      %v926 = vadd.f32 %v720, %v925
      %v927 = vpop.f32.mrb[0].mxu0
      %v928 = vadd.f32 %v722, %v927
      %v929 = vpop.f32.mrb[0].mxu0
      %v930 = vadd.f32 %v724, %v929
      %v931 = vpop.f32.mrb[0].mxu0
      %v932 = vadd.f32 %v726, %v931
      %933 = vdwg.mxu0
      %934 = vmatprep.subr.bf16.mxu0 0
      %935 = vmatpush1.bf16.msra.mxu0 %v842
      %936 = vmatprep.subr.bf16.mxu0 0
      %937 = vmatpush1.bf16.msra.mxu0 %v845
      %938 = vmatprep.subr.bf16.mxu0 0
      %939 = vmatpush1.bf16.msra.mxu0 %v848
      %940 = vmatprep.subr.bf16.mxu0 0
      %941 = vmatpush1.bf16.msra.mxu0 %v851
      %942 = vmatprep.subr.bf16.mxu0 0
      %943 = vmatpush1.bf16.msra.mxu0 %v854
      %944 = vmatprep.subr.bf16.mxu0 0
      %945 = vmatpush1.bf16.msra.mxu0 %v857
      %946 = vmatprep.subr.bf16.mxu0 0
      %947 = vmatpush1.bf16.msra.mxu0 0
      %948 = vmatprep.subr.bf16.mxu0 0
      %949 = vmatpush1.bf16.msra.mxu0 0
      %950 = vmatprep.subr.bf16.mxu0 0
      %951 = vmatpush1.bf16.msra.mxu0 0
      %952 = vmatprep.subr.bf16.mxu0 0
      %953 = vmatpush1.bf16.msra.mxu0 0
      %954 = vmatprep.subr.bf16.mxu0 0
      %955 = vmatpush1.bf16.msra.mxu0 0
      %956 = vmatprep.subr.bf16.mxu0 0
      %957 = vmatpush1.bf16.msra.mxu0 0
      %958 = vmatprep.subr.bf16.mxu0 0
      %959 = vmatpush1.bf16.msra.mxu0 0
      %960 = vmatprep.subr.bf16.mxu0 0
      %961 = vmatpush1.bf16.msra.mxu0 0
      %962 = vmatprep.subr.bf16.mxu0 0
      %963 = vmatpush1.bf16.msra.mxu0 0
      %964 = vmatprep.subr.bf16.mxu0 0
      %965 = vmatpush1.bf16.msra.mxu0 0
      %966 = vmatprep.mubr.bf16.mxu0 0
      %967 = vmatmul.mubr.bf16.gmra.mrb[0].mxu0 %v876
      %v968 = vpop.f32.mrb[0].mxu0
      %v969 = vadd.f32 %v763, %v968
      %v970 = vpop.f32.mrb[0].mxu0
      %v971 = vpop.f32.mrb[0].mxu0
      %v972 = vadd.f32 %v766, %v971
      %v973 = vpop.f32.mrb[0].mxu0
      %974 = vmatprep.mubr.bf16.mxu0 0
      %975 = vmatmul.mubr.bf16.gmra.mrb[0].mxu0 %v879
      %v976 = vpop.f32.mrb[0].mxu0
      %v977 = vadd.f32 %v771, %v976
      %v978 = vpop.f32.mrb[0].mxu0
      %v979 = vpop.f32.mrb[0].mxu0
      %v980 = vadd.f32 %v774, %v979
      %v981 = vpop.f32.mrb[0].mxu0
      %982 = vdwg.mxu0
      %v983 = vld [vmem:[%s487] sm:$0xe]
      %s984 = scalar_lea.vmem %s1, 288
      %v985 = vld [vmem:[%s984] sm:$0xff]
      %v986 = vld [vmem:[%s984 + $0x8] sm:$0xf]
      %v987 = vld [vmem:[%s984 + $0xc] sm:$0xff]
      %v988 = vld [vmem:[%s984 + $0x14] sm:$0xf]
      %v989 = vld [vmem:[%s984 + $0x18] sm:$0xff]
      %v990 = vld [vmem:[%s984 + $0x20] sm:$0xf]
      %v991 = vld [vmem:[%s984 + $0x24] sm:$0xff]
      %v992 = vld [vmem:[%s984 + $0x2c] sm:$0xf]
      %v993 = vld [vmem:[%s984 + $0x30] sm:$0xff]
      %v994 = vld [vmem:[%s984 + $0x38] sm:$0xf]
      %v995 = vld [vmem:[%s984 + $0x3c] sm:$0xff]
      %v996 = vld [vmem:[%s984 + $0x44] sm:$0xf]
      %v997 = vld [vmem:[%s984 + $0x48] sm:$0xff]
      %v998 = vld [vmem:[%s984 + $0x50] sm:$0xf]
      %v999 = vld [vmem:[%s984 + $0x54] sm:$0xff]
      %v1000 = vld [vmem:[%s984 + $0x5c] sm:$0xf]
      %v1001 = vld [vmem:[%s984 + $0x60] sm:$0xff]
      %v1002 = vld [vmem:[%s984 + $0x68] sm:$0xf]
      %v1003 = vld [vmem:[%s984 + $0x6c] sm:$0xff]
      %v1004 = vld [vmem:[%s984 + $0x74] sm:$0xf]
      %v1005 = vld [vmem:[%s984 + $0x78] sm:$0xff]
      %v1006 = vld [vmem:[%s984 + $0x80] sm:$0xf]
      %v1007 = vld [vmem:[%s984 + $0x84] sm:$0xff]
      %v1008 = vld [vmem:[%s984 + $0x8c] sm:$0xf]
      %v1010 = vunpack.c.l.b16 %v983
      %v1011 = vpack.c.b16 %v551, %v1010
      %vm1012 = vcmask 1046528
      %v1013 = vrot.slane %v1011, 1
      %v1014 = vrot.slane %v555, 1
      %v1015 = vsel %vm1012, %v1013, %v1014
      %v1040 = vunpack.c.l.b16 %v985
      %v1041 = vunpack.c.h.b16 %v985
      %v1042 = vunpack.c.l.b16 %v986
      %v1043 = vunpack.c.l.b16 %v987
      %v1044 = vunpack.c.h.b16 %v987
      %v1045 = vunpack.c.l.b16 %v988
      %v1046 = vunpack.c.l.b16 %v989
      %v1047 = vunpack.c.h.b16 %v989
      %v1048 = vunpack.c.l.b16 %v990
      %v1049 = vunpack.c.l.b16 %v991
      %v1050 = vunpack.c.h.b16 %v991
      %v1051 = vunpack.c.l.b16 %v992
      %v1052 = vunpack.c.l.b16 %v993
      %v1053 = vunpack.c.h.b16 %v993
      %v1054 = vunpack.c.l.b16 %v994
      %v1055 = vunpack.c.l.b16 %v995
      %v1056 = vunpack.c.h.b16 %v995
      %v1057 = vunpack.c.l.b16 %v996
      %v1058 = vunpack.c.l.b16 %v997
      %v1059 = vunpack.c.h.b16 %v997
      %v1060 = vunpack.c.l.b16 %v998
      %v1061 = vunpack.c.l.b16 %v999
      %v1062 = vunpack.c.h.b16 %v999
      %v1063 = vunpack.c.l.b16 %v1000
      %v1064 = vunpack.c.l.b16 %v1001
      %v1065 = vunpack.c.h.b16 %v1001
      %v1066 = vunpack.c.l.b16 %v1002
      %v1067 = vunpack.c.l.b16 %v1003
      %v1068 = vunpack.c.h.b16 %v1003
      %v1069 = vunpack.c.l.b16 %v1004
      %v1070 = vunpack.c.l.b16 %v1005
      %v1071 = vunpack.c.h.b16 %v1005
      %v1072 = vunpack.c.l.b16 %v1006
      %v1073 = vunpack.c.l.b16 %v1007
      %v1074 = vunpack.c.h.b16 %v1007
      %v1075 = vunpack.c.l.b16 %v1008
      %v1076 = vpack.c.b16 %v1043, %v1040
      %v1077 = vpack.c.b16 %v1044, %v1041
      %v1078 = vpack.c.b16 %v1045, %v1042
      %v1079 = vpack.c.b16 %v1049, %v1046
      %v1080 = vpack.c.b16 %v1050, %v1047
      %v1081 = vpack.c.b16 %v1051, %v1048
      %v1082 = vpack.c.b16 %v1055, %v1052
      %v1083 = vpack.c.b16 %v1056, %v1053
      %v1084 = vpack.c.b16 %v1057, %v1054
      %v1085 = vpack.c.b16 %v1061, %v1058
      %v1086 = vpack.c.b16 %v1062, %v1059
      %v1087 = vpack.c.b16 %v1063, %v1060
      %v1088 = vpack.c.b16 %v1067, %v1064
      %v1089 = vpack.c.b16 %v1068, %v1065
      %v1090 = vpack.c.b16 %v1069, %v1066
      %v1091 = vpack.c.b16 %v1073, %v1070
      %v1092 = vpack.c.b16 %v1074, %v1071
      %v1093 = vpack.c.b16 %v1075, %v1072
      %v1113 = vsel %vm668, %v1015, 0
      %v1116 = vsel %vm668, %v1014, 0
      %1118 = vmatprep.subr.bf16.mxu0 %v1077
      %1119 = vmatpush1.bf16.msra.mxu0 %v1076
      %1120 = vmatprep.subr.bf16.mxu0 %v1080
      %1121 = vmatpush1.bf16.msra.mxu0 %v1079
      %1122 = vmatprep.subr.bf16.mxu0 %v1083
      %1123 = vmatpush1.bf16.msra.mxu0 %v1082
      %1124 = vmatprep.subr.bf16.mxu0 %v1086
      %1125 = vmatpush1.bf16.msra.mxu0 %v1085
      %1126 = vmatprep.subr.bf16.mxu0 %v1089
      %1127 = vmatpush1.bf16.msra.mxu0 %v1088
      %1128 = vmatprep.subr.bf16.mxu0 %v1092
      %1129 = vmatpush1.bf16.msra.mxu0 %v1091
      %1130 = vmatprep.subr.bf16.mxu0 0
      %1131 = vmatpush1.bf16.msra.mxu0 0
      %1132 = vmatprep.subr.bf16.mxu0 0
      %1133 = vmatpush1.bf16.msra.mxu0 0
      %1134 = vmatprep.subr.bf16.mxu0 0
      %1135 = vmatpush1.bf16.msra.mxu0 0
      %1136 = vmatprep.subr.bf16.mxu0 0
      %1137 = vmatpush1.bf16.msra.mxu0 0
      %1138 = vmatprep.subr.bf16.mxu0 0
      %1139 = vmatpush1.bf16.msra.mxu0 0
      %1140 = vmatprep.subr.bf16.mxu0 0
      %1141 = vmatpush1.bf16.msra.mxu0 0
      %1142 = vmatprep.subr.bf16.mxu0 0
      %1143 = vmatpush1.bf16.msra.mxu0 0
      %1144 = vmatprep.subr.bf16.mxu0 0
      %1145 = vmatpush1.bf16.msra.mxu0 0
      %1146 = vmatprep.subr.bf16.mxu0 0
      %1147 = vmatpush1.bf16.msra.mxu0 0
      %1148 = vmatprep.subr.bf16.mxu0 0
      %1149 = vmatpush1.bf16.msra.mxu0 0
      %1150 = vmatprep.mubr.bf16.mxu0 0
      %1151 = vmatmul.mubr.bf16.gmra.mrb[0].mxu0 %v1113
      %v1152 = vpop.f32.mrb[0].mxu0
      %v1153 = vadd.f32 0.0, %v1152
      %v1154 = vpop.f32.mrb[0].mxu0
      %v1155 = vadd.f32 0.0, %v1154
      %v1156 = vpop.f32.mrb[0].mxu0
      %v1157 = vadd.f32 0.0, %v1156
      %v1158 = vpop.f32.mrb[0].mxu0
      %v1159 = vadd.f32 0.0, %v1158
      %1160 = vmatprep.mubr.bf16.mxu0 0
      %1161 = vmatmul.mubr.bf16.gmra.mrb[0].mxu0 %v1116
      %v1162 = vpop.f32.mrb[0].mxu0
      %v1163 = vadd.f32 0.0, %v1162
      %v1164 = vpop.f32.mrb[0].mxu0
      %v1165 = vadd.f32 0.0, %v1164
      %v1166 = vpop.f32.mrb[0].mxu0
      %v1167 = vadd.f32 0.0, %v1166
      %v1168 = vpop.f32.mrb[0].mxu0
      %v1169 = vadd.f32 0.0, %v1168
      %1170 = vdwg.mxu0
      %1171 = vmatprep.subr.bf16.mxu0 0
      %1172 = vmatpush1.bf16.msra.mxu0 %v1078
      %1173 = vmatprep.subr.bf16.mxu0 0
      %1174 = vmatpush1.bf16.msra.mxu0 %v1081
      %1175 = vmatprep.subr.bf16.mxu0 0
      %1176 = vmatpush1.bf16.msra.mxu0 %v1084
      %1177 = vmatprep.subr.bf16.mxu0 0
      %1178 = vmatpush1.bf16.msra.mxu0 %v1087
      %1179 = vmatprep.subr.bf16.mxu0 0
      %1180 = vmatpush1.bf16.msra.mxu0 %v1090
      %1181 = vmatprep.subr.bf16.mxu0 0
      %1182 = vmatpush1.bf16.msra.mxu0 %v1093
      %1183 = vmatprep.subr.bf16.mxu0 0
      %1184 = vmatpush1.bf16.msra.mxu0 0
      %1185 = vmatprep.subr.bf16.mxu0 0
      %1186 = vmatpush1.bf16.msra.mxu0 0
      %1187 = vmatprep.subr.bf16.mxu0 0
      %1188 = vmatpush1.bf16.msra.mxu0 0
      %1189 = vmatprep.subr.bf16.mxu0 0
      %1190 = vmatpush1.bf16.msra.mxu0 0
      %1191 = vmatprep.subr.bf16.mxu0 0
      %1192 = vmatpush1.bf16.msra.mxu0 0
      %1193 = vmatprep.subr.bf16.mxu0 0
      %1194 = vmatpush1.bf16.msra.mxu0 0
      %1195 = vmatprep.subr.bf16.mxu0 0
      %1196 = vmatpush1.bf16.msra.mxu0 0
      %1197 = vmatprep.subr.bf16.mxu0 0
      %1198 = vmatpush1.bf16.msra.mxu0 0
      %1199 = vmatprep.subr.bf16.mxu0 0
      %1200 = vmatpush1.bf16.msra.mxu0 0
      %1201 = vmatprep.subr.bf16.mxu0 0
      %1202 = vmatpush1.bf16.msra.mxu0 0
      %1203 = vmatprep.mubr.bf16.mxu0 0
      %1204 = vmatmul.mubr.bf16.gmra.mrb[0].mxu0 %v1113
      %v1205 = vpop.f32.mrb[0].mxu0
      %v1206 = vadd.f32 0.0, %v1205
      %v1207 = vpop.f32.mrb[0].mxu0
      %v1208 = vpop.f32.mrb[0].mxu0
      %v1209 = vadd.f32 0.0, %v1208
      %v1210 = vpop.f32.mrb[0].mxu0
      %1211 = vmatprep.mubr.bf16.mxu0 0
      %1212 = vmatmul.mubr.bf16.gmra.mrb[0].mxu0 %v1116
      %v1213 = vpop.f32.mrb[0].mxu0
      %v1214 = vadd.f32 0.0, %v1213
      %v1215 = vpop.f32.mrb[0].mxu0
      %v1216 = vpop.f32.mrb[0].mxu0
      %v1217 = vadd.f32 0.0, %v1216
      %v1218 = vpop.f32.mrb[0].mxu0
      %1219 = vdwg.mxu0
      %v1220 = vadd.f32 %v916, %v1153
      %v1221 = vadd.f32 %v918, %v1155
      %v1222 = vadd.f32 %v969, %v1206
      %v1223 = vadd.f32 %v920, %v1157
      %v1224 = vadd.f32 %v922, %v1159
      %v1225 = vadd.f32 %v972, %v1209
      %v1226 = vadd.f32 %v926, %v1163
      %v1227 = vadd.f32 %v928, %v1165
      %v1228 = vadd.f32 %v977, %v1214
      %v1229 = vadd.f32 %v930, %v1167
      %v1230 = vadd.f32 %v932, %v1169
      %v1231 = vadd.f32 %v980, %v1217
      %v1232 = vld [vmem:[%s487 + $0xc] sm:$0xf]
      %s1233 = scalar_lea.vmem %s1, 432
      %v1234 = vld [vmem:[%s1233] sm:$0xff]
      %v1235 = vld [vmem:[%s1233 + $0x8] sm:$0xf]
      %v1236 = vld [vmem:[%s1233 + $0xc] sm:$0xff]
      %v1237 = vld [vmem:[%s1233 + $0x14] sm:$0xf]
      %v1238 = vld [vmem:[%s1233 + $0x18] sm:$0xff]
      %v1239 = vld [vmem:[%s1233 + $0x20] sm:$0xf]
      %v1240 = vld [vmem:[%s1233 + $0x24] sm:$0xff]
      %v1241 = vld [vmem:[%s1233 + $0x2c] sm:$0xf]
      %v1242 = vld [vmem:[%s1233 + $0x30] sm:$0xff]
      %v1243 = vld [vmem:[%s1233 + $0x38] sm:$0xf]
      %v1244 = vld [vmem:[%s1233 + $0x3c] sm:$0xff]
      %v1245 = vld [vmem:[%s1233 + $0x44] sm:$0xf]
      %v1246 = vld [vmem:[%s1233 + $0x48] sm:$0xff]
      %v1247 = vld [vmem:[%s1233 + $0x50] sm:$0xf]
      %v1248 = vld [vmem:[%s1233 + $0x54] sm:$0xff]
      %v1249 = vld [vmem:[%s1233 + $0x5c] sm:$0xf]
      %v1250 = vld [vmem:[%s1233 + $0x60] sm:$0xff]
      %v1251 = vld [vmem:[%s1233 + $0x68] sm:$0xf]
      %v1252 = vld [vmem:[%s1233 + $0x6c] sm:$0xff]
      %v1253 = vld [vmem:[%s1233 + $0x74] sm:$0xf]
      %v1254 = vld [vmem:[%s1233 + $0x78] sm:$0xff]
      %v1255 = vld [vmem:[%s1233 + $0x80] sm:$0xf]
      %v1256 = vld [vmem:[%s1233 + $0x84] sm:$0xff]
      %v1257 = vld [vmem:[%s1233 + $0x8c] sm:$0xf]
      %v1259 = vunpack.c.l.b16 %v1232
      %v1260 = vpack.c.b16 %v1259, %v552
      %vm1261 = vsmask.f32 6400
      %v1263 = vshrl.u32 %v1011, 16
      %v1265 = vrot.slane %v1263, 1
      %v1266 = vshll.u32 %v1011, 16
      %v1268 = vrot.slane %v1266, 2
      %v1269 = vor.u32 %v1265, %v1268
      %v1271 = vshrl.u32 %v1260, 16
      %v1273 = vrot.slane %v1271, 1
      %v1274 = vshll.u32 %v1260, 16
      %v1276 = vrot.slane %v1274, 2
      %v1277 = vor.u32 %v1273, %v1276
      %v1278 = vsel %vm1261, %v1269, %v1277
      %v1303 = vunpack.c.l.b16 %v1234
      %v1304 = vunpack.c.h.b16 %v1234
      %v1305 = vunpack.c.l.b16 %v1235
      %v1306 = vunpack.c.l.b16 %v1236
      %v1307 = vunpack.c.h.b16 %v1236
      %v1308 = vunpack.c.l.b16 %v1237
      %v1309 = vunpack.c.l.b16 %v1238
      %v1310 = vunpack.c.h.b16 %v1238
      %v1311 = vunpack.c.l.b16 %v1239
      %v1312 = vunpack.c.l.b16 %v1240
      %v1313 = vunpack.c.h.b16 %v1240
      %v1314 = vunpack.c.l.b16 %v1241
      %v1315 = vunpack.c.l.b16 %v1242
      %v1316 = vunpack.c.h.b16 %v1242
      %v1317 = vunpack.c.l.b16 %v1243
      %v1318 = vunpack.c.l.b16 %v1244
      %v1319 = vunpack.c.h.b16 %v1244
      %v1320 = vunpack.c.l.b16 %v1245
      %v1321 = vunpack.c.l.b16 %v1246
      %v1322 = vunpack.c.h.b16 %v1246
      %v1323 = vunpack.c.l.b16 %v1247
      %v1324 = vunpack.c.l.b16 %v1248
      %v1325 = vunpack.c.h.b16 %v1248
      %v1326 = vunpack.c.l.b16 %v1249
      %v1327 = vunpack.c.l.b16 %v1250
      %v1328 = vunpack.c.h.b16 %v1250
      %v1329 = vunpack.c.l.b16 %v1251
      %v1330 = vunpack.c.l.b16 %v1252
      %v1331 = vunpack.c.h.b16 %v1252
      %v1332 = vunpack.c.l.b16 %v1253
      %v1333 = vunpack.c.l.b16 %v1254
      %v1334 = vunpack.c.h.b16 %v1254
      %v1335 = vunpack.c.l.b16 %v1255
      %v1336 = vunpack.c.l.b16 %v1256
      %v1337 = vunpack.c.h.b16 %v1256
      %v1338 = vunpack.c.l.b16 %v1257
      %v1339 = vpack.c.b16 %v1306, %v1303
      %v1340 = vpack.c.b16 %v1307, %v1304
      %v1341 = vpack.c.b16 %v1308, %v1305
      %v1342 = vpack.c.b16 %v1312, %v1309
      %v1343 = vpack.c.b16 %v1313, %v1310
      %v1344 = vpack.c.b16 %v1314, %v1311
      %v1345 = vpack.c.b16 %v1318, %v1315
      %v1346 = vpack.c.b16 %v1319, %v1316
      %v1347 = vpack.c.b16 %v1320, %v1317
      %v1348 = vpack.c.b16 %v1324, %v1321
      %v1349 = vpack.c.b16 %v1325, %v1322
      %v1350 = vpack.c.b16 %v1326, %v1323
      %v1351 = vpack.c.b16 %v1330, %v1327
      %v1352 = vpack.c.b16 %v1331, %v1328
      %v1353 = vpack.c.b16 %v1332, %v1329
      %v1354 = vpack.c.b16 %v1336, %v1333
      %v1355 = vpack.c.b16 %v1337, %v1334
      %v1356 = vpack.c.b16 %v1338, %v1335
      %v1376 = vsel %vm668, %v1278, 0
      %v1379 = vsel %vm668, %v1277, 0
      %1381 = vmatprep.subr.bf16.mxu0 %v1340
      %1382 = vmatpush1.bf16.msra.mxu0 %v1339
      %1383 = vmatprep.subr.bf16.mxu0 %v1343
      %1384 = vmatpush1.bf16.msra.mxu0 %v1342
      %1385 = vmatprep.subr.bf16.mxu0 %v1346
      %1386 = vmatpush1.bf16.msra.mxu0 %v1345
      %1387 = vmatprep.subr.bf16.mxu0 %v1349
      %1388 = vmatpush1.bf16.msra.mxu0 %v1348
      %1389 = vmatprep.subr.bf16.mxu0 %v1352
      %1390 = vmatpush1.bf16.msra.mxu0 %v1351
      %1391 = vmatprep.subr.bf16.mxu0 %v1355
      %1392 = vmatpush1.bf16.msra.mxu0 %v1354
      %1393 = vmatprep.subr.bf16.mxu0 0
      %1394 = vmatpush1.bf16.msra.mxu0 0
      %1395 = vmatprep.subr.bf16.mxu0 0
      %1396 = vmatpush1.bf16.msra.mxu0 0
      %1397 = vmatprep.subr.bf16.mxu0 0
      %1398 = vmatpush1.bf16.msra.mxu0 0
      %1399 = vmatprep.subr.bf16.mxu0 0
      %1400 = vmatpush1.bf16.msra.mxu0 0
      %1401 = vmatprep.subr.bf16.mxu0 0
      %1402 = vmatpush1.bf16.msra.mxu0 0
      %1403 = vmatprep.subr.bf16.mxu0 0
      %1404 = vmatpush1.bf16.msra.mxu0 0
      %1405 = vmatprep.subr.bf16.mxu0 0
      %1406 = vmatpush1.bf16.msra.mxu0 0
      %1407 = vmatprep.subr.bf16.mxu0 0
      %1408 = vmatpush1.bf16.msra.mxu0 0
      %1409 = vmatprep.subr.bf16.mxu0 0
      %1410 = vmatpush1.bf16.msra.mxu0 0
      %1411 = vmatprep.subr.bf16.mxu0 0
      %1412 = vmatpush1.bf16.msra.mxu0 0
      %1413 = vmatprep.mubr.bf16.mxu0 0
      %1414 = vmatmul.mubr.bf16.gmra.mrb[0].mxu0 %v1376
      %v1415 = vpop.f32.mrb[0].mxu0
      %v1416 = vadd.f32 0.0, %v1415
      %v1417 = vpop.f32.mrb[0].mxu0
      %v1418 = vadd.f32 0.0, %v1417
      %v1419 = vpop.f32.mrb[0].mxu0
      %v1420 = vadd.f32 0.0, %v1419
      %v1421 = vpop.f32.mrb[0].mxu0
      %v1422 = vadd.f32 0.0, %v1421
      %1423 = vmatprep.mubr.bf16.mxu0 0
      %1424 = vmatmul.mubr.bf16.gmra.mrb[0].mxu0 %v1379
      %v1425 = vpop.f32.mrb[0].mxu0
      %v1426 = vadd.f32 0.0, %v1425
      %v1427 = vpop.f32.mrb[0].mxu0
      %v1428 = vadd.f32 0.0, %v1427
      %v1429 = vpop.f32.mrb[0].mxu0
      %v1430 = vadd.f32 0.0, %v1429
      %v1431 = vpop.f32.mrb[0].mxu0
      %v1432 = vadd.f32 0.0, %v1431
      %1433 = vdwg.mxu0
      %1434 = vmatprep.subr.bf16.mxu0 0
      %1435 = vmatpush1.bf16.msra.mxu0 %v1341
      %1436 = vmatprep.subr.bf16.mxu0 0
      %1437 = vmatpush1.bf16.msra.mxu0 %v1344
      %1438 = vmatprep.subr.bf16.mxu0 0
      %1439 = vmatpush1.bf16.msra.mxu0 %v1347
      %1440 = vmatprep.subr.bf16.mxu0 0
      %1441 = vmatpush1.bf16.msra.mxu0 %v1350
      %1442 = vmatprep.subr.bf16.mxu0 0
      %1443 = vmatpush1.bf16.msra.mxu0 %v1353
      %1444 = vmatprep.subr.bf16.mxu0 0
      %1445 = vmatpush1.bf16.msra.mxu0 %v1356
      %1446 = vmatprep.subr.bf16.mxu0 0
      %1447 = vmatpush1.bf16.msra.mxu0 0
      %1448 = vmatprep.subr.bf16.mxu0 0
      %1449 = vmatpush1.bf16.msra.mxu0 0
      %1450 = vmatprep.subr.bf16.mxu0 0
      %1451 = vmatpush1.bf16.msra.mxu0 0
      %1452 = vmatprep.subr.bf16.mxu0 0
      %1453 = vmatpush1.bf16.msra.mxu0 0
      %1454 = vmatprep.subr.bf16.mxu0 0
      %1455 = vmatpush1.bf16.msra.mxu0 0
      %1456 = vmatprep.subr.bf16.mxu0 0
      %1457 = vmatpush1.bf16.msra.mxu0 0
      %1458 = vmatprep.subr.bf16.mxu0 0
      %1459 = vmatpush1.bf16.msra.mxu0 0
      %1460 = vmatprep.subr.bf16.mxu0 0
      %1461 = vmatpush1.bf16.msra.mxu0 0
      %1462 = vmatprep.subr.bf16.mxu0 0
      %1463 = vmatpush1.bf16.msra.mxu0 0
      %1464 = vmatprep.subr.bf16.mxu0 0
      %1465 = vmatpush1.bf16.msra.mxu0 0
      %1466 = vmatprep.mubr.bf16.mxu0 0
      %1467 = vmatmul.mubr.bf16.gmra.mrb[0].mxu0 %v1376
      %v1468 = vpop.f32.mrb[0].mxu0
      %v1469 = vadd.f32 0.0, %v1468
      %v1470 = vpop.f32.mrb[0].mxu0
      %v1471 = vpop.f32.mrb[0].mxu0
      %v1472 = vadd.f32 0.0, %v1471
      %v1473 = vpop.f32.mrb[0].mxu0
      %1474 = vmatprep.mubr.bf16.mxu0 0
      %1475 = vmatmul.mubr.bf16.gmra.mrb[0].mxu0 %v1379
      %v1476 = vpop.f32.mrb[0].mxu0
      %v1477 = vadd.f32 0.0, %v1476
      %v1478 = vpop.f32.mrb[0].mxu0
      %v1479 = vpop.f32.mrb[0].mxu0
      %v1480 = vadd.f32 0.0, %v1479
      %v1481 = vpop.f32.mrb[0].mxu0
      %1482 = vdwg.mxu0
      %v1483 = vadd.f32 %v1220, %v1416
      %v1484 = vadd.f32 %v1221, %v1418
      %v1485 = vadd.f32 %v1222, %v1469
      %v1486 = vadd.f32 %v1223, %v1420
      %v1487 = vadd.f32 %v1224, %v1422
      %v1488 = vadd.f32 %v1225, %v1472
      %v1489 = vadd.f32 %v1226, %v1426
      %v1490 = vadd.f32 %v1227, %v1428
      %v1491 = vadd.f32 %v1228, %v1477
      %v1492 = vadd.f32 %v1229, %v1430
      %v1493 = vadd.f32 %v1230, %v1432
      %v1494 = vadd.f32 %v1231, %v1480
      %v1495 = vld [vmem:[%s487] sm:$0xc]
      %s1496 = scalar_lea.vmem %s1, 576
      %v1497 = vld [vmem:[%s1496] sm:$0xff]
      %v1498 = vld [vmem:[%s1496 + $0x8] sm:$0xf]
      %v1499 = vld [vmem:[%s1496 + $0xc] sm:$0xff]
      %v1500 = vld [vmem:[%s1496 + $0x14] sm:$0xf]
      %v1501 = vld [vmem:[%s1496 + $0x18] sm:$0xff]
      %v1502 = vld [vmem:[%s1496 + $0x20] sm:$0xf]
      %v1503 = vld [vmem:[%s1496 + $0x24] sm:$0xff]
      %v1504 = vld [vmem:[%s1496 + $0x2c] sm:$0xf]
      %v1505 = vld [vmem:[%s1496 + $0x30] sm:$0xff]
      %v1506 = vld [vmem:[%s1496 + $0x38] sm:$0xf]
      %v1507 = vld [vmem:[%s1496 + $0x3c] sm:$0xff]
      %v1508 = vld [vmem:[%s1496 + $0x44] sm:$0xf]
      %v1509 = vld [vmem:[%s1496 + $0x48] sm:$0xff]
      %v1510 = vld [vmem:[%s1496 + $0x50] sm:$0xf]
      %v1511 = vld [vmem:[%s1496 + $0x54] sm:$0xff]
      %v1512 = vld [vmem:[%s1496 + $0x5c] sm:$0xf]
      %v1513 = vld [vmem:[%s1496 + $0x60] sm:$0xff]
      %v1514 = vld [vmem:[%s1496 + $0x68] sm:$0xf]
      %v1515 = vld [vmem:[%s1496 + $0x6c] sm:$0xff]
      %v1516 = vld [vmem:[%s1496 + $0x74] sm:$0xf]
      %v1517 = vld [vmem:[%s1496 + $0x78] sm:$0xff]
      %v1518 = vld [vmem:[%s1496 + $0x80] sm:$0xf]
      %v1519 = vld [vmem:[%s1496 + $0x84] sm:$0xff]
      %v1520 = vld [vmem:[%s1496 + $0x8c] sm:$0xf]
      %v1522 = vunpack.c.l.b16 %v1495
      %v1523 = vpack.c.b16 %v551, %v1522
      %vm1524 = vcmask 1045504
      %v1525 = vrot.slane %v1523, 2
      %v1526 = vrot.slane %v1260, 2
      %v1527 = vsel %vm1524, %v1525, %v1526
      %v1552 = vunpack.c.l.b16 %v1497
      %v1553 = vunpack.c.h.b16 %v1497
      %v1554 = vunpack.c.l.b16 %v1498
      %v1555 = vunpack.c.l.b16 %v1499
      %v1556 = vunpack.c.h.b16 %v1499
      %v1557 = vunpack.c.l.b16 %v1500
      %v1558 = vunpack.c.l.b16 %v1501
      %v1559 = vunpack.c.h.b16 %v1501
      %v1560 = vunpack.c.l.b16 %v1502
      %v1561 = vunpack.c.l.b16 %v1503
      %v1562 = vunpack.c.h.b16 %v1503
      %v1563 = vunpack.c.l.b16 %v1504
      %v1564 = vunpack.c.l.b16 %v1505
      %v1565 = vunpack.c.h.b16 %v1505
      %v1566 = vunpack.c.l.b16 %v1506
      %v1567 = vunpack.c.l.b16 %v1507
      %v1568 = vunpack.c.h.b16 %v1507
      %v1569 = vunpack.c.l.b16 %v1508
      %v1570 = vunpack.c.l.b16 %v1509
      %v1571 = vunpack.c.h.b16 %v1509
      %v1572 = vunpack.c.l.b16 %v1510
      %v1573 = vunpack.c.l.b16 %v1511
      %v1574 = vunpack.c.h.b16 %v1511
      %v1575 = vunpack.c.l.b16 %v1512
      %v1576 = vunpack.c.l.b16 %v1513
      %v1577 = vunpack.c.h.b16 %v1513
      %v1578 = vunpack.c.l.b16 %v1514
      %v1579 = vunpack.c.l.b16 %v1515
      %v1580 = vunpack.c.h.b16 %v1515
      %v1581 = vunpack.c.l.b16 %v1516
      %v1582 = vunpack.c.l.b16 %v1517
      %v1583 = vunpack.c.h.b16 %v1517
      %v1584 = vunpack.c.l.b16 %v1518
      %v1585 = vunpack.c.l.b16 %v1519
      %v1586 = vunpack.c.h.b16 %v1519
      %v1587 = vunpack.c.l.b16 %v1520
      %v1588 = vpack.c.b16 %v1555, %v1552
      %v1589 = vpack.c.b16 %v1556, %v1553
      %v1590 = vpack.c.b16 %v1557, %v1554
      %v1591 = vpack.c.b16 %v1561, %v1558
      %v1592 = vpack.c.b16 %v1562, %v1559
      %v1593 = vpack.c.b16 %v1563, %v1560
      %v1594 = vpack.c.b16 %v1567, %v1564
      %v1595 = vpack.c.b16 %v1568, %v1565
      %v1596 = vpack.c.b16 %v1569, %v1566
      %v1597 = vpack.c.b16 %v1573, %v1570
      %v1598 = vpack.c.b16 %v1574, %v1571
      %v1599 = vpack.c.b16 %v1575, %v1572
      %v1600 = vpack.c.b16 %v1579, %v1576
      %v1601 = vpack.c.b16 %v1580, %v1577
      %v1602 = vpack.c.b16 %v1581, %v1578
      %v1603 = vpack.c.b16 %v1585, %v1582
      %v1604 = vpack.c.b16 %v1586, %v1583
      %v1605 = vpack.c.b16 %v1587, %v1584
      %v1625 = vsel %vm668, %v1527, 0
      %v1628 = vsel %vm668, %v1526, 0
      %1630 = vmatprep.subr.bf16.mxu0 %v1589
      %1631 = vmatpush1.bf16.msra.mxu0 %v1588
      %1632 = vmatprep.subr.bf16.mxu0 %v1592
      %1633 = vmatpush1.bf16.msra.mxu0 %v1591
      %1634 = vmatprep.subr.bf16.mxu0 %v1595
      %1635 = vmatpush1.bf16.msra.mxu0 %v1594
      %1636 = vmatprep.subr.bf16.mxu0 %v1598
      %1637 = vmatpush1.bf16.msra.mxu0 %v1597
      %1638 = vmatprep.subr.bf16.mxu0 %v1601
      %1639 = vmatpush1.bf16.msra.mxu0 %v1600
      %1640 = vmatprep.subr.bf16.mxu0 %v1604
      %1641 = vmatpush1.bf16.msra.mxu0 %v1603
      %1642 = vmatprep.subr.bf16.mxu0 0
      %1643 = vmatpush1.bf16.msra.mxu0 0
      %1644 = vmatprep.subr.bf16.mxu0 0
      %1645 = vmatpush1.bf16.msra.mxu0 0
      %1646 = vmatprep.subr.bf16.mxu0 0
      %1647 = vmatpush1.bf16.msra.mxu0 0
      %1648 = vmatprep.subr.bf16.mxu0 0
      %1649 = vmatpush1.bf16.msra.mxu0 0
      %1650 = vmatprep.subr.bf16.mxu0 0
      %1651 = vmatpush1.bf16.msra.mxu0 0
      %1652 = vmatprep.subr.bf16.mxu0 0
      %1653 = vmatpush1.bf16.msra.mxu0 0
      %1654 = vmatprep.subr.bf16.mxu0 0
      %1655 = vmatpush1.bf16.msra.mxu0 0
      %1656 = vmatprep.subr.bf16.mxu0 0
      %1657 = vmatpush1.bf16.msra.mxu0 0
      %1658 = vmatprep.subr.bf16.mxu0 0
      %1659 = vmatpush1.bf16.msra.mxu0 0
      %1660 = vmatprep.subr.bf16.mxu0 0
      %1661 = vmatpush1.bf16.msra.mxu0 0
      %1662 = vmatprep.mubr.bf16.mxu0 0
      %1663 = vmatmul.mubr.bf16.gmra.mrb[0].mxu0 %v1625
      %v1664 = vpop.f32.mrb[0].mxu0
      %v1665 = vadd.f32 0.0, %v1664
      %v1666 = vpop.f32.mrb[0].mxu0
      %v1667 = vadd.f32 0.0, %v1666
      %v1668 = vpop.f32.mrb[0].mxu0
      %v1669 = vadd.f32 0.0, %v1668
      %v1670 = vpop.f32.mrb[0].mxu0
      %v1671 = vadd.f32 0.0, %v1670
      %1672 = vmatprep.mubr.bf16.mxu0 0
      %1673 = vmatmul.mubr.bf16.gmra.mrb[0].mxu0 %v1628
      %v1674 = vpop.f32.mrb[0].mxu0
      %v1675 = vadd.f32 0.0, %v1674
      %v1676 = vpop.f32.mrb[0].mxu0
      %v1677 = vadd.f32 0.0, %v1676
      %v1678 = vpop.f32.mrb[0].mxu0
      %v1679 = vadd.f32 0.0, %v1678
      %v1680 = vpop.f32.mrb[0].mxu0
      %v1681 = vadd.f32 0.0, %v1680
      %1682 = vdwg.mxu0
      %1683 = vmatprep.subr.bf16.mxu0 0
      %1684 = vmatpush1.bf16.msra.mxu0 %v1590
      %1685 = vmatprep.subr.bf16.mxu0 0
      %1686 = vmatpush1.bf16.msra.mxu0 %v1593
      %1687 = vmatprep.subr.bf16.mxu0 0
      %1688 = vmatpush1.bf16.msra.mxu0 %v1596
      %1689 = vmatprep.subr.bf16.mxu0 0
      %1690 = vmatpush1.bf16.msra.mxu0 %v1599
      %1691 = vmatprep.subr.bf16.mxu0 0
      %1692 = vmatpush1.bf16.msra.mxu0 %v1602
      %1693 = vmatprep.subr.bf16.mxu0 0
      %1694 = vmatpush1.bf16.msra.mxu0 %v1605
      %1695 = vmatprep.subr.bf16.mxu0 0
      %1696 = vmatpush1.bf16.msra.mxu0 0
      %1697 = vmatprep.subr.bf16.mxu0 0
      %1698 = vmatpush1.bf16.msra.mxu0 0
      %1699 = vmatprep.subr.bf16.mxu0 0
      %1700 = vmatpush1.bf16.msra.mxu0 0
      %1701 = vmatprep.subr.bf16.mxu0 0
      %1702 = vmatpush1.bf16.msra.mxu0 0
      %1703 = vmatprep.subr.bf16.mxu0 0
      %1704 = vmatpush1.bf16.msra.mxu0 0
      %1705 = vmatprep.subr.bf16.mxu0 0
      %1706 = vmatpush1.bf16.msra.mxu0 0
      %1707 = vmatprep.subr.bf16.mxu0 0
      %1708 = vmatpush1.bf16.msra.mxu0 0
      %1709 = vmatprep.subr.bf16.mxu0 0
      %1710 = vmatpush1.bf16.msra.mxu0 0
      %1711 = vmatprep.subr.bf16.mxu0 0
      %1712 = vmatpush1.bf16.msra.mxu0 0
      %1713 = vmatprep.subr.bf16.mxu0 0
      %1714 = vmatpush1.bf16.msra.mxu0 0
      %1715 = vmatprep.mubr.bf16.mxu0 0
      %1716 = vmatmul.mubr.bf16.gmra.mrb[0].mxu0 %v1625
      %v1717 = vpop.f32.mrb[0].mxu0
      %v1718 = vadd.f32 0.0, %v1717
      %v1719 = vpop.f32.mrb[0].mxu0
      %v1720 = vpop.f32.mrb[0].mxu0
      %v1721 = vadd.f32 0.0, %v1720
      %v1722 = vpop.f32.mrb[0].mxu0
      %1723 = vmatprep.mubr.bf16.mxu0 0
      %1724 = vmatmul.mubr.bf16.gmra.mrb[0].mxu0 %v1628
      %v1725 = vpop.f32.mrb[0].mxu0
      %v1726 = vadd.f32 0.0, %v1725
      %v1727 = vpop.f32.mrb[0].mxu0
      %v1728 = vpop.f32.mrb[0].mxu0
      %v1729 = vadd.f32 0.0, %v1728
      %v1730 = vpop.f32.mrb[0].mxu0
      %1731 = vdwg.mxu0
      %v1732 = vadd.f32 %v1483, %v1665
      %v1733 = vadd.f32 %v1484, %v1667
      %v1734 = vadd.f32 %v1485, %v1718
      %v1735 = vadd.f32 %v1486, %v1669
      %v1736 = vadd.f32 %v1487, %v1671
      %v1737 = vadd.f32 %v1488, %v1721
      %v1738 = vadd.f32 %v1489, %v1675
      %v1739 = vadd.f32 %v1490, %v1677
      %v1740 = vadd.f32 %v1491, %v1726
      %v1741 = vadd.f32 %v1492, %v1679
      %v1742 = vadd.f32 %v1493, %v1681
      %v1743 = vadd.f32 %v1494, %v1729
      %v1744 = vld [vmem:[%s2] sm:$0x7]
      %v1746 = vlaneseq
      %v1747 = vshrl.u32 %v1746, 7
      %v1748 = vsub.s32 0, %v1747
      %v1749 = vrot.slane %v1744, %v1748
      %v1750 = vlaneseq
      %v1751 = vshrl.u32 %v1750, 7
      %v1752 = vsub.s32 1, %v1751
      %v1753 = vrot.slane %v1744, %v1752
      %v1754 = vlaneseq
      %v1755 = vshrl.u32 %v1754, 7
      %v1756 = vsub.s32 2, %v1755
      %v1757 = vrot.slane %v1744, %v1756
      %v1761 = vadd.f32 %v1732, %v1749
      %v1762 = vadd.f32 %v1733, %v1753
      %v1763 = vadd.f32 %v1734, %v1757
      %v1764 = vadd.f32 %v1735, %v1749
      %v1765 = vadd.f32 %v1736, %v1753
      %v1766 = vadd.f32 %v1737, %v1757
      %v1767 = vadd.f32 %v1738, %v1749
      %v1768 = vadd.f32 %v1739, %v1753
      %v1769 = vadd.f32 %v1740, %v1757
      %v1770 = vadd.f32 %v1741, %v1749
      %v1771 = vadd.f32 %v1742, %v1753
      %v1772 = vadd.f32 %v1743, %v1757
      %v1773 = vmax.f32 %v1761, 0.0
      %v1774 = vmax.f32 %v1762, 0.0
      %v1775 = vmax.f32 %v1763, 0.0
      %v1776 = vmax.f32 %v1764, 0.0
      %v1777 = vmax.f32 %v1765, 0.0
      %v1778 = vmax.f32 %v1766, 0.0
      %v1779 = vmax.f32 %v1767, 0.0
      %v1780 = vmax.f32 %v1768, 0.0
      %v1781 = vmax.f32 %v1769, 0.0
      %v1782 = vmax.f32 %v1770, 0.0
      %v1783 = vmax.f32 %v1771, 0.0
      %v1784 = vmax.f32 %v1772, 0.0
      %v1785 = vpack.c.bf16 %v1776, %v1773
      %v1786 = vpack.c.bf16 %v1777, %v1774
      %v1787 = vpack.c.bf16 %v1778, %v1775
      %v1788 = vpack.c.bf16 %v1782, %v1779
      %v1789 = vpack.c.bf16 %v1783, %v1780
      %v1790 = vpack.c.bf16 %v1784, %v1781
      %v1791 = vld [vmem:[%s3] sm:$0xf]
      %v1792 = vld [vmem:[%s3 + $0x4] sm:$0x7]
      %v1795 = vunpack.c.l.b16 %v1791
      %v1796 = vunpack.c.l.b16 %v1792
      %v1797 = vpack.c.b16 %v1796, %v1795
      %vm1798 = vcmask 228352
      %v1800 = vsel %vm1798, %v1797, 0
      %vm1802 = vcmask 1045504
      %v1804 = vsel %vm1802, %v1788, 0
      %v1807 = vsel %vm1802, %v1789, 0
      %v1810 = vsel %vm1802, %v1790, 0
      %1812 = vmatprep.subr.bf16.mxu0 %v1786
      %1813 = vmatpush1.bf16.msra.mxu0 %v1785
      %1814 = vmatprep.subr.bf16.mxu0 %v1807
      %1815 = vmatpush1.bf16.msra.mxu0 %v1804
      %1816 = vmatprep.subr.bf16.mxu0 0
      %1817 = vmatpush1.bf16.msra.mxu0 0
      %1818 = vmatprep.subr.bf16.mxu0 0
      %1819 = vmatpush1.bf16.msra.mxu0 0
      %1820 = vmatprep.subr.bf16.mxu0 0
      %1821 = vmatpush1.bf16.msra.mxu0 0
      %1822 = vmatprep.subr.bf16.mxu0 0
      %1823 = vmatpush1.bf16.msra.mxu0 0
      %1824 = vmatprep.subr.bf16.mxu0 0
      %1825 = vmatpush1.bf16.msra.mxu0 0
      %1826 = vmatprep.subr.bf16.mxu0 0
      %1827 = vmatpush1.bf16.msra.mxu0 0
      %1828 = vmatprep.subr.bf16.mxu0 0
      %1829 = vmatpush1.bf16.msra.mxu0 0
      %1830 = vmatprep.subr.bf16.mxu0 0
      %1831 = vmatpush1.bf16.msra.mxu0 0
      %1832 = vmatprep.subr.bf16.mxu0 0
      %1833 = vmatpush1.bf16.msra.mxu0 0
      %1834 = vmatprep.subr.bf16.mxu0 0
      %1835 = vmatpush1.bf16.msra.mxu0 0
      %1836 = vmatprep.subr.bf16.mxu0 0
      %1837 = vmatpush1.bf16.msra.mxu0 0
      %1838 = vmatprep.subr.bf16.mxu0 0
      %1839 = vmatpush1.bf16.msra.mxu0 0
      %1840 = vmatprep.subr.bf16.mxu0 0
      %1841 = vmatpush1.bf16.msra.mxu0 0
      %1842 = vmatprep.subr.bf16.mxu0 0
      %1843 = vmatpush1.bf16.msra.mxu0 0
      %1844 = vmatprep.mubr.bf16.mxu0 0
      %1845 = vmatmul.mubr.bf16.gmra.mrb[0].mxu0 %v1800
      %v1846 = vpop.f32.mrb[0].mxu0
      %v1847 = vadd.f32 0.0, %v1846
      %v1848 = vpop.f32.mrb[0].mxu0
      %v1849 = vadd.f32 0.0, %v1848
      %v1850 = vpop.f32.mrb[0].mxu0
      %v1851 = vadd.f32 0.0, %v1850
      %v1852 = vpop.f32.mrb[0].mxu0
      %v1853 = vadd.f32 0.0, %v1852
      %1854 = vdwg.mxu0
      %1855 = vmatprep.subr.bf16.mxu0 0
      %1856 = vmatpush1.bf16.msra.mxu0 %v1787
      %1857 = vmatprep.subr.bf16.mxu0 0
      %1858 = vmatpush1.bf16.msra.mxu0 %v1810
      %1859 = vmatprep.subr.bf16.mxu0 0
      %1860 = vmatpush1.bf16.msra.mxu0 0
      %1861 = vmatprep.subr.bf16.mxu0 0
      %1862 = vmatpush1.bf16.msra.mxu0 0
      %1863 = vmatprep.subr.bf16.mxu0 0
      %1864 = vmatpush1.bf16.msra.mxu0 0
      %1865 = vmatprep.subr.bf16.mxu0 0
      %1866 = vmatpush1.bf16.msra.mxu0 0
      %1867 = vmatprep.subr.bf16.mxu0 0
      %1868 = vmatpush1.bf16.msra.mxu0 0
      %1869 = vmatprep.subr.bf16.mxu0 0
      %1870 = vmatpush1.bf16.msra.mxu0 0
      %1871 = vmatprep.subr.bf16.mxu0 0
      %1872 = vmatpush1.bf16.msra.mxu0 0
      %1873 = vmatprep.subr.bf16.mxu0 0
      %1874 = vmatpush1.bf16.msra.mxu0 0
      %1875 = vmatprep.subr.bf16.mxu0 0
      %1876 = vmatpush1.bf16.msra.mxu0 0
      %1877 = vmatprep.subr.bf16.mxu0 0
      %1878 = vmatpush1.bf16.msra.mxu0 0
      %1879 = vmatprep.subr.bf16.mxu0 0
      %1880 = vmatpush1.bf16.msra.mxu0 0
      %1881 = vmatprep.subr.bf16.mxu0 0
      %1882 = vmatpush1.bf16.msra.mxu0 0
      %1883 = vmatprep.subr.bf16.mxu0 0
      %1884 = vmatpush1.bf16.msra.mxu0 0
      %1885 = vmatprep.subr.bf16.mxu0 0
      %1886 = vmatpush1.bf16.msra.mxu0 0
      %1887 = vmatprep.mubr.bf16.mxu0 0
      %1888 = vmatmul.mubr.bf16.gmra.mrb[0].mxu0 %v1800
      %v1889 = vpop.f32.mrb[0].mxu0
      %v1890 = vadd.f32 0.0, %v1889
      %v1891 = vpop.f32.mrb[0].mxu0
      %v1892 = vpop.f32.mrb[0].mxu0
      %v1893 = vadd.f32 0.0, %v1892
      %v1894 = vpop.f32.mrb[0].mxu0
      %1895 = vdwg.mxu0
      %s1896 = scalar_lea.vmem %s3, 8
      %v1897 = vld [vmem:[%s1896] sm:$0xf]
      %v1898 = vld [vmem:[%s1896 + $0x4] sm:$0x7]
      %v1901 = vunpack.c.l.b16 %v1897
      %v1902 = vunpack.c.l.b16 %v1898
      %v1903 = vpack.c.b16 %v1902, %v1901
      %v1905 = vsel %vm1798, %v1903, 0
      %1907 = vmatprep.subr.bf16.mxu0 %v1786
      %1908 = vmatpush1.bf16.msra.mxu0 %v1785
      %1909 = vmatprep.subr.bf16.mxu0 %v1807
      %1910 = vmatpush1.bf16.msra.mxu0 %v1804
      %1911 = vmatprep.subr.bf16.mxu0 0
      %1912 = vmatpush1.bf16.msra.mxu0 0
      %1913 = vmatprep.subr.bf16.mxu0 0
      %1914 = vmatpush1.bf16.msra.mxu0 0
      %1915 = vmatprep.subr.bf16.mxu0 0
      %1916 = vmatpush1.bf16.msra.mxu0 0
      %1917 = vmatprep.subr.bf16.mxu0 0
      %1918 = vmatpush1.bf16.msra.mxu0 0
      %1919 = vmatprep.subr.bf16.mxu0 0
      %1920 = vmatpush1.bf16.msra.mxu0 0
      %1921 = vmatprep.subr.bf16.mxu0 0
      %1922 = vmatpush1.bf16.msra.mxu0 0
      %1923 = vmatprep.subr.bf16.mxu0 0
      %1924 = vmatpush1.bf16.msra.mxu0 0
      %1925 = vmatprep.subr.bf16.mxu0 0
      %1926 = vmatpush1.bf16.msra.mxu0 0
      %1927 = vmatprep.subr.bf16.mxu0 0
      %1928 = vmatpush1.bf16.msra.mxu0 0
      %1929 = vmatprep.subr.bf16.mxu0 0
      %1930 = vmatpush1.bf16.msra.mxu0 0
      %1931 = vmatprep.subr.bf16.mxu0 0
      %1932 = vmatpush1.bf16.msra.mxu0 0
      %1933 = vmatprep.subr.bf16.mxu0 0
      %1934 = vmatpush1.bf16.msra.mxu0 0
      %1935 = vmatprep.subr.bf16.mxu0 0
      %1936 = vmatpush1.bf16.msra.mxu0 0
      %1937 = vmatprep.subr.bf16.mxu0 0
      %1938 = vmatpush1.bf16.msra.mxu0 0
      %1939 = vmatprep.mubr.bf16.mxu0 0
      %1940 = vmatmul.mubr.bf16.gmra.mrb[0].mxu0 %v1905
      %v1941 = vpop.f32.mrb[0].mxu0
      %v1942 = vadd.f32 0.0, %v1941
      %v1943 = vpop.f32.mrb[0].mxu0
      %v1944 = vadd.f32 0.0, %v1943
      %v1945 = vpop.f32.mrb[0].mxu0
      %v1946 = vadd.f32 0.0, %v1945
      %v1947 = vpop.f32.mrb[0].mxu0
      %v1948 = vadd.f32 0.0, %v1947
      %1949 = vdwg.mxu0
      %1950 = vmatprep.subr.bf16.mxu0 0
      %1951 = vmatpush1.bf16.msra.mxu0 %v1787
      %1952 = vmatprep.subr.bf16.mxu0 0
      %1953 = vmatpush1.bf16.msra.mxu0 %v1810
      %1954 = vmatprep.subr.bf16.mxu0 0
      %1955 = vmatpush1.bf16.msra.mxu0 0
      %1956 = vmatprep.subr.bf16.mxu0 0
      %1957 = vmatpush1.bf16.msra.mxu0 0
      %1958 = vmatprep.subr.bf16.mxu0 0
      %1959 = vmatpush1.bf16.msra.mxu0 0
      %1960 = vmatprep.subr.bf16.mxu0 0
      %1961 = vmatpush1.bf16.msra.mxu0 0
      %1962 = vmatprep.subr.bf16.mxu0 0
      %1963 = vmatpush1.bf16.msra.mxu0 0
      %1964 = vmatprep.subr.bf16.mxu0 0
      %1965 = vmatpush1.bf16.msra.mxu0 0
      %1966 = vmatprep.subr.bf16.mxu0 0
      %1967 = vmatpush1.bf16.msra.mxu0 0
      %1968 = vmatprep.subr.bf16.mxu0 0
      %1969 = vmatpush1.bf16.msra.mxu0 0
      %1970 = vmatprep.subr.bf16.mxu0 0
      %1971 = vmatpush1.bf16.msra.mxu0 0
      %1972 = vmatprep.subr.bf16.mxu0 0
      %1973 = vmatpush1.bf16.msra.mxu0 0
      %1974 = vmatprep.subr.bf16.mxu0 0
      %1975 = vmatpush1.bf16.msra.mxu0 0
      %1976 = vmatprep.subr.bf16.mxu0 0
      %1977 = vmatpush1.bf16.msra.mxu0 0
      %1978 = vmatprep.subr.bf16.mxu0 0
      %1979 = vmatpush1.bf16.msra.mxu0 0
      %1980 = vmatprep.subr.bf16.mxu0 0
      %1981 = vmatpush1.bf16.msra.mxu0 0
      %1982 = vmatprep.mubr.bf16.mxu0 0
      %1983 = vmatmul.mubr.bf16.gmra.mrb[0].mxu0 %v1905
      %v1984 = vpop.f32.mrb[0].mxu0
      %v1985 = vadd.f32 0.0, %v1984
      %v1986 = vpop.f32.mrb[0].mxu0
      %v1987 = vpop.f32.mrb[0].mxu0
      %v1988 = vadd.f32 0.0, %v1987
      %v1989 = vpop.f32.mrb[0].mxu0
      %1990 = vdwg.mxu0
      %v1991 = vmax.f32 %v1847, %v1942
      %v1992 = vmax.f32 %v1849, %v1944
      %v1993 = vmax.f32 %v1890, %v1985
      %v1994 = vmax.f32 %v1851, %v1946
      %v1995 = vmax.f32 %v1853, %v1948
      %v1996 = vmax.f32 %v1893, %v1988
      %v1997 = vpack.c.bf16 %v1994, %v1991
      %v1998 = vpack.c.bf16 %v1995, %v1992
      %v1999 = vpack.c.bf16 %v1996, %v1993
      %v2000 = vld [vmem:[%s4] sm:$0xff]
      %v2001 = vld [vmem:[%s4 + $0x8] sm:$0xff]
      %v2002 = vld [vmem:[%s4 + $0x10] sm:$0xff]
      %v2003 = vld [vmem:[%s4 + $0x18] sm:$0xff]
      %v2004 = vld [vmem:[%s4 + $0x20] sm:$0xff]
      %v2005 = vld [vmem:[%s4 + $0x28] sm:$0xff]
      %v2006 = vld [vmem:[%s4 + $0x30] sm:$0xff]
      %v2007 = vld [vmem:[%s4 + $0x38] sm:$0xff]
      %v2008 = vld [vmem:[%s4 + $0x40] sm:$0xff]
      %v2009 = vld [vmem:[%s4 + $0x48] sm:$0xff]
      %v2010 = vld [vmem:[%s4 + $0x50] sm:$0xff]
      %v2011 = vld [vmem:[%s4 + $0x58] sm:$0xff]
      %v2012 = vld [vmem:[%s4 + $0x60] sm:$0xff]
      %v2013 = vld [vmem:[%s4 + $0x68] sm:$0xff]
      %v2014 = vld [vmem:[%s4 + $0x70] sm:$0xff]
      %v2015 = vld [vmem:[%s4 + $0x78] sm:$0xff]
      %v2016 = vld [vmem:[%s4 + $0x80] sm:$0xff]
      %v2017 = vld [vmem:[%s4 + $0x88] sm:$0xff]
      %v2018 = vld [vmem:[%s4 + $0x90] sm:$0xff]
      %v2019 = vld [vmem:[%s4 + $0x98] sm:$0xff]
      %v2020 = vld [vmem:[%s4 + $0xa0] sm:$0xff]
      %v2021 = vld [vmem:[%s4 + $0xa8] sm:$0xff]
      %v2022 = vld [vmem:[%s4 + $0xb0] sm:$0xff]
      %v2023 = vld [vmem:[%s4 + $0xb8] sm:$0xff]
      %v2024 = vld [vmem:[%s4 + $0xc0] sm:$0xff]
      %v2025 = vld [vmem:[%s4 + $0xc8] sm:$0xff]
      %v2026 = vld [vmem:[%s4 + $0xd0] sm:$0xff]
      %v2027 = vld [vmem:[%s4 + $0xd8] sm:$0xff]
      %v2028 = vld [vmem:[%s4 + $0xe0] sm:$0xff]
      %v2029 = vld [vmem:[%s4 + $0xe8] sm:$0xff]
      %v2030 = vld [vmem:[%s4 + $0xf0] sm:$0xff]
      %v2031 = vld [vmem:[%s4 + $0xf8] sm:$0xff]
      %v2032 = vld [vmem:[%s4 + $0x100] sm:$0xff]
      %v2033 = vld [vmem:[%s4 + $0x108] sm:$0xff]
      %v2034 = vld [vmem:[%s4 + $0x110] sm:$0xff]
      %v2035 = vld [vmem:[%s4 + $0x118] sm:$0xff]
      %v2036 = vld [vmem:[%s4 + $0x120] sm:$0xff]
      %v2037 = vld [vmem:[%s4 + $0x128] sm:$0xff]
      %v2038 = vld [vmem:[%s4 + $0x130] sm:$0xff]
      %v2039 = vld [vmem:[%s4 + $0x138] sm:$0xff]
      %v2040 = vld [vmem:[%s4 + $0x140] sm:$0xff]
      %v2041 = vld [vmem:[%s4 + $0x148] sm:$0xff]
      %v2084 = vunpack.c.l.b16 %v2000
      %v2085 = vunpack.c.h.b16 %v2000
      %v2086 = vunpack.c.l.b16 %v2001
      %v2087 = vunpack.c.h.b16 %v2001
      %v2088 = vunpack.c.l.b16 %v2002
      %v2089 = vunpack.c.h.b16 %v2002
      %v2090 = vunpack.c.l.b16 %v2003
      %v2091 = vunpack.c.h.b16 %v2003
      %v2092 = vunpack.c.l.b16 %v2004
      %v2093 = vunpack.c.h.b16 %v2004
      %v2094 = vunpack.c.l.b16 %v2005
      %v2095 = vunpack.c.h.b16 %v2005
      %v2096 = vunpack.c.l.b16 %v2006
      %v2097 = vunpack.c.h.b16 %v2006
      %v2098 = vunpack.c.l.b16 %v2007
      %v2099 = vunpack.c.h.b16 %v2007
      %v2100 = vunpack.c.l.b16 %v2008
      %v2101 = vunpack.c.h.b16 %v2008
      %v2102 = vunpack.c.l.b16 %v2009
      %v2103 = vunpack.c.h.b16 %v2009
      %v2104 = vunpack.c.l.b16 %v2010
      %v2105 = vunpack.c.h.b16 %v2010
      %v2106 = vunpack.c.l.b16 %v2011
      %v2107 = vunpack.c.h.b16 %v2011
      %v2108 = vunpack.c.l.b16 %v2012
      %v2109 = vunpack.c.h.b16 %v2012
      %v2110 = vunpack.c.l.b16 %v2013
      %v2111 = vunpack.c.h.b16 %v2013
      %v2112 = vunpack.c.l.b16 %v2014
      %v2113 = vunpack.c.h.b16 %v2014
      %v2114 = vunpack.c.l.b16 %v2015
      %v2115 = vunpack.c.h.b16 %v2015
      %v2116 = vunpack.c.l.b16 %v2016
      %v2117 = vunpack.c.h.b16 %v2016
      %v2118 = vunpack.c.l.b16 %v2017
      %v2119 = vunpack.c.h.b16 %v2017
      %v2120 = vunpack.c.l.b16 %v2018
      %v2121 = vunpack.c.h.b16 %v2018
      %v2122 = vunpack.c.l.b16 %v2019
      %v2123 = vunpack.c.h.b16 %v2019
      %v2124 = vunpack.c.l.b16 %v2020
      %v2125 = vunpack.c.h.b16 %v2020
      %v2126 = vunpack.c.l.b16 %v2021
      %v2127 = vunpack.c.h.b16 %v2021
      %v2128 = vunpack.c.l.b16 %v2022
      %v2129 = vunpack.c.h.b16 %v2022
      %v2130 = vunpack.c.l.b16 %v2023
      %v2131 = vunpack.c.h.b16 %v2023
      %v2132 = vunpack.c.l.b16 %v2024
      %v2133 = vunpack.c.h.b16 %v2024
      %v2134 = vunpack.c.l.b16 %v2025
      %v2135 = vunpack.c.h.b16 %v2025
      %v2136 = vunpack.c.l.b16 %v2026
      %v2137 = vunpack.c.h.b16 %v2026
      %v2138 = vunpack.c.l.b16 %v2027
      %v2139 = vunpack.c.h.b16 %v2027
      %v2140 = vunpack.c.l.b16 %v2028
      %v2141 = vunpack.c.h.b16 %v2028
      %v2142 = vunpack.c.l.b16 %v2029
      %v2143 = vunpack.c.h.b16 %v2029
      %v2144 = vunpack.c.l.b16 %v2030
      %v2145 = vunpack.c.h.b16 %v2030
      %v2146 = vunpack.c.l.b16 %v2031
      %v2147 = vunpack.c.h.b16 %v2031
      %v2148 = vunpack.c.l.b16 %v2032
      %v2149 = vunpack.c.h.b16 %v2032
      %v2150 = vunpack.c.l.b16 %v2033
      %v2151 = vunpack.c.h.b16 %v2033
      %v2152 = vunpack.c.l.b16 %v2034
      %v2153 = vunpack.c.h.b16 %v2034
      %v2154 = vunpack.c.l.b16 %v2035
      %v2155 = vunpack.c.h.b16 %v2035
      %v2156 = vunpack.c.l.b16 %v2036
      %v2157 = vunpack.c.h.b16 %v2036
      %v2158 = vunpack.c.l.b16 %v2037
      %v2159 = vunpack.c.h.b16 %v2037
      %v2160 = vunpack.c.l.b16 %v2038
      %v2161 = vunpack.c.h.b16 %v2038
      %v2162 = vunpack.c.l.b16 %v2039
      %v2163 = vunpack.c.h.b16 %v2039
      %v2164 = vunpack.c.l.b16 %v2040
      %v2165 = vunpack.c.h.b16 %v2040
      %v2166 = vunpack.c.l.b16 %v2041
      %v2167 = vunpack.c.h.b16 %v2041
      %v2168 = vpack.c.b16 %v2086, %v2084
      %v2169 = vpack.c.b16 %v2087, %v2085
      %v2170 = vpack.c.b16 %v2090, %v2088
      %v2171 = vpack.c.b16 %v2091, %v2089
      %v2172 = vpack.c.b16 %v2094, %v2092
      %v2173 = vpack.c.b16 %v2095, %v2093
      %v2174 = vpack.c.b16 %v2098, %v2096
      %v2175 = vpack.c.b16 %v2099, %v2097
      %v2176 = vpack.c.b16 %v2102, %v2100
      %v2177 = vpack.c.b16 %v2103, %v2101
      %v2178 = vpack.c.b16 %v2106, %v2104
      %v2179 = vpack.c.b16 %v2107, %v2105
      %v2180 = vpack.c.b16 %v2110, %v2108
      %v2181 = vpack.c.b16 %v2111, %v2109
      %v2182 = vpack.c.b16 %v2114, %v2112
      %v2183 = vpack.c.b16 %v2115, %v2113
      %v2184 = vpack.c.b16 %v2118, %v2116
      %v2185 = vpack.c.b16 %v2119, %v2117
      %v2186 = vpack.c.b16 %v2122, %v2120
      %v2187 = vpack.c.b16 %v2123, %v2121
      %v2188 = vpack.c.b16 %v2126, %v2124
      %v2189 = vpack.c.b16 %v2127, %v2125
      %v2190 = vpack.c.b16 %v2130, %v2128
      %v2191 = vpack.c.b16 %v2131, %v2129
      %v2192 = vpack.c.b16 %v2134, %v2132
      %v2193 = vpack.c.b16 %v2135, %v2133
      %v2194 = vpack.c.b16 %v2138, %v2136
      %v2195 = vpack.c.b16 %v2139, %v2137
      %v2196 = vpack.c.b16 %v2142, %v2140
      %v2197 = vpack.c.b16 %v2143, %v2141
      %v2198 = vpack.c.b16 %v2146, %v2144
      %v2199 = vpack.c.b16 %v2147, %v2145
      %v2200 = vpack.c.b16 %v2150, %v2148
      %v2201 = vpack.c.b16 %v2151, %v2149
      %v2202 = vpack.c.b16 %v2154, %v2152
      %v2203 = vpack.c.b16 %v2155, %v2153
      %v2204 = vpack.c.b16 %v2158, %v2156
      %v2205 = vpack.c.b16 %v2159, %v2157
      %v2206 = vpack.c.b16 %v2162, %v2160
      %v2207 = vpack.c.b16 %v2163, %v2161
      %v2208 = vpack.c.b16 %v2166, %v2164
      %v2209 = vpack.c.b16 %v2167, %v2165
      %vm2252 = vcmask 654336
      %v2254 = vsel %vm2252, %v1999, 0
      %2256 = vmatprep.subr.bf16.mxu0 %v2169
      %2257 = vmatpush1.bf16.msra.mxu0 %v2168
      %2258 = vmatprep.subr.bf16.mxu0 %v2171
      %2259 = vmatpush1.bf16.msra.mxu0 %v2170
      %2260 = vmatprep.subr.bf16.mxu0 %v2173
      %2261 = vmatpush1.bf16.msra.mxu0 %v2172
      %2262 = vmatprep.subr.bf16.mxu0 %v2175
      %2263 = vmatpush1.bf16.msra.mxu0 %v2174
      %2264 = vmatprep.subr.bf16.mxu0 %v2177
      %2265 = vmatpush1.bf16.msra.mxu0 %v2176
      %2266 = vmatprep.subr.bf16.mxu0 %v2179
      %2267 = vmatpush1.bf16.msra.mxu0 %v2178
      %2268 = vmatprep.subr.bf16.mxu0 %v2181
      %2269 = vmatpush1.bf16.msra.mxu0 %v2180
      %2270 = vmatprep.subr.bf16.mxu0 %v2183
      %2271 = vmatpush1.bf16.msra.mxu0 %v2182
      %2272 = vmatprep.subr.bf16.mxu0 %v2185
      %2273 = vmatpush1.bf16.msra.mxu0 %v2184
      %2274 = vmatprep.subr.bf16.mxu0 %v2187
      %2275 = vmatpush1.bf16.msra.mxu0 %v2186
      %2276 = vmatprep.subr.bf16.mxu0 %v2189
      %2277 = vmatpush1.bf16.msra.mxu0 %v2188
      %2278 = vmatprep.subr.bf16.mxu0 %v2191
      %2279 = vmatpush1.bf16.msra.mxu0 %v2190
      %2280 = vmatprep.subr.bf16.mxu0 %v2193
      %2281 = vmatpush1.bf16.msra.mxu0 %v2192
      %2282 = vmatprep.subr.bf16.mxu0 %v2195
      %2283 = vmatpush1.bf16.msra.mxu0 %v2194
      %2284 = vmatprep.subr.bf16.mxu0 %v2197
      %2285 = vmatpush1.bf16.msra.mxu0 %v2196
      %2286 = vmatprep.subr.bf16.mxu0 %v2199
      %2287 = vmatpush1.bf16.msra.mxu0 %v2198
      %2288 = vmatprep.mubr.bf16.mxu0 %v1998
      %2289 = vmatmul.mubr.bf16.gmra.mrb[0].mxu0 %v1997
      %v2290 = vpop.f32.mrb[0].mxu0
      %v2291 = vadd.f32 0.0, %v2290
      %v2292 = vpop.f32.mrb[0].mxu0
      %v2293 = vadd.f32 0.0, %v2292
      %v2294 = vpop.f32.mrb[0].mxu0
      %v2295 = vadd.f32 0.0, %v2294
      %v2296 = vpop.f32.mrb[0].mxu0
      %v2297 = vadd.f32 0.0, %v2296
      %2298 = vdwg.mxu0
      %2299 = vmatprep.subr.bf16.mxu0 %v2201
      %2300 = vmatpush1.bf16.msra.mxu0 %v2200
      %2301 = vmatprep.subr.bf16.mxu0 %v2203
      %2302 = vmatpush1.bf16.msra.mxu0 %v2202
      %2303 = vmatprep.subr.bf16.mxu0 %v2205
      %2304 = vmatpush1.bf16.msra.mxu0 %v2204
      %2305 = vmatprep.subr.bf16.mxu0 %v2207
      %2306 = vmatpush1.bf16.msra.mxu0 %v2206
      %2307 = vmatprep.subr.bf16.mxu0 %v2209
      %2308 = vmatpush1.bf16.msra.mxu0 %v2208
      %2309 = vmatprep.subr.bf16.mxu0 0
      %2310 = vmatpush1.bf16.msra.mxu0 0
      %2311 = vmatprep.subr.bf16.mxu0 0
      %2312 = vmatpush1.bf16.msra.mxu0 0
      %2313 = vmatprep.subr.bf16.mxu0 0
      %2314 = vmatpush1.bf16.msra.mxu0 0
      %2315 = vmatprep.subr.bf16.mxu0 0
      %2316 = vmatpush1.bf16.msra.mxu0 0
      %2317 = vmatprep.subr.bf16.mxu0 0
      %2318 = vmatpush1.bf16.msra.mxu0 0
      %2319 = vmatprep.subr.bf16.mxu0 0
      %2320 = vmatpush1.bf16.msra.mxu0 0
      %2321 = vmatprep.subr.bf16.mxu0 0
      %2322 = vmatpush1.bf16.msra.mxu0 0
      %2323 = vmatprep.subr.bf16.mxu0 0
      %2324 = vmatpush1.bf16.msra.mxu0 0
      %2325 = vmatprep.subr.bf16.mxu0 0
      %2326 = vmatpush1.bf16.msra.mxu0 0
      %2327 = vmatprep.subr.bf16.mxu0 0
      %2328 = vmatpush1.bf16.msra.mxu0 0
      %2329 = vmatprep.subr.bf16.mxu0 0
      %2330 = vmatpush1.bf16.msra.mxu0 0
      %2331 = vmatprep.mubr.bf16.mxu0 0
      %2332 = vmatmul.mubr.bf16.gmra.mrb[0].mxu0 %v2254
      %v2333 = vpop.f32.mrb[0].mxu0
      %v2334 = vadd.f32 %v2291, %v2333
      %v2335 = vpop.f32.mrb[0].mxu0
      %v2336 = vadd.f32 %v2293, %v2335
      %v2337 = vpop.f32.mrb[0].mxu0
      %v2338 = vadd.f32 %v2295, %v2337
      %v2339 = vpop.f32.mrb[0].mxu0
      %v2340 = vadd.f32 %v2297, %v2339
      %2341 = vdwg.mxu0
      %s2342 = scalar_lea.vmem %s4, 336
      %v2343 = vld [vmem:[%s2342] sm:$0xff]
      %v2344 = vld [vmem:[%s2342 + $0x8] sm:$0xff]
      %v2345 = vld [vmem:[%s2342 + $0x10] sm:$0xff]
      %v2346 = vld [vmem:[%s2342 + $0x18] sm:$0xff]
      %v2347 = vld [vmem:[%s2342 + $0x20] sm:$0xff]
      %v2348 = vld [vmem:[%s2342 + $0x28] sm:$0xff]
      %v2349 = vld [vmem:[%s2342 + $0x30] sm:$0xff]
      %v2350 = vld [vmem:[%s2342 + $0x38] sm:$0xff]
      %v2351 = vld [vmem:[%s2342 + $0x40] sm:$0xff]
      %v2352 = vld [vmem:[%s2342 + $0x48] sm:$0xff]
      %v2353 = vld [vmem:[%s2342 + $0x50] sm:$0xff]
      %v2354 = vld [vmem:[%s2342 + $0x58] sm:$0xff]
      %v2355 = vld [vmem:[%s2342 + $0x60] sm:$0xff]
      %v2356 = vld [vmem:[%s2342 + $0x68] sm:$0xff]
      %v2357 = vld [vmem:[%s2342 + $0x70] sm:$0xff]
      %v2358 = vld [vmem:[%s2342 + $0x78] sm:$0xff]
      %v2359 = vld [vmem:[%s2342 + $0x80] sm:$0xff]
      %v2360 = vld [vmem:[%s2342 + $0x88] sm:$0xff]
      %v2361 = vld [vmem:[%s2342 + $0x90] sm:$0xff]
      %v2362 = vld [vmem:[%s2342 + $0x98] sm:$0xff]
      %v2363 = vld [vmem:[%s2342 + $0xa0] sm:$0xff]
      %v2364 = vld [vmem:[%s2342 + $0xa8] sm:$0xff]
      %v2365 = vld [vmem:[%s2342 + $0xb0] sm:$0xff]
      %v2366 = vld [vmem:[%s2342 + $0xb8] sm:$0xff]
      %v2367 = vld [vmem:[%s2342 + $0xc0] sm:$0xff]
      %v2368 = vld [vmem:[%s2342 + $0xc8] sm:$0xff]
      %v2369 = vld [vmem:[%s2342 + $0xd0] sm:$0xff]
      %v2370 = vld [vmem:[%s2342 + $0xd8] sm:$0xff]
      %v2371 = vld [vmem:[%s2342 + $0xe0] sm:$0xff]
      %v2372 = vld [vmem:[%s2342 + $0xe8] sm:$0xff]
      %v2373 = vld [vmem:[%s2342 + $0xf0] sm:$0xff]
      %v2374 = vld [vmem:[%s2342 + $0xf8] sm:$0xff]
      %v2375 = vld [vmem:[%s2342 + $0x100] sm:$0xff]
      %v2376 = vld [vmem:[%s2342 + $0x108] sm:$0xff]
      %v2377 = vld [vmem:[%s2342 + $0x110] sm:$0xff]
      %v2378 = vld [vmem:[%s2342 + $0x118] sm:$0xff]
      %v2379 = vld [vmem:[%s2342 + $0x120] sm:$0xff]
      %v2380 = vld [vmem:[%s2342 + $0x128] sm:$0xff]
      %v2381 = vld [vmem:[%s2342 + $0x130] sm:$0xff]
      %v2382 = vld [vmem:[%s2342 + $0x138] sm:$0xff]
      %v2383 = vld [vmem:[%s2342 + $0x140] sm:$0xff]
      %v2384 = vld [vmem:[%s2342 + $0x148] sm:$0xff]
      %v2427 = vunpack.c.l.b16 %v2343
      %v2428 = vunpack.c.h.b16 %v2343
      %v2429 = vunpack.c.l.b16 %v2344
      %v2430 = vunpack.c.h.b16 %v2344
      %v2431 = vunpack.c.l.b16 %v2345
      %v2432 = vunpack.c.h.b16 %v2345
      %v2433 = vunpack.c.l.b16 %v2346
      %v2434 = vunpack.c.h.b16 %v2346
      %v2435 = vunpack.c.l.b16 %v2347
      %v2436 = vunpack.c.h.b16 %v2347
      %v2437 = vunpack.c.l.b16 %v2348
      %v2438 = vunpack.c.h.b16 %v2348
      %v2439 = vunpack.c.l.b16 %v2349
      %v2440 = vunpack.c.h.b16 %v2349
      %v2441 = vunpack.c.l.b16 %v2350
      %v2442 = vunpack.c.h.b16 %v2350
      %v2443 = vunpack.c.l.b16 %v2351
      %v2444 = vunpack.c.h.b16 %v2351
      %v2445 = vunpack.c.l.b16 %v2352
      %v2446 = vunpack.c.h.b16 %v2352
      %v2447 = vunpack.c.l.b16 %v2353
      %v2448 = vunpack.c.h.b16 %v2353
      %v2449 = vunpack.c.l.b16 %v2354
      %v2450 = vunpack.c.h.b16 %v2354
      %v2451 = vunpack.c.l.b16 %v2355
      %v2452 = vunpack.c.h.b16 %v2355
      %v2453 = vunpack.c.l.b16 %v2356
      %v2454 = vunpack.c.h.b16 %v2356
      %v2455 = vunpack.c.l.b16 %v2357
      %v2456 = vunpack.c.h.b16 %v2357
      %v2457 = vunpack.c.l.b16 %v2358
      %v2458 = vunpack.c.h.b16 %v2358
      %v2459 = vunpack.c.l.b16 %v2359
      %v2460 = vunpack.c.h.b16 %v2359
      %v2461 = vunpack.c.l.b16 %v2360
      %v2462 = vunpack.c.h.b16 %v2360
      %v2463 = vunpack.c.l.b16 %v2361
      %v2464 = vunpack.c.h.b16 %v2361
      %v2465 = vunpack.c.l.b16 %v2362
      %v2466 = vunpack.c.h.b16 %v2362
      %v2467 = vunpack.c.l.b16 %v2363
      %v2468 = vunpack.c.h.b16 %v2363
      %v2469 = vunpack.c.l.b16 %v2364
      %v2470 = vunpack.c.h.b16 %v2364
      %v2471 = vunpack.c.l.b16 %v2365
      %v2472 = vunpack.c.h.b16 %v2365
      %v2473 = vunpack.c.l.b16 %v2366
      %v2474 = vunpack.c.h.b16 %v2366
      %v2475 = vunpack.c.l.b16 %v2367
      %v2476 = vunpack.c.h.b16 %v2367
      %v2477 = vunpack.c.l.b16 %v2368
      %v2478 = vunpack.c.h.b16 %v2368
      %v2479 = vunpack.c.l.b16 %v2369
      %v2480 = vunpack.c.h.b16 %v2369
      %v2481 = vunpack.c.l.b16 %v2370
      %v2482 = vunpack.c.h.b16 %v2370
      %v2483 = vunpack.c.l.b16 %v2371
      %v2484 = vunpack.c.h.b16 %v2371
      %v2485 = vunpack.c.l.b16 %v2372
      %v2486 = vunpack.c.h.b16 %v2372
      %v2487 = vunpack.c.l.b16 %v2373
      %v2488 = vunpack.c.h.b16 %v2373
      %v2489 = vunpack.c.l.b16 %v2374
      %v2490 = vunpack.c.h.b16 %v2374
      %v2491 = vunpack.c.l.b16 %v2375
      %v2492 = vunpack.c.h.b16 %v2375
      %v2493 = vunpack.c.l.b16 %v2376
      %v2494 = vunpack.c.h.b16 %v2376
      %v2495 = vunpack.c.l.b16 %v2377
      %v2496 = vunpack.c.h.b16 %v2377
      %v2497 = vunpack.c.l.b16 %v2378
      %v2498 = vunpack.c.h.b16 %v2378
      %v2499 = vunpack.c.l.b16 %v2379
      %v2500 = vunpack.c.h.b16 %v2379
      %v2501 = vunpack.c.l.b16 %v2380
      %v2502 = vunpack.c.h.b16 %v2380
      %v2503 = vunpack.c.l.b16 %v2381
      %v2504 = vunpack.c.h.b16 %v2381
      %v2505 = vunpack.c.l.b16 %v2382
      %v2506 = vunpack.c.h.b16 %v2382
      %v2507 = vunpack.c.l.b16 %v2383
      %v2508 = vunpack.c.h.b16 %v2383
      %v2509 = vunpack.c.l.b16 %v2384
      %v2510 = vunpack.c.h.b16 %v2384
      %v2511 = vpack.c.b16 %v2429, %v2427
      %v2512 = vpack.c.b16 %v2430, %v2428
      %v2513 = vpack.c.b16 %v2433, %v2431
      %v2514 = vpack.c.b16 %v2434, %v2432
      %v2515 = vpack.c.b16 %v2437, %v2435
      %v2516 = vpack.c.b16 %v2438, %v2436
      %v2517 = vpack.c.b16 %v2441, %v2439
      %v2518 = vpack.c.b16 %v2442, %v2440
      %v2519 = vpack.c.b16 %v2445, %v2443
      %v2520 = vpack.c.b16 %v2446, %v2444
      %v2521 = vpack.c.b16 %v2449, %v2447
      %v2522 = vpack.c.b16 %v2450, %v2448
      %v2523 = vpack.c.b16 %v2453, %v2451
      %v2524 = vpack.c.b16 %v2454, %v2452
      %v2525 = vpack.c.b16 %v2457, %v2455
      %v2526 = vpack.c.b16 %v2458, %v2456
      %v2527 = vpack.c.b16 %v2461, %v2459
      %v2528 = vpack.c.b16 %v2462, %v2460
      %v2529 = vpack.c.b16 %v2465, %v2463
      %v2530 = vpack.c.b16 %v2466, %v2464
      %v2531 = vpack.c.b16 %v2469, %v2467
      %v2532 = vpack.c.b16 %v2470, %v2468
      %v2533 = vpack.c.b16 %v2473, %v2471
      %v2534 = vpack.c.b16 %v2474, %v2472
      %v2535 = vpack.c.b16 %v2477, %v2475
      %v2536 = vpack.c.b16 %v2478, %v2476
      %v2537 = vpack.c.b16 %v2481, %v2479
      %v2538 = vpack.c.b16 %v2482, %v2480
      %v2539 = vpack.c.b16 %v2485, %v2483
      %v2540 = vpack.c.b16 %v2486, %v2484
      %v2541 = vpack.c.b16 %v2489, %v2487
      %v2542 = vpack.c.b16 %v2490, %v2488
      %v2543 = vpack.c.b16 %v2493, %v2491
      %v2544 = vpack.c.b16 %v2494, %v2492
      %v2545 = vpack.c.b16 %v2497, %v2495
      %v2546 = vpack.c.b16 %v2498, %v2496
      %v2547 = vpack.c.b16 %v2501, %v2499
      %v2548 = vpack.c.b16 %v2502, %v2500
      %v2549 = vpack.c.b16 %v2505, %v2503
      %v2550 = vpack.c.b16 %v2506, %v2504
      %v2551 = vpack.c.b16 %v2509, %v2507
      %v2552 = vpack.c.b16 %v2510, %v2508
      %2595 = vmatprep.subr.bf16.mxu0 %v2512
      %2596 = vmatpush1.bf16.msra.mxu0 %v2511
      %2597 = vmatprep.subr.bf16.mxu0 %v2514
      %2598 = vmatpush1.bf16.msra.mxu0 %v2513
      %2599 = vmatprep.subr.bf16.mxu0 %v2516
      %2600 = vmatpush1.bf16.msra.mxu0 %v2515
      %2601 = vmatprep.subr.bf16.mxu0 %v2518
      %2602 = vmatpush1.bf16.msra.mxu0 %v2517
      %2603 = vmatprep.subr.bf16.mxu0 %v2520
      %2604 = vmatpush1.bf16.msra.mxu0 %v2519
      %2605 = vmatprep.subr.bf16.mxu0 %v2522
      %2606 = vmatpush1.bf16.msra.mxu0 %v2521
      %2607 = vmatprep.subr.bf16.mxu0 %v2524
      %2608 = vmatpush1.bf16.msra.mxu0 %v2523
      %2609 = vmatprep.subr.bf16.mxu0 %v2526
      %2610 = vmatpush1.bf16.msra.mxu0 %v2525
      %2611 = vmatprep.subr.bf16.mxu0 %v2528
      %2612 = vmatpush1.bf16.msra.mxu0 %v2527
      %2613 = vmatprep.subr.bf16.mxu0 %v2530
      %2614 = vmatpush1.bf16.msra.mxu0 %v2529
      %2615 = vmatprep.subr.bf16.mxu0 %v2532
      %2616 = vmatpush1.bf16.msra.mxu0 %v2531
      %2617 = vmatprep.subr.bf16.mxu0 %v2534
      %2618 = vmatpush1.bf16.msra.mxu0 %v2533
      %2619 = vmatprep.subr.bf16.mxu0 %v2536
      %2620 = vmatpush1.bf16.msra.mxu0 %v2535
      %2621 = vmatprep.subr.bf16.mxu0 %v2538
      %2622 = vmatpush1.bf16.msra.mxu0 %v2537
      %2623 = vmatprep.subr.bf16.mxu0 %v2540
      %2624 = vmatpush1.bf16.msra.mxu0 %v2539
      %2625 = vmatprep.subr.bf16.mxu0 %v2542
      %2626 = vmatpush1.bf16.msra.mxu0 %v2541
      %2627 = vmatprep.mubr.bf16.mxu0 %v1998
      %2628 = vmatmul.mubr.bf16.gmra.mrb[0].mxu0 %v1997
      %v2629 = vpop.f32.mrb[0].mxu0
      %v2630 = vadd.f32 0.0, %v2629
      %v2631 = vpop.f32.mrb[0].mxu0
      %v2632 = vadd.f32 0.0, %v2631
      %v2633 = vpop.f32.mrb[0].mxu0
      %v2634 = vadd.f32 0.0, %v2633
      %v2635 = vpop.f32.mrb[0].mxu0
      %v2636 = vadd.f32 0.0, %v2635
      %2637 = vdwg.mxu0
      %2638 = vmatprep.subr.bf16.mxu0 %v2544
      %2639 = vmatpush1.bf16.msra.mxu0 %v2543
      %2640 = vmatprep.subr.bf16.mxu0 %v2546
      %2641 = vmatpush1.bf16.msra.mxu0 %v2545
      %2642 = vmatprep.subr.bf16.mxu0 %v2548
      %2643 = vmatpush1.bf16.msra.mxu0 %v2547
      %2644 = vmatprep.subr.bf16.mxu0 %v2550
      %2645 = vmatpush1.bf16.msra.mxu0 %v2549
      %2646 = vmatprep.subr.bf16.mxu0 %v2552
      %2647 = vmatpush1.bf16.msra.mxu0 %v2551
      %2648 = vmatprep.subr.bf16.mxu0 0
      %2649 = vmatpush1.bf16.msra.mxu0 0
      %2650 = vmatprep.subr.bf16.mxu0 0
      %2651 = vmatpush1.bf16.msra.mxu0 0
      %2652 = vmatprep.subr.bf16.mxu0 0
      %2653 = vmatpush1.bf16.msra.mxu0 0
      %2654 = vmatprep.subr.bf16.mxu0 0
      %2655 = vmatpush1.bf16.msra.mxu0 0
      %2656 = vmatprep.subr.bf16.mxu0 0
      %2657 = vmatpush1.bf16.msra.mxu0 0
      %2658 = vmatprep.subr.bf16.mxu0 0
      %2659 = vmatpush1.bf16.msra.mxu0 0
      %2660 = vmatprep.subr.bf16.mxu0 0
      %2661 = vmatpush1.bf16.msra.mxu0 0
      %2662 = vmatprep.subr.bf16.mxu0 0
      %2663 = vmatpush1.bf16.msra.mxu0 0
      %2664 = vmatprep.subr.bf16.mxu0 0
      %2665 = vmatpush1.bf16.msra.mxu0 0
      %2666 = vmatprep.subr.bf16.mxu0 0
      %2667 = vmatpush1.bf16.msra.mxu0 0
      %2668 = vmatprep.subr.bf16.mxu0 0
      %2669 = vmatpush1.bf16.msra.mxu0 0
      %2670 = vmatprep.mubr.bf16.mxu0 0
      %2671 = vmatmul.mubr.bf16.gmra.mrb[0].mxu0 %v2254
      %v2672 = vpop.f32.mrb[0].mxu0
      %v2673 = vadd.f32 %v2630, %v2672
      %v2674 = vpop.f32.mrb[0].mxu0
      %v2675 = vadd.f32 %v2632, %v2674
      %v2676 = vpop.f32.mrb[0].mxu0
      %v2677 = vadd.f32 %v2634, %v2676
      %v2678 = vpop.f32.mrb[0].mxu0
      %v2679 = vadd.f32 %v2636, %v2678
      %2680 = vdwg.mxu0
      %v2681 = vmax.f32 %v2334, %v2673
      %v2682 = vmax.f32 %v2336, %v2675
      %v2683 = vmax.f32 %v2338, %v2677
      %v2684 = vmax.f32 %v2340, %v2679
      %v2685 = vpack.c.bf16 %v2683, %v2681
      %v2686 = vpack.c.bf16 %v2684, %v2682
      %v2687 = vld [vmem:[%s5] sm:$0xff]
      %v2688 = vld [vmem:[%s5 + $0x8] sm:$0xf]
      %v2689 = vld [vmem:[%s5 + $0xc] sm:$0xff]
      %v2690 = vld [vmem:[%s5 + $0x14] sm:$0xf]
      %v2691 = vld [vmem:[%s5 + $0x18] sm:$0xff]
      %v2692 = vld [vmem:[%s5 + $0x20] sm:$0xf]
      %v2693 = vld [vmem:[%s5 + $0x24] sm:$0xff]
      %v2694 = vld [vmem:[%s5 + $0x2c] sm:$0xf]
      %v2695 = vld [vmem:[%s5 + $0x30] sm:$0xff]
      %v2696 = vld [vmem:[%s5 + $0x38] sm:$0xf]
      %v2697 = vld [vmem:[%s5 + $0x3c] sm:$0xff]
      %v2698 = vld [vmem:[%s5 + $0x44] sm:$0xf]
      %v2699 = vld [vmem:[%s5 + $0x48] sm:$0xff]
      %v2700 = vld [vmem:[%s5 + $0x50] sm:$0xf]
      %v2701 = vld [vmem:[%s5 + $0x54] sm:$0xff]
      %v2702 = vld [vmem:[%s5 + $0x5c] sm:$0xf]
      %v2703 = vld [vmem:[%s5 + $0x60] sm:$0xff]
      %v2704 = vld [vmem:[%s5 + $0x68] sm:$0xf]
      %v2705 = vld [vmem:[%s5 + $0x6c] sm:$0xff]
      %v2706 = vld [vmem:[%s5 + $0x74] sm:$0xf]
      %v2707 = vld [vmem:[%s5 + $0x78] sm:$0xff]
      %v2708 = vld [vmem:[%s5 + $0x80] sm:$0xf]
      %v2709 = vld [vmem:[%s5 + $0x84] sm:$0xff]
      %v2710 = vld [vmem:[%s5 + $0x8c] sm:$0xf]
      %v2711 = vld [vmem:[%s5 + $0x90] sm:$0xff]
      %v2712 = vld [vmem:[%s5 + $0x98] sm:$0xf]
      %v2713 = vld [vmem:[%s5 + $0x9c] sm:$0xff]
      %v2714 = vld [vmem:[%s5 + $0xa4] sm:$0xf]
      %v2715 = vld [vmem:[%s5 + $0xa8] sm:$0xff]
      %v2716 = vld [vmem:[%s5 + $0xb0] sm:$0xf]
      %v2717 = vld [vmem:[%s5 + $0xb4] sm:$0xff]
      %v2718 = vld [vmem:[%s5 + $0xbc] sm:$0xf]
      %v2719 = vld [vmem:[%s5 + $0xc0] sm:$0xff]
      %v2720 = vld [vmem:[%s5 + $0xc8] sm:$0xf]
      %v2721 = vld [vmem:[%s5 + $0xcc] sm:$0xff]
      %v2722 = vld [vmem:[%s5 + $0xd4] sm:$0xf]
      %v2723 = vld [vmem:[%s5 + $0xd8] sm:$0xff]
      %v2724 = vld [vmem:[%s5 + $0xe0] sm:$0xf]
      %v2725 = vld [vmem:[%s5 + $0xe4] sm:$0xff]
      %v2726 = vld [vmem:[%s5 + $0xec] sm:$0xf]
      %v2727 = vld [vmem:[%s5 + $0xf0] sm:$0xff]
      %v2728 = vld [vmem:[%s5 + $0xf8] sm:$0xf]
      %s2729 = scalar_lea.vmem %s5, 252
      %v2730 = vld [vmem:[%s2729] sm:$0xff]
      %v2731 = vld [vmem:[%s2729 + $0x8] sm:$0xf]
      %v2732 = vld [vmem:[%s2729 + $0xc] sm:$0xff]
      %v2733 = vld [vmem:[%s2729 + $0x14] sm:$0xf]
      %v2734 = vld [vmem:[%s2729 + $0x18] sm:$0xff]
      %v2735 = vld [vmem:[%s2729 + $0x20] sm:$0xf]
      %v2736 = vld [vmem:[%s2729 + $0x24] sm:$0xff]
      %v2737 = vld [vmem:[%s2729 + $0x2c] sm:$0xf]
      %v2738 = vld [vmem:[%s2729 + $0x30] sm:$0xff]
      %v2739 = vld [vmem:[%s2729 + $0x38] sm:$0xf]
      %v2740 = vld [vmem:[%s2729 + $0x3c] sm:$0xff]
      %v2741 = vld [vmem:[%s2729 + $0x44] sm:$0xf]
      %v2742 = vld [vmem:[%s2729 + $0x48] sm:$0xff]
      %v2743 = vld [vmem:[%s2729 + $0x50] sm:$0xf]
      %v2744 = vld [vmem:[%s2729 + $0x54] sm:$0xff]
      %v2745 = vld [vmem:[%s2729 + $0x5c] sm:$0xf]
      %v2746 = vld [vmem:[%s2729 + $0x60] sm:$0xff]
      %v2747 = vld [vmem:[%s2729 + $0x68] sm:$0xf]
      %v2748 = vld [vmem:[%s2729 + $0x6c] sm:$0xff]
      %v2749 = vld [vmem:[%s2729 + $0x74] sm:$0xf]
      %v2750 = vld [vmem:[%s2729 + $0x78] sm:$0xff]
      %v2751 = vld [vmem:[%s2729 + $0x80] sm:$0xf]
      %v2752 = vld [vmem:[%s2729 + $0x84] sm:$0xff]
      %v2753 = vld [vmem:[%s2729 + $0x8c] sm:$0xf]
      %v2754 = vld [vmem:[%s2729 + $0x90] sm:$0xff]
      %v2755 = vld [vmem:[%s2729 + $0x98] sm:$0xf]
      %v2756 = vld [vmem:[%s2729 + $0x9c] sm:$0xff]
      %v2757 = vld [vmem:[%s2729 + $0xa4] sm:$0xf]
      %v2758 = vld [vmem:[%s2729 + $0xa8] sm:$0xff]
      %v2759 = vld [vmem:[%s2729 + $0xb0] sm:$0xf]
      %v2760 = vld [vmem:[%s2729 + $0xb4] sm:$0xff]
      %v2761 = vld [vmem:[%s2729 + $0xbc] sm:$0xf]
      %v2762 = vld [vmem:[%s2729 + $0xc0] sm:$0xff]
      %v2763 = vld [vmem:[%s2729 + $0xc8] sm:$0xf]
      %v2764 = vld [vmem:[%s2729 + $0xcc] sm:$0xff]
      %v2765 = vld [vmem:[%s2729 + $0xd4] sm:$0xf]
      %v2766 = vld [vmem:[%s2729 + $0xd8] sm:$0xff]
      %v2767 = vld [vmem:[%s2729 + $0xe0] sm:$0xf]
      %v2768 = vld [vmem:[%s2729 + $0xe4] sm:$0xff]
      %v2769 = vld [vmem:[%s2729 + $0xec] sm:$0xf]
      %v2770 = vld [vmem:[%s2729 + $0xf0] sm:$0xff]
      %v2771 = vld [vmem:[%s2729 + $0xf8] sm:$0xf]
      %v2773 = vshrl.u32 %v2685, 16
      %v2775 = vshll.u32 %v2685, 16
      %v2777 = vrot.slane %v2775, 1
      %v2778 = vor.u32 %v2773, %v2777
      %v2780 = vshrl.u32 %v2686, 16
      %v2782 = vshll.u32 %v2686, 16
      %v2784 = vrot.slane %v2782, 1
      %v2785 = vor.u32 %v2780, %v2784
      %v2829 = vunpack.c.l.b16 %v2730
      %v2830 = vunpack.c.h.b16 %v2730
      %v2831 = vunpack.c.l.b16 %v2731
      %v2832 = vunpack.c.l.b16 %v2732
      %v2833 = vunpack.c.h.b16 %v2732
      %v2834 = vunpack.c.l.b16 %v2733
      %v2835 = vunpack.c.l.b16 %v2734
      %v2836 = vunpack.c.h.b16 %v2734
      %v2837 = vunpack.c.l.b16 %v2735
      %v2838 = vunpack.c.l.b16 %v2736
      %v2839 = vunpack.c.h.b16 %v2736
      %v2840 = vunpack.c.l.b16 %v2737
      %v2841 = vunpack.c.l.b16 %v2738
      %v2842 = vunpack.c.h.b16 %v2738
      %v2843 = vunpack.c.l.b16 %v2739
      %v2844 = vunpack.c.l.b16 %v2740
      %v2845 = vunpack.c.h.b16 %v2740
      %v2846 = vunpack.c.l.b16 %v2741
      %v2847 = vunpack.c.l.b16 %v2742
      %v2848 = vunpack.c.h.b16 %v2742
      %v2849 = vunpack.c.l.b16 %v2743
      %v2850 = vunpack.c.l.b16 %v2744
      %v2851 = vunpack.c.h.b16 %v2744
      %v2852 = vunpack.c.l.b16 %v2745
      %v2853 = vunpack.c.l.b16 %v2746
      %v2854 = vunpack.c.h.b16 %v2746
      %v2855 = vunpack.c.l.b16 %v2747
      %v2856 = vunpack.c.l.b16 %v2748
      %v2857 = vunpack.c.h.b16 %v2748
      %v2858 = vunpack.c.l.b16 %v2749
      %v2859 = vunpack.c.l.b16 %v2750
      %v2860 = vunpack.c.h.b16 %v2750
      %v2861 = vunpack.c.l.b16 %v2751
      %v2862 = vunpack.c.l.b16 %v2752
      %v2863 = vunpack.c.h.b16 %v2752
      %v2864 = vunpack.c.l.b16 %v2753
      %v2865 = vunpack.c.l.b16 %v2754
      %v2866 = vunpack.c.h.b16 %v2754
      %v2867 = vunpack.c.l.b16 %v2755
      %v2868 = vunpack.c.l.b16 %v2756
      %v2869 = vunpack.c.h.b16 %v2756
      %v2870 = vunpack.c.l.b16 %v2757
      %v2871 = vunpack.c.l.b16 %v2758
      %v2872 = vunpack.c.h.b16 %v2758
      %v2873 = vunpack.c.l.b16 %v2759
      %v2874 = vunpack.c.l.b16 %v2760
      %v2875 = vunpack.c.h.b16 %v2760
      %v2876 = vunpack.c.l.b16 %v2761
      %v2877 = vunpack.c.l.b16 %v2762
      %v2878 = vunpack.c.h.b16 %v2762
      %v2879 = vunpack.c.l.b16 %v2763
      %v2880 = vunpack.c.l.b16 %v2764
      %v2881 = vunpack.c.h.b16 %v2764
      %v2882 = vunpack.c.l.b16 %v2765
      %v2883 = vunpack.c.l.b16 %v2766
      %v2884 = vunpack.c.h.b16 %v2766
      %v2885 = vunpack.c.l.b16 %v2767
      %v2886 = vunpack.c.l.b16 %v2768
      %v2887 = vunpack.c.h.b16 %v2768
      %v2888 = vunpack.c.l.b16 %v2769
      %v2889 = vunpack.c.l.b16 %v2770
      %v2890 = vunpack.c.h.b16 %v2770
      %v2891 = vunpack.c.l.b16 %v2771
      %v2892 = vpack.c.b16 %v2832, %v2829
      %v2893 = vpack.c.b16 %v2833, %v2830
      %v2894 = vpack.c.b16 %v2834, %v2831
      %v2895 = vpack.c.b16 %v2838, %v2835
      %v2896 = vpack.c.b16 %v2839, %v2836
      %v2897 = vpack.c.b16 %v2840, %v2837
      %v2898 = vpack.c.b16 %v2844, %v2841
      %v2899 = vpack.c.b16 %v2845, %v2842
      %v2900 = vpack.c.b16 %v2846, %v2843
      %v2901 = vpack.c.b16 %v2850, %v2847
      %v2902 = vpack.c.b16 %v2851, %v2848
      %v2903 = vpack.c.b16 %v2852, %v2849
      %v2904 = vpack.c.b16 %v2856, %v2853
      %v2905 = vpack.c.b16 %v2857, %v2854
      %v2906 = vpack.c.b16 %v2858, %v2855
      %v2907 = vpack.c.b16 %v2862, %v2859
      %v2908 = vpack.c.b16 %v2863, %v2860
      %v2909 = vpack.c.b16 %v2864, %v2861
      %v2910 = vpack.c.b16 %v2868, %v2865
      %v2911 = vpack.c.b16 %v2869, %v2866
      %v2912 = vpack.c.b16 %v2870, %v2867
      %v2913 = vpack.c.b16 %v2874, %v2871
      %v2914 = vpack.c.b16 %v2875, %v2872
      %v2915 = vpack.c.b16 %v2876, %v2873
      %v2916 = vpack.c.b16 %v2880, %v2877
      %v2917 = vpack.c.b16 %v2881, %v2878
      %v2918 = vpack.c.b16 %v2882, %v2879
      %v2919 = vpack.c.b16 %v2886, %v2883
      %v2920 = vpack.c.b16 %v2887, %v2884
      %v2921 = vpack.c.b16 %v2888, %v2885
      %v2922 = vpack.c.b16 %v2889, %v2889
      %v2923 = vpack.c.b16 %v2890, %v2890
      %v2924 = vpack.c.b16 %v2891, %v2891
      %vm2955 = vcmask 326656
      %v2957 = vsel %vm2955, %v2785, 0
      %vm2959 = vcmask 1043456
      %v2961 = vsel %vm2959, %v2922, 0
      %v2964 = vsel %vm2959, %v2923, 0
      %v2967 = vsel %vm2959, %v2924, 0
      %2969 = vmatprep.subr.bf16.mxu0 %v2893
      %2970 = vmatpush1.bf16.msra.mxu0 %v2892
      %2971 = vmatprep.subr.bf16.mxu0 %v2896
      %2972 = vmatpush1.bf16.msra.mxu0 %v2895
      %2973 = vmatprep.subr.bf16.mxu0 %v2899
      %2974 = vmatpush1.bf16.msra.mxu0 %v2898
      %2975 = vmatprep.subr.bf16.mxu0 %v2902
      %2976 = vmatpush1.bf16.msra.mxu0 %v2901
      %2977 = vmatprep.subr.bf16.mxu0 %v2905
      %2978 = vmatpush1.bf16.msra.mxu0 %v2904
      %2979 = vmatprep.subr.bf16.mxu0 %v2908
      %2980 = vmatpush1.bf16.msra.mxu0 %v2907
      %2981 = vmatprep.subr.bf16.mxu0 %v2911
      %2982 = vmatpush1.bf16.msra.mxu0 %v2910
      %2983 = vmatprep.subr.bf16.mxu0 %v2914
      %2984 = vmatpush1.bf16.msra.mxu0 %v2913
      %2985 = vmatprep.subr.bf16.mxu0 %v2917
      %2986 = vmatpush1.bf16.msra.mxu0 %v2916
      %2987 = vmatprep.subr.bf16.mxu0 %v2920
      %2988 = vmatpush1.bf16.msra.mxu0 %v2919
      %2989 = vmatprep.subr.bf16.mxu0 %v2964
      %2990 = vmatpush1.bf16.msra.mxu0 %v2961
      %2991 = vmatprep.subr.bf16.mxu0 0
      %2992 = vmatpush1.bf16.msra.mxu0 0
      %2993 = vmatprep.subr.bf16.mxu0 0
      %2994 = vmatpush1.bf16.msra.mxu0 0
      %2995 = vmatprep.subr.bf16.mxu0 0
      %2996 = vmatpush1.bf16.msra.mxu0 0
      %2997 = vmatprep.subr.bf16.mxu0 0
      %2998 = vmatpush1.bf16.msra.mxu0 0
      %2999 = vmatprep.subr.bf16.mxu0 0
      %3000 = vmatpush1.bf16.msra.mxu0 0
      %3001 = vmatprep.mubr.bf16.mxu0 %v2957
      %3002 = vmatmul.mubr.bf16.gmra.mrb[0].mxu0 %v2778
      %v3003 = vpop.f32.mrb[0].mxu0
      %v3004 = vadd.f32 0.0, %v3003
      %v3005 = vpop.f32.mrb[0].mxu0
      %v3006 = vadd.f32 0.0, %v3005
      %v3007 = vpop.f32.mrb[0].mxu0
      %v3008 = vadd.f32 0.0, %v3007
      %v3009 = vpop.f32.mrb[0].mxu0
      %v3010 = vadd.f32 0.0, %v3009
      %3011 = vdwg.mxu0
      %3012 = vmatprep.subr.bf16.mxu0 0
      %3013 = vmatpush1.bf16.msra.mxu0 %v2894
      %3014 = vmatprep.subr.bf16.mxu0 0
      %3015 = vmatpush1.bf16.msra.mxu0 %v2897
      %3016 = vmatprep.subr.bf16.mxu0 0
      %3017 = vmatpush1.bf16.msra.mxu0 %v2900
      %3018 = vmatprep.subr.bf16.mxu0 0
      %3019 = vmatpush1.bf16.msra.mxu0 %v2903
      %3020 = vmatprep.subr.bf16.mxu0 0
      %3021 = vmatpush1.bf16.msra.mxu0 %v2906
      %3022 = vmatprep.subr.bf16.mxu0 0
      %3023 = vmatpush1.bf16.msra.mxu0 %v2909
      %3024 = vmatprep.subr.bf16.mxu0 0
      %3025 = vmatpush1.bf16.msra.mxu0 %v2912
      %3026 = vmatprep.subr.bf16.mxu0 0
      %3027 = vmatpush1.bf16.msra.mxu0 %v2915
      %3028 = vmatprep.subr.bf16.mxu0 0
      %3029 = vmatpush1.bf16.msra.mxu0 %v2918
      %3030 = vmatprep.subr.bf16.mxu0 0
      %3031 = vmatpush1.bf16.msra.mxu0 %v2921
      %3032 = vmatprep.subr.bf16.mxu0 0
      %3033 = vmatpush1.bf16.msra.mxu0 %v2967
      %3034 = vmatprep.subr.bf16.mxu0 0
      %3035 = vmatpush1.bf16.msra.mxu0 0
      %3036 = vmatprep.subr.bf16.mxu0 0
      %3037 = vmatpush1.bf16.msra.mxu0 0
      %3038 = vmatprep.subr.bf16.mxu0 0
      %3039 = vmatpush1.bf16.msra.mxu0 0
      %3040 = vmatprep.subr.bf16.mxu0 0
      %3041 = vmatpush1.bf16.msra.mxu0 0
      %3042 = vmatprep.subr.bf16.mxu0 0
      %3043 = vmatpush1.bf16.msra.mxu0 0
      %3044 = vmatprep.mubr.bf16.mxu0 %v2957
      %3045 = vmatmul.mubr.bf16.gmra.mrb[0].mxu0 %v2778
      %v3046 = vpop.f32.mrb[0].mxu0
      %v3047 = vadd.f32 0.0, %v3046
      %v3048 = vpop.f32.mrb[0].mxu0
      %v3049 = vpop.f32.mrb[0].mxu0
      %v3050 = vadd.f32 0.0, %v3049
      %v3051 = vpop.f32.mrb[0].mxu0
      %3052 = vdwg.mxu0
      %v3095 = vunpack.c.l.b16 %v2687
      %v3096 = vunpack.c.h.b16 %v2687
      %v3097 = vunpack.c.l.b16 %v2688
      %v3098 = vunpack.c.l.b16 %v2689
      %v3099 = vunpack.c.h.b16 %v2689
      %v3100 = vunpack.c.l.b16 %v2690
      %v3101 = vunpack.c.l.b16 %v2691
      %v3102 = vunpack.c.h.b16 %v2691
      %v3103 = vunpack.c.l.b16 %v2692
      %v3104 = vunpack.c.l.b16 %v2693
      %v3105 = vunpack.c.h.b16 %v2693
      %v3106 = vunpack.c.l.b16 %v2694
      %v3107 = vunpack.c.l.b16 %v2695
      %v3108 = vunpack.c.h.b16 %v2695
      %v3109 = vunpack.c.l.b16 %v2696
      %v3110 = vunpack.c.l.b16 %v2697
      %v3111 = vunpack.c.h.b16 %v2697
      %v3112 = vunpack.c.l.b16 %v2698
      %v3113 = vunpack.c.l.b16 %v2699
      %v3114 = vunpack.c.h.b16 %v2699
      %v3115 = vunpack.c.l.b16 %v2700
      %v3116 = vunpack.c.l.b16 %v2701
      %v3117 = vunpack.c.h.b16 %v2701
      %v3118 = vunpack.c.l.b16 %v2702
      %v3119 = vunpack.c.l.b16 %v2703
      %v3120 = vunpack.c.h.b16 %v2703
      %v3121 = vunpack.c.l.b16 %v2704
      %v3122 = vunpack.c.l.b16 %v2705
      %v3123 = vunpack.c.h.b16 %v2705
      %v3124 = vunpack.c.l.b16 %v2706
      %v3125 = vunpack.c.l.b16 %v2707
      %v3126 = vunpack.c.h.b16 %v2707
      %v3127 = vunpack.c.l.b16 %v2708
      %v3128 = vunpack.c.l.b16 %v2709
      %v3129 = vunpack.c.h.b16 %v2709
      %v3130 = vunpack.c.l.b16 %v2710
      %v3131 = vunpack.c.l.b16 %v2711
      %v3132 = vunpack.c.h.b16 %v2711
      %v3133 = vunpack.c.l.b16 %v2712
      %v3134 = vunpack.c.l.b16 %v2713
      %v3135 = vunpack.c.h.b16 %v2713
      %v3136 = vunpack.c.l.b16 %v2714
      %v3137 = vunpack.c.l.b16 %v2715
      %v3138 = vunpack.c.h.b16 %v2715
      %v3139 = vunpack.c.l.b16 %v2716
      %v3140 = vunpack.c.l.b16 %v2717
      %v3141 = vunpack.c.h.b16 %v2717
      %v3142 = vunpack.c.l.b16 %v2718
      %v3143 = vunpack.c.l.b16 %v2719
      %v3144 = vunpack.c.h.b16 %v2719
      %v3145 = vunpack.c.l.b16 %v2720
      %v3146 = vunpack.c.l.b16 %v2721
      %v3147 = vunpack.c.h.b16 %v2721
      %v3148 = vunpack.c.l.b16 %v2722
      %v3149 = vunpack.c.l.b16 %v2723
      %v3150 = vunpack.c.h.b16 %v2723
      %v3151 = vunpack.c.l.b16 %v2724
      %v3152 = vunpack.c.l.b16 %v2725
      %v3153 = vunpack.c.h.b16 %v2725
      %v3154 = vunpack.c.l.b16 %v2726
      %v3155 = vunpack.c.l.b16 %v2727
      %v3156 = vunpack.c.h.b16 %v2727
      %v3157 = vunpack.c.l.b16 %v2728
      %v3158 = vpack.c.b16 %v3098, %v3095
      %v3159 = vpack.c.b16 %v3099, %v3096
      %v3160 = vpack.c.b16 %v3100, %v3097
      %v3161 = vpack.c.b16 %v3104, %v3101
      %v3162 = vpack.c.b16 %v3105, %v3102
      %v3163 = vpack.c.b16 %v3106, %v3103
      %v3164 = vpack.c.b16 %v3110, %v3107
      %v3165 = vpack.c.b16 %v3111, %v3108
      %v3166 = vpack.c.b16 %v3112, %v3109
      %v3167 = vpack.c.b16 %v3116, %v3113
      %v3168 = vpack.c.b16 %v3117, %v3114
      %v3169 = vpack.c.b16 %v3118, %v3115
      %v3170 = vpack.c.b16 %v3122, %v3119
      %v3171 = vpack.c.b16 %v3123, %v3120
      %v3172 = vpack.c.b16 %v3124, %v3121
      %v3173 = vpack.c.b16 %v3128, %v3125
      %v3174 = vpack.c.b16 %v3129, %v3126
      %v3175 = vpack.c.b16 %v3130, %v3127
      %v3176 = vpack.c.b16 %v3134, %v3131
      %v3177 = vpack.c.b16 %v3135, %v3132
      %v3178 = vpack.c.b16 %v3136, %v3133
      %v3179 = vpack.c.b16 %v3140, %v3137
      %v3180 = vpack.c.b16 %v3141, %v3138
      %v3181 = vpack.c.b16 %v3142, %v3139
      %v3182 = vpack.c.b16 %v3146, %v3143
      %v3183 = vpack.c.b16 %v3147, %v3144
      %v3184 = vpack.c.b16 %v3148, %v3145
      %v3185 = vpack.c.b16 %v3152, %v3149
      %v3186 = vpack.c.b16 %v3153, %v3150
      %v3187 = vpack.c.b16 %v3154, %v3151
      %v3188 = vpack.c.b16 %v3155, %v3155
      %v3189 = vpack.c.b16 %v3156, %v3156
      %v3190 = vpack.c.b16 %v3157, %v3157
      %v3221 = vsel %vm2955, %v2686, 0
      %v3224 = vsel %vm2959, %v3188, 0
      %v3227 = vsel %vm2959, %v3189, 0
      %v3230 = vsel %vm2959, %v3190, 0
      %3232 = vmatprep.subr.bf16.mxu0 %v3159
      %3233 = vmatpush1.bf16.msra.mxu0 %v3158
      %3234 = vmatprep.subr.bf16.mxu0 %v3162
      %3235 = vmatpush1.bf16.msra.mxu0 %v3161
      %3236 = vmatprep.subr.bf16.mxu0 %v3165
      %3237 = vmatpush1.bf16.msra.mxu0 %v3164
      %3238 = vmatprep.subr.bf16.mxu0 %v3168
      %3239 = vmatpush1.bf16.msra.mxu0 %v3167
      %3240 = vmatprep.subr.bf16.mxu0 %v3171
      %3241 = vmatpush1.bf16.msra.mxu0 %v3170
      %3242 = vmatprep.subr.bf16.mxu0 %v3174
      %3243 = vmatpush1.bf16.msra.mxu0 %v3173
      %3244 = vmatprep.subr.bf16.mxu0 %v3177
      %3245 = vmatpush1.bf16.msra.mxu0 %v3176
      %3246 = vmatprep.subr.bf16.mxu0 %v3180
      %3247 = vmatpush1.bf16.msra.mxu0 %v3179
      %3248 = vmatprep.subr.bf16.mxu0 %v3183
      %3249 = vmatpush1.bf16.msra.mxu0 %v3182
      %3250 = vmatprep.subr.bf16.mxu0 %v3186
      %3251 = vmatpush1.bf16.msra.mxu0 %v3185
      %3252 = vmatprep.subr.bf16.mxu0 %v3227
      %3253 = vmatpush1.bf16.msra.mxu0 %v3224
      %3254 = vmatprep.subr.bf16.mxu0 0
      %3255 = vmatpush1.bf16.msra.mxu0 0
      %3256 = vmatprep.subr.bf16.mxu0 0
      %3257 = vmatpush1.bf16.msra.mxu0 0
      %3258 = vmatprep.subr.bf16.mxu0 0
      %3259 = vmatpush1.bf16.msra.mxu0 0
      %3260 = vmatprep.subr.bf16.mxu0 0
      %3261 = vmatpush1.bf16.msra.mxu0 0
      %3262 = vmatprep.subr.bf16.mxu0 0
      %3263 = vmatpush1.bf16.msra.mxu0 0
      %3264 = vmatprep.mubr.bf16.mxu0 %v3221
      %3265 = vmatmul.mubr.bf16.gmra.mrb[0].mxu0 %v2685
      %v3266 = vpop.f32.mrb[0].mxu0
      %v3267 = vadd.f32 %v3004, %v3266
      %v3268 = vpop.f32.mrb[0].mxu0
      %v3269 = vadd.f32 %v3006, %v3268
      %v3270 = vpop.f32.mrb[0].mxu0
      %v3271 = vadd.f32 %v3008, %v3270
      %v3272 = vpop.f32.mrb[0].mxu0
      %v3273 = vadd.f32 %v3010, %v3272
      %3274 = vdwg.mxu0
      %3275 = vmatprep.subr.bf16.mxu0 0
      %3276 = vmatpush1.bf16.msra.mxu0 %v3160
      %3277 = vmatprep.subr.bf16.mxu0 0
      %3278 = vmatpush1.bf16.msra.mxu0 %v3163
      %3279 = vmatprep.subr.bf16.mxu0 0
      %3280 = vmatpush1.bf16.msra.mxu0 %v3166
      %3281 = vmatprep.subr.bf16.mxu0 0
      %3282 = vmatpush1.bf16.msra.mxu0 %v3169
      %3283 = vmatprep.subr.bf16.mxu0 0
      %3284 = vmatpush1.bf16.msra.mxu0 %v3172
      %3285 = vmatprep.subr.bf16.mxu0 0
      %3286 = vmatpush1.bf16.msra.mxu0 %v3175
      %3287 = vmatprep.subr.bf16.mxu0 0
      %3288 = vmatpush1.bf16.msra.mxu0 %v3178
      %3289 = vmatprep.subr.bf16.mxu0 0
      %3290 = vmatpush1.bf16.msra.mxu0 %v3181
      %3291 = vmatprep.subr.bf16.mxu0 0
      %3292 = vmatpush1.bf16.msra.mxu0 %v3184
      %3293 = vmatprep.subr.bf16.mxu0 0
      %3294 = vmatpush1.bf16.msra.mxu0 %v3187
      %3295 = vmatprep.subr.bf16.mxu0 0
      %3296 = vmatpush1.bf16.msra.mxu0 %v3230
      %3297 = vmatprep.subr.bf16.mxu0 0
      %3298 = vmatpush1.bf16.msra.mxu0 0
      %3299 = vmatprep.subr.bf16.mxu0 0
      %3300 = vmatpush1.bf16.msra.mxu0 0
      %3301 = vmatprep.subr.bf16.mxu0 0
      %3302 = vmatpush1.bf16.msra.mxu0 0
      %3303 = vmatprep.subr.bf16.mxu0 0
      %3304 = vmatpush1.bf16.msra.mxu0 0
      %3305 = vmatprep.subr.bf16.mxu0 0
      %3306 = vmatpush1.bf16.msra.mxu0 0
      %3307 = vmatprep.mubr.bf16.mxu0 %v3221
      %3308 = vmatmul.mubr.bf16.gmra.mrb[0].mxu0 %v2685
      %v3309 = vpop.f32.mrb[0].mxu0
      %v3310 = vadd.f32 %v3047, %v3309
      %v3311 = vpop.f32.mrb[0].mxu0
      %v3312 = vpop.f32.mrb[0].mxu0
      %v3313 = vadd.f32 %v3050, %v3312
      %v3314 = vpop.f32.mrb[0].mxu0
      %3315 = vdwg.mxu0
      %s3316 = scalar_lea.vmem %s5, 504
      %v3317 = vld [vmem:[%s3316] sm:$0xff]
      %v3318 = vld [vmem:[%s3316 + $0x8] sm:$0xf]
      %v3319 = vld [vmem:[%s3316 + $0xc] sm:$0xff]
      %v3320 = vld [vmem:[%s3316 + $0x14] sm:$0xf]
      %v3321 = vld [vmem:[%s3316 + $0x18] sm:$0xff]
      %v3322 = vld [vmem:[%s3316 + $0x20] sm:$0xf]
      %v3323 = vld [vmem:[%s3316 + $0x24] sm:$0xff]
      %v3324 = vld [vmem:[%s3316 + $0x2c] sm:$0xf]
      %v3325 = vld [vmem:[%s3316 + $0x30] sm:$0xff]
      %v3326 = vld [vmem:[%s3316 + $0x38] sm:$0xf]
      %v3327 = vld [vmem:[%s3316 + $0x3c] sm:$0xff]
      %v3328 = vld [vmem:[%s3316 + $0x44] sm:$0xf]
      %v3329 = vld [vmem:[%s3316 + $0x48] sm:$0xff]
      %v3330 = vld [vmem:[%s3316 + $0x50] sm:$0xf]
      %v3331 = vld [vmem:[%s3316 + $0x54] sm:$0xff]
      %v3332 = vld [vmem:[%s3316 + $0x5c] sm:$0xf]
      %v3333 = vld [vmem:[%s3316 + $0x60] sm:$0xff]
      %v3334 = vld [vmem:[%s3316 + $0x68] sm:$0xf]
      %v3335 = vld [vmem:[%s3316 + $0x6c] sm:$0xff]
      %v3336 = vld [vmem:[%s3316 + $0x74] sm:$0xf]
      %v3337 = vld [vmem:[%s3316 + $0x78] sm:$0xff]
      %v3338 = vld [vmem:[%s3316 + $0x80] sm:$0xf]
      %v3339 = vld [vmem:[%s3316 + $0x84] sm:$0xff]
      %v3340 = vld [vmem:[%s3316 + $0x8c] sm:$0xf]
      %v3341 = vld [vmem:[%s3316 + $0x90] sm:$0xff]
      %v3342 = vld [vmem:[%s3316 + $0x98] sm:$0xf]
      %v3343 = vld [vmem:[%s3316 + $0x9c] sm:$0xff]
      %v3344 = vld [vmem:[%s3316 + $0xa4] sm:$0xf]
      %v3345 = vld [vmem:[%s3316 + $0xa8] sm:$0xff]
      %v3346 = vld [vmem:[%s3316 + $0xb0] sm:$0xf]
      %v3347 = vld [vmem:[%s3316 + $0xb4] sm:$0xff]
      %v3348 = vld [vmem:[%s3316 + $0xbc] sm:$0xf]
      %v3349 = vld [vmem:[%s3316 + $0xc0] sm:$0xff]
      %v3350 = vld [vmem:[%s3316 + $0xc8] sm:$0xf]
      %v3351 = vld [vmem:[%s3316 + $0xcc] sm:$0xff]
      %v3352 = vld [vmem:[%s3316 + $0xd4] sm:$0xf]
      %v3353 = vld [vmem:[%s3316 + $0xd8] sm:$0xff]
      %v3354 = vld [vmem:[%s3316 + $0xe0] sm:$0xf]
      %v3355 = vld [vmem:[%s3316 + $0xe4] sm:$0xff]
      %v3356 = vld [vmem:[%s3316 + $0xec] sm:$0xf]
      %v3357 = vld [vmem:[%s3316 + $0xf0] sm:$0xff]
      %v3358 = vld [vmem:[%s3316 + $0xf8] sm:$0xf]
      %v3361 = vrot.slane %v2685, 1
      %v3362 = vrot.slane %v2686, 1
      %v3406 = vunpack.c.l.b16 %v3317
      %v3407 = vunpack.c.h.b16 %v3317
      %v3408 = vunpack.c.l.b16 %v3318
      %v3409 = vunpack.c.l.b16 %v3319
      %v3410 = vunpack.c.h.b16 %v3319
      %v3411 = vunpack.c.l.b16 %v3320
      %v3412 = vunpack.c.l.b16 %v3321
      %v3413 = vunpack.c.h.b16 %v3321
      %v3414 = vunpack.c.l.b16 %v3322
      %v3415 = vunpack.c.l.b16 %v3323
      %v3416 = vunpack.c.h.b16 %v3323
      %v3417 = vunpack.c.l.b16 %v3324
      %v3418 = vunpack.c.l.b16 %v3325
      %v3419 = vunpack.c.h.b16 %v3325
      %v3420 = vunpack.c.l.b16 %v3326
      %v3421 = vunpack.c.l.b16 %v3327
      %v3422 = vunpack.c.h.b16 %v3327
      %v3423 = vunpack.c.l.b16 %v3328
      %v3424 = vunpack.c.l.b16 %v3329
      %v3425 = vunpack.c.h.b16 %v3329
      %v3426 = vunpack.c.l.b16 %v3330
      %v3427 = vunpack.c.l.b16 %v3331
      %v3428 = vunpack.c.h.b16 %v3331
      %v3429 = vunpack.c.l.b16 %v3332
      %v3430 = vunpack.c.l.b16 %v3333
      %v3431 = vunpack.c.h.b16 %v3333
      %v3432 = vunpack.c.l.b16 %v3334
      %v3433 = vunpack.c.l.b16 %v3335
      %v3434 = vunpack.c.h.b16 %v3335
      %v3435 = vunpack.c.l.b16 %v3336
      %v3436 = vunpack.c.l.b16 %v3337
      %v3437 = vunpack.c.h.b16 %v3337
      %v3438 = vunpack.c.l.b16 %v3338
      %v3439 = vunpack.c.l.b16 %v3339
      %v3440 = vunpack.c.h.b16 %v3339
      %v3441 = vunpack.c.l.b16 %v3340
      %v3442 = vunpack.c.l.b16 %v3341
      %v3443 = vunpack.c.h.b16 %v3341
      %v3444 = vunpack.c.l.b16 %v3342
      %v3445 = vunpack.c.l.b16 %v3343
      %v3446 = vunpack.c.h.b16 %v3343
      %v3447 = vunpack.c.l.b16 %v3344
      %v3448 = vunpack.c.l.b16 %v3345
      %v3449 = vunpack.c.h.b16 %v3345
      %v3450 = vunpack.c.l.b16 %v3346
      %v3451 = vunpack.c.l.b16 %v3347
      %v3452 = vunpack.c.h.b16 %v3347
      %v3453 = vunpack.c.l.b16 %v3348
      %v3454 = vunpack.c.l.b16 %v3349
      %v3455 = vunpack.c.h.b16 %v3349
      %v3456 = vunpack.c.l.b16 %v3350
      %v3457 = vunpack.c.l.b16 %v3351
      %v3458 = vunpack.c.h.b16 %v3351
      %v3459 = vunpack.c.l.b16 %v3352
      %v3460 = vunpack.c.l.b16 %v3353
      %v3461 = vunpack.c.h.b16 %v3353
      %v3462 = vunpack.c.l.b16 %v3354
      %v3463 = vunpack.c.l.b16 %v3355
      %v3464 = vunpack.c.h.b16 %v3355
      %v3465 = vunpack.c.l.b16 %v3356
      %v3466 = vunpack.c.l.b16 %v3357
      %v3467 = vunpack.c.h.b16 %v3357
      %v3468 = vunpack.c.l.b16 %v3358
      %v3469 = vpack.c.b16 %v3409, %v3406
      %v3470 = vpack.c.b16 %v3410, %v3407
      %v3471 = vpack.c.b16 %v3411, %v3408
      %v3472 = vpack.c.b16 %v3415, %v3412
      %v3473 = vpack.c.b16 %v3416, %v3413
      %v3474 = vpack.c.b16 %v3417, %v3414
      %v3475 = vpack.c.b16 %v3421, %v3418
      %v3476 = vpack.c.b16 %v3422, %v3419
      %v3477 = vpack.c.b16 %v3423, %v3420
      %v3478 = vpack.c.b16 %v3427, %v3424
      %v3479 = vpack.c.b16 %v3428, %v3425
      %v3480 = vpack.c.b16 %v3429, %v3426
      %v3481 = vpack.c.b16 %v3433, %v3430
      %v3482 = vpack.c.b16 %v3434, %v3431
      %v3483 = vpack.c.b16 %v3435, %v3432
      %v3484 = vpack.c.b16 %v3439, %v3436
      %v3485 = vpack.c.b16 %v3440, %v3437
      %v3486 = vpack.c.b16 %v3441, %v3438
      %v3487 = vpack.c.b16 %v3445, %v3442
      %v3488 = vpack.c.b16 %v3446, %v3443
      %v3489 = vpack.c.b16 %v3447, %v3444
      %v3490 = vpack.c.b16 %v3451, %v3448
      %v3491 = vpack.c.b16 %v3452, %v3449
      %v3492 = vpack.c.b16 %v3453, %v3450
      %v3493 = vpack.c.b16 %v3457, %v3454
      %v3494 = vpack.c.b16 %v3458, %v3455
      %v3495 = vpack.c.b16 %v3459, %v3456
      %v3496 = vpack.c.b16 %v3463, %v3460
      %v3497 = vpack.c.b16 %v3464, %v3461
      %v3498 = vpack.c.b16 %v3465, %v3462
      %v3499 = vpack.c.b16 %v3466, %v3466
      %v3500 = vpack.c.b16 %v3467, %v3467
      %v3501 = vpack.c.b16 %v3468, %v3468
      %v3533 = vsel %vm2955, %v3362, 0
      %v3536 = vsel %vm2959, %v3499, 0
      %v3539 = vsel %vm2959, %v3500, 0
      %v3542 = vsel %vm2959, %v3501, 0
      %3544 = vmatprep.subr.bf16.mxu0 %v3470
      %3545 = vmatpush1.bf16.msra.mxu0 %v3469
      %3546 = vmatprep.subr.bf16.mxu0 %v3473
      %3547 = vmatpush1.bf16.msra.mxu0 %v3472
      %3548 = vmatprep.subr.bf16.mxu0 %v3476
      %3549 = vmatpush1.bf16.msra.mxu0 %v3475
      %3550 = vmatprep.subr.bf16.mxu0 %v3479
      %3551 = vmatpush1.bf16.msra.mxu0 %v3478
      %3552 = vmatprep.subr.bf16.mxu0 %v3482
      %3553 = vmatpush1.bf16.msra.mxu0 %v3481
      %3554 = vmatprep.subr.bf16.mxu0 %v3485
      %3555 = vmatpush1.bf16.msra.mxu0 %v3484
      %3556 = vmatprep.subr.bf16.mxu0 %v3488
      %3557 = vmatpush1.bf16.msra.mxu0 %v3487
      %3558 = vmatprep.subr.bf16.mxu0 %v3491
      %3559 = vmatpush1.bf16.msra.mxu0 %v3490
      %3560 = vmatprep.subr.bf16.mxu0 %v3494
      %3561 = vmatpush1.bf16.msra.mxu0 %v3493
      %3562 = vmatprep.subr.bf16.mxu0 %v3497
      %3563 = vmatpush1.bf16.msra.mxu0 %v3496
      %3564 = vmatprep.subr.bf16.mxu0 %v3539
      %3565 = vmatpush1.bf16.msra.mxu0 %v3536
      %3566 = vmatprep.subr.bf16.mxu0 0
      %3567 = vmatpush1.bf16.msra.mxu0 0
      %3568 = vmatprep.subr.bf16.mxu0 0
      %3569 = vmatpush1.bf16.msra.mxu0 0
      %3570 = vmatprep.subr.bf16.mxu0 0
      %3571 = vmatpush1.bf16.msra.mxu0 0
      %3572 = vmatprep.subr.bf16.mxu0 0
      %3573 = vmatpush1.bf16.msra.mxu0 0
      %3574 = vmatprep.subr.bf16.mxu0 0
      %3575 = vmatpush1.bf16.msra.mxu0 0
      %3576 = vmatprep.mubr.bf16.mxu0 %v3533
      %3577 = vmatmul.mubr.bf16.gmra.mrb[0].mxu0 %v3361
      %v3578 = vpop.f32.mrb[0].mxu0
      %v3579 = vadd.f32 0.0, %v3578
      %v3580 = vpop.f32.mrb[0].mxu0
      %v3581 = vadd.f32 0.0, %v3580
      %v3582 = vpop.f32.mrb[0].mxu0
      %v3583 = vadd.f32 0.0, %v3582
      %v3584 = vpop.f32.mrb[0].mxu0
      %v3585 = vadd.f32 0.0, %v3584
      %3586 = vdwg.mxu0
      %3587 = vmatprep.subr.bf16.mxu0 0
      %3588 = vmatpush1.bf16.msra.mxu0 %v3471
      %3589 = vmatprep.subr.bf16.mxu0 0
      %3590 = vmatpush1.bf16.msra.mxu0 %v3474
      %3591 = vmatprep.subr.bf16.mxu0 0
      %3592 = vmatpush1.bf16.msra.mxu0 %v3477
      %3593 = vmatprep.subr.bf16.mxu0 0
      %3594 = vmatpush1.bf16.msra.mxu0 %v3480
      %3595 = vmatprep.subr.bf16.mxu0 0
      %3596 = vmatpush1.bf16.msra.mxu0 %v3483
      %3597 = vmatprep.subr.bf16.mxu0 0
      %3598 = vmatpush1.bf16.msra.mxu0 %v3486
      %3599 = vmatprep.subr.bf16.mxu0 0
      %3600 = vmatpush1.bf16.msra.mxu0 %v3489
      %3601 = vmatprep.subr.bf16.mxu0 0
      %3602 = vmatpush1.bf16.msra.mxu0 %v3492
      %3603 = vmatprep.subr.bf16.mxu0 0
      %3604 = vmatpush1.bf16.msra.mxu0 %v3495
      %3605 = vmatprep.subr.bf16.mxu0 0
      %3606 = vmatpush1.bf16.msra.mxu0 %v3498
      %3607 = vmatprep.subr.bf16.mxu0 0
      %3608 = vmatpush1.bf16.msra.mxu0 %v3542
      %3609 = vmatprep.subr.bf16.mxu0 0
      %3610 = vmatpush1.bf16.msra.mxu0 0
      %3611 = vmatprep.subr.bf16.mxu0 0
      %3612 = vmatpush1.bf16.msra.mxu0 0
      %3613 = vmatprep.subr.bf16.mxu0 0
      %3614 = vmatpush1.bf16.msra.mxu0 0
      %3615 = vmatprep.subr.bf16.mxu0 0
      %3616 = vmatpush1.bf16.msra.mxu0 0
      %3617 = vmatprep.subr.bf16.mxu0 0
      %3618 = vmatpush1.bf16.msra.mxu0 0
      %3619 = vmatprep.mubr.bf16.mxu0 %v3533
      %3620 = vmatmul.mubr.bf16.gmra.mrb[0].mxu0 %v3361
      %v3621 = vpop.f32.mrb[0].mxu0
      %v3622 = vadd.f32 0.0, %v3621
      %v3623 = vpop.f32.mrb[0].mxu0
      %v3624 = vpop.f32.mrb[0].mxu0
      %v3625 = vadd.f32 0.0, %v3624
      %v3626 = vpop.f32.mrb[0].mxu0
      %3627 = vdwg.mxu0
      %v3628 = vadd.f32 %v3267, %v3579
      %v3629 = vadd.f32 %v3269, %v3581
      %v3630 = vadd.f32 %v3310, %v3622
      %v3631 = vadd.f32 %v3271, %v3583
      %v3632 = vadd.f32 %v3273, %v3585
      %v3633 = vadd.f32 %v3313, %v3625
      %s3634 = scalar_lea.vmem %s5, 756
      %v3635 = vld [vmem:[%s3634] sm:$0xff]
      %v3636 = vld [vmem:[%s3634 + $0x8] sm:$0xf]
      %v3637 = vld [vmem:[%s3634 + $0xc] sm:$0xff]
      %v3638 = vld [vmem:[%s3634 + $0x14] sm:$0xf]
      %v3639 = vld [vmem:[%s3634 + $0x18] sm:$0xff]
      %v3640 = vld [vmem:[%s3634 + $0x20] sm:$0xf]
      %v3641 = vld [vmem:[%s3634 + $0x24] sm:$0xff]
      %v3642 = vld [vmem:[%s3634 + $0x2c] sm:$0xf]
      %v3643 = vld [vmem:[%s3634 + $0x30] sm:$0xff]
      %v3644 = vld [vmem:[%s3634 + $0x38] sm:$0xf]
      %v3645 = vld [vmem:[%s3634 + $0x3c] sm:$0xff]
      %v3646 = vld [vmem:[%s3634 + $0x44] sm:$0xf]
      %v3647 = vld [vmem:[%s3634 + $0x48] sm:$0xff]
      %v3648 = vld [vmem:[%s3634 + $0x50] sm:$0xf]
      %v3649 = vld [vmem:[%s3634 + $0x54] sm:$0xff]
      %v3650 = vld [vmem:[%s3634 + $0x5c] sm:$0xf]
      %v3651 = vld [vmem:[%s3634 + $0x60] sm:$0xff]
      %v3652 = vld [vmem:[%s3634 + $0x68] sm:$0xf]
      %v3653 = vld [vmem:[%s3634 + $0x6c] sm:$0xff]
      %v3654 = vld [vmem:[%s3634 + $0x74] sm:$0xf]
      %v3655 = vld [vmem:[%s3634 + $0x78] sm:$0xff]
      %v3656 = vld [vmem:[%s3634 + $0x80] sm:$0xf]
      %v3657 = vld [vmem:[%s3634 + $0x84] sm:$0xff]
      %v3658 = vld [vmem:[%s3634 + $0x8c] sm:$0xf]
      %v3659 = vld [vmem:[%s3634 + $0x90] sm:$0xff]
      %v3660 = vld [vmem:[%s3634 + $0x98] sm:$0xf]
      %v3661 = vld [vmem:[%s3634 + $0x9c] sm:$0xff]
      %v3662 = vld [vmem:[%s3634 + $0xa4] sm:$0xf]
      %v3663 = vld [vmem:[%s3634 + $0xa8] sm:$0xff]
      %v3664 = vld [vmem:[%s3634 + $0xb0] sm:$0xf]
      %v3665 = vld [vmem:[%s3634 + $0xb4] sm:$0xff]
      %v3666 = vld [vmem:[%s3634 + $0xbc] sm:$0xf]
      %v3667 = vld [vmem:[%s3634 + $0xc0] sm:$0xff]
      %v3668 = vld [vmem:[%s3634 + $0xc8] sm:$0xf]
      %v3669 = vld [vmem:[%s3634 + $0xcc] sm:$0xff]
      %v3670 = vld [vmem:[%s3634 + $0xd4] sm:$0xf]
      %v3671 = vld [vmem:[%s3634 + $0xd8] sm:$0xff]
      %v3672 = vld [vmem:[%s3634 + $0xe0] sm:$0xf]
      %v3673 = vld [vmem:[%s3634 + $0xe4] sm:$0xff]
      %v3674 = vld [vmem:[%s3634 + $0xec] sm:$0xf]
      %v3675 = vld [vmem:[%s3634 + $0xf0] sm:$0xff]
      %v3676 = vld [vmem:[%s3634 + $0xf8] sm:$0xf]
      %v3677 = vrot.slane %v2773, 1
      %v3678 = vrot.slane %v2775, 2
      %v3679 = vor.u32 %v3677, %v3678
      %v3680 = vrot.slane %v2780, 1
      %v3681 = vrot.slane %v2782, 2
      %v3682 = vor.u32 %v3680, %v3681
      %v3726 = vunpack.c.l.b16 %v3635
      %v3727 = vunpack.c.h.b16 %v3635
      %v3728 = vunpack.c.l.b16 %v3636
      %v3729 = vunpack.c.l.b16 %v3637
      %v3730 = vunpack.c.h.b16 %v3637
      %v3731 = vunpack.c.l.b16 %v3638
      %v3732 = vunpack.c.l.b16 %v3639
      %v3733 = vunpack.c.h.b16 %v3639
      %v3734 = vunpack.c.l.b16 %v3640
      %v3735 = vunpack.c.l.b16 %v3641
      %v3736 = vunpack.c.h.b16 %v3641
      %v3737 = vunpack.c.l.b16 %v3642
      %v3738 = vunpack.c.l.b16 %v3643
      %v3739 = vunpack.c.h.b16 %v3643
      %v3740 = vunpack.c.l.b16 %v3644
      %v3741 = vunpack.c.l.b16 %v3645
      %v3742 = vunpack.c.h.b16 %v3645
      %v3743 = vunpack.c.l.b16 %v3646
      %v3744 = vunpack.c.l.b16 %v3647
      %v3745 = vunpack.c.h.b16 %v3647
      %v3746 = vunpack.c.l.b16 %v3648
      %v3747 = vunpack.c.l.b16 %v3649
      %v3748 = vunpack.c.h.b16 %v3649
      %v3749 = vunpack.c.l.b16 %v3650
      %v3750 = vunpack.c.l.b16 %v3651
      %v3751 = vunpack.c.h.b16 %v3651
      %v3752 = vunpack.c.l.b16 %v3652
      %v3753 = vunpack.c.l.b16 %v3653
      %v3754 = vunpack.c.h.b16 %v3653
      %v3755 = vunpack.c.l.b16 %v3654
      %v3756 = vunpack.c.l.b16 %v3655
      %v3757 = vunpack.c.h.b16 %v3655
      %v3758 = vunpack.c.l.b16 %v3656
      %v3759 = vunpack.c.l.b16 %v3657
      %v3760 = vunpack.c.h.b16 %v3657
      %v3761 = vunpack.c.l.b16 %v3658
      %v3762 = vunpack.c.l.b16 %v3659
      %v3763 = vunpack.c.h.b16 %v3659
      %v3764 = vunpack.c.l.b16 %v3660
      %v3765 = vunpack.c.l.b16 %v3661
      %v3766 = vunpack.c.h.b16 %v3661
      %v3767 = vunpack.c.l.b16 %v3662
      %v3768 = vunpack.c.l.b16 %v3663
      %v3769 = vunpack.c.h.b16 %v3663
      %v3770 = vunpack.c.l.b16 %v3664
      %v3771 = vunpack.c.l.b16 %v3665
      %v3772 = vunpack.c.h.b16 %v3665
      %v3773 = vunpack.c.l.b16 %v3666
      %v3774 = vunpack.c.l.b16 %v3667
      %v3775 = vunpack.c.h.b16 %v3667
      %v3776 = vunpack.c.l.b16 %v3668
      %v3777 = vunpack.c.l.b16 %v3669
      %v3778 = vunpack.c.h.b16 %v3669
      %v3779 = vunpack.c.l.b16 %v3670
      %v3780 = vunpack.c.l.b16 %v3671
      %v3781 = vunpack.c.h.b16 %v3671
      %v3782 = vunpack.c.l.b16 %v3672
      %v3783 = vunpack.c.l.b16 %v3673
      %v3784 = vunpack.c.h.b16 %v3673
      %v3785 = vunpack.c.l.b16 %v3674
      %v3786 = vunpack.c.l.b16 %v3675
      %v3787 = vunpack.c.h.b16 %v3675
      %v3788 = vunpack.c.l.b16 %v3676
      %v3789 = vpack.c.b16 %v3729, %v3726
      %v3790 = vpack.c.b16 %v3730, %v3727
      %v3791 = vpack.c.b16 %v3731, %v3728
      %v3792 = vpack.c.b16 %v3735, %v3732
      %v3793 = vpack.c.b16 %v3736, %v3733
      %v3794 = vpack.c.b16 %v3737, %v3734
      %v3795 = vpack.c.b16 %v3741, %v3738
      %v3796 = vpack.c.b16 %v3742, %v3739
      %v3797 = vpack.c.b16 %v3743, %v3740
      %v3798 = vpack.c.b16 %v3747, %v3744
      %v3799 = vpack.c.b16 %v3748, %v3745
      %v3800 = vpack.c.b16 %v3749, %v3746
      %v3801 = vpack.c.b16 %v3753, %v3750
      %v3802 = vpack.c.b16 %v3754, %v3751
      %v3803 = vpack.c.b16 %v3755, %v3752
      %v3804 = vpack.c.b16 %v3759, %v3756
      %v3805 = vpack.c.b16 %v3760, %v3757
      %v3806 = vpack.c.b16 %v3761, %v3758
      %v3807 = vpack.c.b16 %v3765, %v3762
      %v3808 = vpack.c.b16 %v3766, %v3763
      %v3809 = vpack.c.b16 %v3767, %v3764
      %v3810 = vpack.c.b16 %v3771, %v3768
      %v3811 = vpack.c.b16 %v3772, %v3769
      %v3812 = vpack.c.b16 %v3773, %v3770
      %v3813 = vpack.c.b16 %v3777, %v3774
      %v3814 = vpack.c.b16 %v3778, %v3775
      %v3815 = vpack.c.b16 %v3779, %v3776
      %v3816 = vpack.c.b16 %v3783, %v3780
      %v3817 = vpack.c.b16 %v3784, %v3781
      %v3818 = vpack.c.b16 %v3785, %v3782
      %v3819 = vpack.c.b16 %v3786, %v3786
      %v3820 = vpack.c.b16 %v3787, %v3787
      %v3821 = vpack.c.b16 %v3788, %v3788
      %v3853 = vsel %vm2955, %v3682, 0
      %v3856 = vsel %vm2959, %v3819, 0
      %v3859 = vsel %vm2959, %v3820, 0
      %v3862 = vsel %vm2959, %v3821, 0
      %3864 = vmatprep.subr.bf16.mxu0 %v3790
      %3865 = vmatpush1.bf16.msra.mxu0 %v3789
      %3866 = vmatprep.subr.bf16.mxu0 %v3793
      %3867 = vmatpush1.bf16.msra.mxu0 %v3792
      %3868 = vmatprep.subr.bf16.mxu0 %v3796
      %3869 = vmatpush1.bf16.msra.mxu0 %v3795
      %3870 = vmatprep.subr.bf16.mxu0 %v3799
      %3871 = vmatpush1.bf16.msra.mxu0 %v3798
      %3872 = vmatprep.subr.bf16.mxu0 %v3802
      %3873 = vmatpush1.bf16.msra.mxu0 %v3801
      %3874 = vmatprep.subr.bf16.mxu0 %v3805
      %3875 = vmatpush1.bf16.msra.mxu0 %v3804
      %3876 = vmatprep.subr.bf16.mxu0 %v3808
      %3877 = vmatpush1.bf16.msra.mxu0 %v3807
      %3878 = vmatprep.subr.bf16.mxu0 %v3811
      %3879 = vmatpush1.bf16.msra.mxu0 %v3810
      %3880 = vmatprep.subr.bf16.mxu0 %v3814
      %3881 = vmatpush1.bf16.msra.mxu0 %v3813
      %3882 = vmatprep.subr.bf16.mxu0 %v3817
      %3883 = vmatpush1.bf16.msra.mxu0 %v3816
      %3884 = vmatprep.subr.bf16.mxu0 %v3859
      %3885 = vmatpush1.bf16.msra.mxu0 %v3856
      %3886 = vmatprep.subr.bf16.mxu0 0
      %3887 = vmatpush1.bf16.msra.mxu0 0
      %3888 = vmatprep.subr.bf16.mxu0 0
      %3889 = vmatpush1.bf16.msra.mxu0 0
      %3890 = vmatprep.subr.bf16.mxu0 0
      %3891 = vmatpush1.bf16.msra.mxu0 0
      %3892 = vmatprep.subr.bf16.mxu0 0
      %3893 = vmatpush1.bf16.msra.mxu0 0
      %3894 = vmatprep.subr.bf16.mxu0 0
      %3895 = vmatpush1.bf16.msra.mxu0 0
      %3896 = vmatprep.mubr.bf16.mxu0 %v3853
      %3897 = vmatmul.mubr.bf16.gmra.mrb[0].mxu0 %v3679
      %v3898 = vpop.f32.mrb[0].mxu0
      %v3899 = vadd.f32 0.0, %v3898
      %v3900 = vpop.f32.mrb[0].mxu0
      %v3901 = vadd.f32 0.0, %v3900
      %v3902 = vpop.f32.mrb[0].mxu0
      %v3903 = vadd.f32 0.0, %v3902
      %v3904 = vpop.f32.mrb[0].mxu0
      %v3905 = vadd.f32 0.0, %v3904
      %3906 = vdwg.mxu0
      %3907 = vmatprep.subr.bf16.mxu0 0
      %3908 = vmatpush1.bf16.msra.mxu0 %v3791
      %3909 = vmatprep.subr.bf16.mxu0 0
      %3910 = vmatpush1.bf16.msra.mxu0 %v3794
      %3911 = vmatprep.subr.bf16.mxu0 0
      %3912 = vmatpush1.bf16.msra.mxu0 %v3797
      %3913 = vmatprep.subr.bf16.mxu0 0
      %3914 = vmatpush1.bf16.msra.mxu0 %v3800
      %3915 = vmatprep.subr.bf16.mxu0 0
      %3916 = vmatpush1.bf16.msra.mxu0 %v3803
      %3917 = vmatprep.subr.bf16.mxu0 0
      %3918 = vmatpush1.bf16.msra.mxu0 %v3806
      %3919 = vmatprep.subr.bf16.mxu0 0
      %3920 = vmatpush1.bf16.msra.mxu0 %v3809
      %3921 = vmatprep.subr.bf16.mxu0 0
      %3922 = vmatpush1.bf16.msra.mxu0 %v3812
      %3923 = vmatprep.subr.bf16.mxu0 0
      %3924 = vmatpush1.bf16.msra.mxu0 %v3815
      %3925 = vmatprep.subr.bf16.mxu0 0
      %3926 = vmatpush1.bf16.msra.mxu0 %v3818
      %3927 = vmatprep.subr.bf16.mxu0 0
      %3928 = vmatpush1.bf16.msra.mxu0 %v3862
      %3929 = vmatprep.subr.bf16.mxu0 0
      %3930 = vmatpush1.bf16.msra.mxu0 0
      %3931 = vmatprep.subr.bf16.mxu0 0
      %3932 = vmatpush1.bf16.msra.mxu0 0
      %3933 = vmatprep.subr.bf16.mxu0 0
      %3934 = vmatpush1.bf16.msra.mxu0 0
      %3935 = vmatprep.subr.bf16.mxu0 0
      %3936 = vmatpush1.bf16.msra.mxu0 0
      %3937 = vmatprep.subr.bf16.mxu0 0
      %3938 = vmatpush1.bf16.msra.mxu0 0
      %3939 = vmatprep.mubr.bf16.mxu0 %v3853
      %3940 = vmatmul.mubr.bf16.gmra.mrb[0].mxu0 %v3679
      %v3941 = vpop.f32.mrb[0].mxu0
      %v3942 = vadd.f32 0.0, %v3941
      %v3943 = vpop.f32.mrb[0].mxu0
      %v3944 = vpop.f32.mrb[0].mxu0
      %v3945 = vadd.f32 0.0, %v3944
      %v3946 = vpop.f32.mrb[0].mxu0
      %3947 = vdwg.mxu0
      %v3948 = vadd.f32 %v3628, %v3899
      %v3949 = vadd.f32 %v3629, %v3901
      %v3950 = vadd.f32 %v3630, %v3942
      %v3951 = vadd.f32 %v3631, %v3903
      %v3952 = vadd.f32 %v3632, %v3905
      %v3953 = vadd.f32 %v3633, %v3945
      %s3954 = scalar_lea.vmem %s5, 1008
      %v3955 = vld [vmem:[%s3954] sm:$0xff]
      %v3956 = vld [vmem:[%s3954 + $0x8] sm:$0xf]
      %v3957 = vld [vmem:[%s3954 + $0xc] sm:$0xff]
      %v3958 = vld [vmem:[%s3954 + $0x14] sm:$0xf]
      %v3959 = vld [vmem:[%s3954 + $0x18] sm:$0xff]
      %v3960 = vld [vmem:[%s3954 + $0x20] sm:$0xf]
      %v3961 = vld [vmem:[%s3954 + $0x24] sm:$0xff]
      %v3962 = vld [vmem:[%s3954 + $0x2c] sm:$0xf]
      %v3963 = vld [vmem:[%s3954 + $0x30] sm:$0xff]
      %v3964 = vld [vmem:[%s3954 + $0x38] sm:$0xf]
      %v3965 = vld [vmem:[%s3954 + $0x3c] sm:$0xff]
      %v3966 = vld [vmem:[%s3954 + $0x44] sm:$0xf]
      %v3967 = vld [vmem:[%s3954 + $0x48] sm:$0xff]
      %v3968 = vld [vmem:[%s3954 + $0x50] sm:$0xf]
      %v3969 = vld [vmem:[%s3954 + $0x54] sm:$0xff]
      %v3970 = vld [vmem:[%s3954 + $0x5c] sm:$0xf]
      %v3971 = vld [vmem:[%s3954 + $0x60] sm:$0xff]
      %v3972 = vld [vmem:[%s3954 + $0x68] sm:$0xf]
      %v3973 = vld [vmem:[%s3954 + $0x6c] sm:$0xff]
      %v3974 = vld [vmem:[%s3954 + $0x74] sm:$0xf]
      %v3975 = vld [vmem:[%s3954 + $0x78] sm:$0xff]
      %v3976 = vld [vmem:[%s3954 + $0x80] sm:$0xf]
      %v3977 = vld [vmem:[%s3954 + $0x84] sm:$0xff]
      %v3978 = vld [vmem:[%s3954 + $0x8c] sm:$0xf]
      %v3979 = vld [vmem:[%s3954 + $0x90] sm:$0xff]
      %v3980 = vld [vmem:[%s3954 + $0x98] sm:$0xf]
      %v3981 = vld [vmem:[%s3954 + $0x9c] sm:$0xff]
      %v3982 = vld [vmem:[%s3954 + $0xa4] sm:$0xf]
      %v3983 = vld [vmem:[%s3954 + $0xa8] sm:$0xff]
      %v3984 = vld [vmem:[%s3954 + $0xb0] sm:$0xf]
      %v3985 = vld [vmem:[%s3954 + $0xb4] sm:$0xff]
      %v3986 = vld [vmem:[%s3954 + $0xbc] sm:$0xf]
      %v3987 = vld [vmem:[%s3954 + $0xc0] sm:$0xff]
      %v3988 = vld [vmem:[%s3954 + $0xc8] sm:$0xf]
      %v3989 = vld [vmem:[%s3954 + $0xcc] sm:$0xff]
      %v3990 = vld [vmem:[%s3954 + $0xd4] sm:$0xf]
      %v3991 = vld [vmem:[%s3954 + $0xd8] sm:$0xff]
      %v3992 = vld [vmem:[%s3954 + $0xe0] sm:$0xf]
      %v3993 = vld [vmem:[%s3954 + $0xe4] sm:$0xff]
      %v3994 = vld [vmem:[%s3954 + $0xec] sm:$0xf]
      %v3995 = vld [vmem:[%s3954 + $0xf0] sm:$0xff]
      %v3996 = vld [vmem:[%s3954 + $0xf8] sm:$0xf]
      %v3997 = vrot.slane %v2685, 2
      %v3998 = vrot.slane %v2686, 2
      %v4042 = vunpack.c.l.b16 %v3955
      %v4043 = vunpack.c.h.b16 %v3955
      %v4044 = vunpack.c.l.b16 %v3956
      %v4045 = vunpack.c.l.b16 %v3957
      %v4046 = vunpack.c.h.b16 %v3957
      %v4047 = vunpack.c.l.b16 %v3958
      %v4048 = vunpack.c.l.b16 %v3959
      %v4049 = vunpack.c.h.b16 %v3959
      %v4050 = vunpack.c.l.b16 %v3960
      %v4051 = vunpack.c.l.b16 %v3961
      %v4052 = vunpack.c.h.b16 %v3961
      %v4053 = vunpack.c.l.b16 %v3962
      %v4054 = vunpack.c.l.b16 %v3963
      %v4055 = vunpack.c.h.b16 %v3963
      %v4056 = vunpack.c.l.b16 %v3964
      %v4057 = vunpack.c.l.b16 %v3965
      %v4058 = vunpack.c.h.b16 %v3965
      %v4059 = vunpack.c.l.b16 %v3966
      %v4060 = vunpack.c.l.b16 %v3967
      %v4061 = vunpack.c.h.b16 %v3967
      %v4062 = vunpack.c.l.b16 %v3968
      %v4063 = vunpack.c.l.b16 %v3969
      %v4064 = vunpack.c.h.b16 %v3969
      %v4065 = vunpack.c.l.b16 %v3970
      %v4066 = vunpack.c.l.b16 %v3971
      %v4067 = vunpack.c.h.b16 %v3971
      %v4068 = vunpack.c.l.b16 %v3972
      %v4069 = vunpack.c.l.b16 %v3973
      %v4070 = vunpack.c.h.b16 %v3973
      %v4071 = vunpack.c.l.b16 %v3974
      %v4072 = vunpack.c.l.b16 %v3975
      %v4073 = vunpack.c.h.b16 %v3975
      %v4074 = vunpack.c.l.b16 %v3976
      %v4075 = vunpack.c.l.b16 %v3977
      %v4076 = vunpack.c.h.b16 %v3977
      %v4077 = vunpack.c.l.b16 %v3978
      %v4078 = vunpack.c.l.b16 %v3979
      %v4079 = vunpack.c.h.b16 %v3979
      %v4080 = vunpack.c.l.b16 %v3980
      %v4081 = vunpack.c.l.b16 %v3981
      %v4082 = vunpack.c.h.b16 %v3981
      %v4083 = vunpack.c.l.b16 %v3982
      %v4084 = vunpack.c.l.b16 %v3983
      %v4085 = vunpack.c.h.b16 %v3983
      %v4086 = vunpack.c.l.b16 %v3984
      %v4087 = vunpack.c.l.b16 %v3985
      %v4088 = vunpack.c.h.b16 %v3985
      %v4089 = vunpack.c.l.b16 %v3986
      %v4090 = vunpack.c.l.b16 %v3987
      %v4091 = vunpack.c.h.b16 %v3987
      %v4092 = vunpack.c.l.b16 %v3988
      %v4093 = vunpack.c.l.b16 %v3989
      %v4094 = vunpack.c.h.b16 %v3989
      %v4095 = vunpack.c.l.b16 %v3990
      %v4096 = vunpack.c.l.b16 %v3991
      %v4097 = vunpack.c.h.b16 %v3991
      %v4098 = vunpack.c.l.b16 %v3992
      %v4099 = vunpack.c.l.b16 %v3993
      %v4100 = vunpack.c.h.b16 %v3993
      %v4101 = vunpack.c.l.b16 %v3994
      %v4102 = vunpack.c.l.b16 %v3995
      %v4103 = vunpack.c.h.b16 %v3995
      %v4104 = vunpack.c.l.b16 %v3996
      %v4105 = vpack.c.b16 %v4045, %v4042
      %v4106 = vpack.c.b16 %v4046, %v4043
      %v4107 = vpack.c.b16 %v4047, %v4044
      %v4108 = vpack.c.b16 %v4051, %v4048
      %v4109 = vpack.c.b16 %v4052, %v4049
      %v4110 = vpack.c.b16 %v4053, %v4050
      %v4111 = vpack.c.b16 %v4057, %v4054
      %v4112 = vpack.c.b16 %v4058, %v4055
      %v4113 = vpack.c.b16 %v4059, %v4056
      %v4114 = vpack.c.b16 %v4063, %v4060
      %v4115 = vpack.c.b16 %v4064, %v4061
      %v4116 = vpack.c.b16 %v4065, %v4062
      %v4117 = vpack.c.b16 %v4069, %v4066
      %v4118 = vpack.c.b16 %v4070, %v4067
      %v4119 = vpack.c.b16 %v4071, %v4068
      %v4120 = vpack.c.b16 %v4075, %v4072
      %v4121 = vpack.c.b16 %v4076, %v4073
      %v4122 = vpack.c.b16 %v4077, %v4074
      %v4123 = vpack.c.b16 %v4081, %v4078
      %v4124 = vpack.c.b16 %v4082, %v4079
      %v4125 = vpack.c.b16 %v4083, %v4080
      %v4126 = vpack.c.b16 %v4087, %v4084
      %v4127 = vpack.c.b16 %v4088, %v4085
      %v4128 = vpack.c.b16 %v4089, %v4086
      %v4129 = vpack.c.b16 %v4093, %v4090
      %v4130 = vpack.c.b16 %v4094, %v4091
      %v4131 = vpack.c.b16 %v4095, %v4092
      %v4132 = vpack.c.b16 %v4099, %v4096
      %v4133 = vpack.c.b16 %v4100, %v4097
      %v4134 = vpack.c.b16 %v4101, %v4098
      %v4135 = vpack.c.b16 %v4102, %v4102
      %v4136 = vpack.c.b16 %v4103, %v4103
      %v4137 = vpack.c.b16 %v4104, %v4104
      %v4169 = vsel %vm2955, %v3998, 0
      %v4172 = vsel %vm2959, %v4135, 0
      %v4175 = vsel %vm2959, %v4136, 0
      %v4178 = vsel %vm2959, %v4137, 0
      %4180 = vmatprep.subr.bf16.mxu0 %v4106
      %4181 = vmatpush1.bf16.msra.mxu0 %v4105
      %4182 = vmatprep.subr.bf16.mxu0 %v4109
      %4183 = vmatpush1.bf16.msra.mxu0 %v4108
      %4184 = vmatprep.subr.bf16.mxu0 %v4112
      %4185 = vmatpush1.bf16.msra.mxu0 %v4111
      %4186 = vmatprep.subr.bf16.mxu0 %v4115
      %4187 = vmatpush1.bf16.msra.mxu0 %v4114
      %4188 = vmatprep.subr.bf16.mxu0 %v4118
      %4189 = vmatpush1.bf16.msra.mxu0 %v4117
      %4190 = vmatprep.subr.bf16.mxu0 %v4121
      %4191 = vmatpush1.bf16.msra.mxu0 %v4120
      %4192 = vmatprep.subr.bf16.mxu0 %v4124
      %4193 = vmatpush1.bf16.msra.mxu0 %v4123
      %4194 = vmatprep.subr.bf16.mxu0 %v4127
      %4195 = vmatpush1.bf16.msra.mxu0 %v4126
      %4196 = vmatprep.subr.bf16.mxu0 %v4130
      %4197 = vmatpush1.bf16.msra.mxu0 %v4129
      %4198 = vmatprep.subr.bf16.mxu0 %v4133
      %4199 = vmatpush1.bf16.msra.mxu0 %v4132
      %4200 = vmatprep.subr.bf16.mxu0 %v4175
      %4201 = vmatpush1.bf16.msra.mxu0 %v4172
      %4202 = vmatprep.subr.bf16.mxu0 0
      %4203 = vmatpush1.bf16.msra.mxu0 0
      %4204 = vmatprep.subr.bf16.mxu0 0
      %4205 = vmatpush1.bf16.msra.mxu0 0
      %4206 = vmatprep.subr.bf16.mxu0 0
      %4207 = vmatpush1.bf16.msra.mxu0 0
      %4208 = vmatprep.subr.bf16.mxu0 0
      %4209 = vmatpush1.bf16.msra.mxu0 0
      %4210 = vmatprep.subr.bf16.mxu0 0
      %4211 = vmatpush1.bf16.msra.mxu0 0
      %4212 = vmatprep.mubr.bf16.mxu0 %v4169
      %4213 = vmatmul.mubr.bf16.gmra.mrb[0].mxu0 %v3997
      %v4214 = vpop.f32.mrb[0].mxu0
      %v4215 = vadd.f32 0.0, %v4214
      %v4216 = vpop.f32.mrb[0].mxu0
      %v4217 = vadd.f32 0.0, %v4216
      %v4218 = vpop.f32.mrb[0].mxu0
      %v4219 = vadd.f32 0.0, %v4218
      %v4220 = vpop.f32.mrb[0].mxu0
      %v4221 = vadd.f32 0.0, %v4220
      %4222 = vdwg.mxu0
      %4223 = vmatprep.subr.bf16.mxu0 0
      %4224 = vmatpush1.bf16.msra.mxu0 %v4107
      %4225 = vmatprep.subr.bf16.mxu0 0
      %4226 = vmatpush1.bf16.msra.mxu0 %v4110
      %4227 = vmatprep.subr.bf16.mxu0 0
      %4228 = vmatpush1.bf16.msra.mxu0 %v4113
      %4229 = vmatprep.subr.bf16.mxu0 0
      %4230 = vmatpush1.bf16.msra.mxu0 %v4116
      %4231 = vmatprep.subr.bf16.mxu0 0
      %4232 = vmatpush1.bf16.msra.mxu0 %v4119
      %4233 = vmatprep.subr.bf16.mxu0 0
      %4234 = vmatpush1.bf16.msra.mxu0 %v4122
      %4235 = vmatprep.subr.bf16.mxu0 0
      %4236 = vmatpush1.bf16.msra.mxu0 %v4125
      %4237 = vmatprep.subr.bf16.mxu0 0
      %4238 = vmatpush1.bf16.msra.mxu0 %v4128
      %4239 = vmatprep.subr.bf16.mxu0 0
      %4240 = vmatpush1.bf16.msra.mxu0 %v4131
      %4241 = vmatprep.subr.bf16.mxu0 0
      %4242 = vmatpush1.bf16.msra.mxu0 %v4134
      %4243 = vmatprep.subr.bf16.mxu0 0
      %4244 = vmatpush1.bf16.msra.mxu0 %v4178
      %4245 = vmatprep.subr.bf16.mxu0 0
      %4246 = vmatpush1.bf16.msra.mxu0 0
      %4247 = vmatprep.subr.bf16.mxu0 0
      %4248 = vmatpush1.bf16.msra.mxu0 0
      %4249 = vmatprep.subr.bf16.mxu0 0
      %4250 = vmatpush1.bf16.msra.mxu0 0
      %4251 = vmatprep.subr.bf16.mxu0 0
      %4252 = vmatpush1.bf16.msra.mxu0 0
      %4253 = vmatprep.subr.bf16.mxu0 0
      %4254 = vmatpush1.bf16.msra.mxu0 0
      %4255 = vmatprep.mubr.bf16.mxu0 %v4169
      %4256 = vmatmul.mubr.bf16.gmra.mrb[0].mxu0 %v3997
      %v4257 = vpop.f32.mrb[0].mxu0
      %v4258 = vadd.f32 0.0, %v4257
      %v4259 = vpop.f32.mrb[0].mxu0
      %v4260 = vpop.f32.mrb[0].mxu0
      %v4261 = vadd.f32 0.0, %v4260
      %v4262 = vpop.f32.mrb[0].mxu0
      %4263 = vdwg.mxu0
      %v4264 = vadd.f32 %v3948, %v4215
      %v4265 = vadd.f32 %v3949, %v4217
      %v4266 = vadd.f32 %v3950, %v4258
      %v4267 = vadd.f32 %v3951, %v4219
      %v4268 = vadd.f32 %v3952, %v4221
      %v4269 = vadd.f32 %v3953, %v4261
      %v4270 = vld [vmem:[%s6] sm:$0x7]
      %v4272 = vlaneseq
      %v4273 = vshrl.u32 %v4272, 7
      %v4274 = vsub.s32 0, %v4273
      %v4275 = vrot.slane %v4270, %v4274
      %v4276 = vlaneseq
      %v4277 = vshrl.u32 %v4276, 7
      %v4278 = vsub.s32 1, %v4277
      %v4279 = vrot.slane %v4270, %v4278
      %v4280 = vlaneseq
      %v4281 = vshrl.u32 %v4280, 7
      %v4282 = vsub.s32 2, %v4281
      %v4283 = vrot.slane %v4270, %v4282
      %v4287 = vadd.f32 %v4264, %v4275
      %v4288 = vadd.f32 %v4265, %v4279
      %v4289 = vadd.f32 %v4266, %v4283
      %v4290 = vadd.f32 %v4267, %v4275
      %v4291 = vadd.f32 %v4268, %v4279
      %v4292 = vadd.f32 %v4269, %v4283
      %v4293 = vmax.f32 %v4287, 0.0
      %v4294 = vmax.f32 %v4288, 0.0
      %v4295 = vmax.f32 %v4289, 0.0
      %v4296 = vmax.f32 %v4290, 0.0
      %v4297 = vmax.f32 %v4291, 0.0
      %v4298 = vmax.f32 %v4292, 0.0
      %v4299 = vpack.c.bf16 %v4296, %v4293
      %v4300 = vpack.c.bf16 %v4297, %v4294
      %v4301 = vpack.c.bf16 %v4298, %v4295
      %v4302 = vld [vmem:[%s7] sm:$0x7]
      %vm4303 = vcmask 80896
      %v4305 = vsel %vm4303, %v4302, 0
      %vm4307 = vcmask 1044480
      %v4309 = vsel %vm4307, %v4299, 0
      %v4312 = vsel %vm4307, %v4300, 0
      %v4315 = vsel %vm4307, %v4301, 0
      %4317 = vmatprep.subr.bf16.mxu0 %v4312
      %4318 = vmatpush1.bf16.msra.mxu0 %v4309
      %4319 = vmatprep.subr.bf16.mxu0 0
      %4320 = vmatpush1.bf16.msra.mxu0 0
      %4321 = vmatprep.subr.bf16.mxu0 0
      %4322 = vmatpush1.bf16.msra.mxu0 0
      %4323 = vmatprep.subr.bf16.mxu0 0
      %4324 = vmatpush1.bf16.msra.mxu0 0
      %4325 = vmatprep.subr.bf16.mxu0 0
      %4326 = vmatpush1.bf16.msra.mxu0 0
      %4327 = vmatprep.subr.bf16.mxu0 0
      %4328 = vmatpush1.bf16.msra.mxu0 0
      %4329 = vmatprep.subr.bf16.mxu0 0
      %4330 = vmatpush1.bf16.msra.mxu0 0
      %4331 = vmatprep.subr.bf16.mxu0 0
      %4332 = vmatpush1.bf16.msra.mxu0 0
      %4333 = vmatprep.subr.bf16.mxu0 0
      %4334 = vmatpush1.bf16.msra.mxu0 0
      %4335 = vmatprep.subr.bf16.mxu0 0
      %4336 = vmatpush1.bf16.msra.mxu0 0
      %4337 = vmatprep.subr.bf16.mxu0 0
      %4338 = vmatpush1.bf16.msra.mxu0 0
      %4339 = vmatprep.subr.bf16.mxu0 0
      %4340 = vmatpush1.bf16.msra.mxu0 0
      %4341 = vmatprep.subr.bf16.mxu0 0
      %4342 = vmatpush1.bf16.msra.mxu0 0
      %4343 = vmatprep.subr.bf16.mxu0 0
      %4344 = vmatpush1.bf16.msra.mxu0 0
      %4345 = vmatprep.subr.bf16.mxu0 0
      %4346 = vmatpush1.bf16.msra.mxu0 0
      %4347 = vmatprep.subr.bf16.mxu0 0
      %4348 = vmatpush1.bf16.msra.mxu0 0
      %4349 = vmatprep.mubr.bf16.mxu0 0
      %4350 = vmatmul.mubr.bf16.gmra.mrb[0].mxu0 %v4305
      %v4351 = vpop.f32.mrb[0].mxu0
      %v4352 = vadd.f32 0.0, %v4351
      %v4353 = vpop.f32.mrb[0].mxu0
      %v4354 = vadd.f32 0.0, %v4353
      %v4355 = vpop.f32.mrb[0].mxu0
      %v4356 = vpop.f32.mrb[0].mxu0
      %4357 = vdwg.mxu0
      %4358 = vmatprep.subr.bf16.mxu0 0
      %4359 = vmatpush1.bf16.msra.mxu0 %v4315
      %4360 = vmatprep.subr.bf16.mxu0 0
      %4361 = vmatpush1.bf16.msra.mxu0 0
      %4362 = vmatprep.subr.bf16.mxu0 0
      %4363 = vmatpush1.bf16.msra.mxu0 0
      %4364 = vmatprep.subr.bf16.mxu0 0
      %4365 = vmatpush1.bf16.msra.mxu0 0
      %4366 = vmatprep.subr.bf16.mxu0 0
      %4367 = vmatpush1.bf16.msra.mxu0 0
      %4368 = vmatprep.subr.bf16.mxu0 0
      %4369 = vmatpush1.bf16.msra.mxu0 0
      %4370 = vmatprep.subr.bf16.mxu0 0
      %4371 = vmatpush1.bf16.msra.mxu0 0
      %4372 = vmatprep.subr.bf16.mxu0 0
      %4373 = vmatpush1.bf16.msra.mxu0 0
      %4374 = vmatprep.subr.bf16.mxu0 0
      %4375 = vmatpush1.bf16.msra.mxu0 0
      %4376 = vmatprep.subr.bf16.mxu0 0
      %4377 = vmatpush1.bf16.msra.mxu0 0
      %4378 = vmatprep.subr.bf16.mxu0 0
      %4379 = vmatpush1.bf16.msra.mxu0 0
      %4380 = vmatprep.subr.bf16.mxu0 0
      %4381 = vmatpush1.bf16.msra.mxu0 0
      %4382 = vmatprep.subr.bf16.mxu0 0
      %4383 = vmatpush1.bf16.msra.mxu0 0
      %4384 = vmatprep.subr.bf16.mxu0 0
      %4385 = vmatpush1.bf16.msra.mxu0 0
      %4386 = vmatprep.subr.bf16.mxu0 0
      %4387 = vmatpush1.bf16.msra.mxu0 0
      %4388 = vmatprep.subr.bf16.mxu0 0
      %4389 = vmatpush1.bf16.msra.mxu0 0
      %4390 = vmatprep.mubr.bf16.mxu0 0
      %4391 = vmatmul.mubr.bf16.gmra.mrb[0].mxu0 %v4305
      %v4392 = vpop.f32.mrb[0].mxu0
      %v4393 = vadd.f32 0.0, %v4392
      %v4394 = vpop.f32.mrb[0].mxu0
      %v4395 = vpop.f32.mrb[0].mxu0
      %v4396 = vpop.f32.mrb[0].mxu0
      %4397 = vdwg.mxu0
      %s4398 = scalar_lea.vmem %s7, 4
      %v4399 = vld [vmem:[%s4398] sm:$0x7]
      %v4401 = vsel %vm4303, %v4399, 0
      %4403 = vmatprep.subr.bf16.mxu0 %v4312
      %4404 = vmatpush1.bf16.msra.mxu0 %v4309
      %4405 = vmatprep.subr.bf16.mxu0 0
      %4406 = vmatpush1.bf16.msra.mxu0 0
      %4407 = vmatprep.subr.bf16.mxu0 0
      %4408 = vmatpush1.bf16.msra.mxu0 0
      %4409 = vmatprep.subr.bf16.mxu0 0
      %4410 = vmatpush1.bf16.msra.mxu0 0
      %4411 = vmatprep.subr.bf16.mxu0 0
      %4412 = vmatpush1.bf16.msra.mxu0 0
      %4413 = vmatprep.subr.bf16.mxu0 0
      %4414 = vmatpush1.bf16.msra.mxu0 0
      %4415 = vmatprep.subr.bf16.mxu0 0
      %4416 = vmatpush1.bf16.msra.mxu0 0
      %4417 = vmatprep.subr.bf16.mxu0 0
      %4418 = vmatpush1.bf16.msra.mxu0 0
      %4419 = vmatprep.subr.bf16.mxu0 0
      %4420 = vmatpush1.bf16.msra.mxu0 0
      %4421 = vmatprep.subr.bf16.mxu0 0
      %4422 = vmatpush1.bf16.msra.mxu0 0
      %4423 = vmatprep.subr.bf16.mxu0 0
      %4424 = vmatpush1.bf16.msra.mxu0 0
      %4425 = vmatprep.subr.bf16.mxu0 0
      %4426 = vmatpush1.bf16.msra.mxu0 0
      %4427 = vmatprep.subr.bf16.mxu0 0
      %4428 = vmatpush1.bf16.msra.mxu0 0
      %4429 = vmatprep.subr.bf16.mxu0 0
      %4430 = vmatpush1.bf16.msra.mxu0 0
      %4431 = vmatprep.subr.bf16.mxu0 0
      %4432 = vmatpush1.bf16.msra.mxu0 0
      %4433 = vmatprep.subr.bf16.mxu0 0
      %4434 = vmatpush1.bf16.msra.mxu0 0
      %4435 = vmatprep.mubr.bf16.mxu0 0
      %4436 = vmatmul.mubr.bf16.gmra.mrb[0].mxu0 %v4401
      %v4437 = vpop.f32.mrb[0].mxu0
      %v4438 = vadd.f32 0.0, %v4437
      %v4439 = vpop.f32.mrb[0].mxu0
      %v4440 = vadd.f32 0.0, %v4439
      %v4441 = vpop.f32.mrb[0].mxu0
      %v4442 = vpop.f32.mrb[0].mxu0
      %4443 = vdwg.mxu0
      %4444 = vmatprep.subr.bf16.mxu0 0
      %4445 = vmatpush1.bf16.msra.mxu0 %v4315
      %4446 = vmatprep.subr.bf16.mxu0 0
      %4447 = vmatpush1.bf16.msra.mxu0 0
      %4448 = vmatprep.subr.bf16.mxu0 0
      %4449 = vmatpush1.bf16.msra.mxu0 0
      %4450 = vmatprep.subr.bf16.mxu0 0
      %4451 = vmatpush1.bf16.msra.mxu0 0
      %4452 = vmatprep.subr.bf16.mxu0 0
      %4453 = vmatpush1.bf16.msra.mxu0 0
      %4454 = vmatprep.subr.bf16.mxu0 0
      %4455 = vmatpush1.bf16.msra.mxu0 0
      %4456 = vmatprep.subr.bf16.mxu0 0
      %4457 = vmatpush1.bf16.msra.mxu0 0
      %4458 = vmatprep.subr.bf16.mxu0 0
      %4459 = vmatpush1.bf16.msra.mxu0 0
      %4460 = vmatprep.subr.bf16.mxu0 0
      %4461 = vmatpush1.bf16.msra.mxu0 0
      %4462 = vmatprep.subr.bf16.mxu0 0
      %4463 = vmatpush1.bf16.msra.mxu0 0
      %4464 = vmatprep.subr.bf16.mxu0 0
      %4465 = vmatpush1.bf16.msra.mxu0 0
      %4466 = vmatprep.subr.bf16.mxu0 0
      %4467 = vmatpush1.bf16.msra.mxu0 0
      %4468 = vmatprep.subr.bf16.mxu0 0
      %4469 = vmatpush1.bf16.msra.mxu0 0
      %4470 = vmatprep.subr.bf16.mxu0 0
      %4471 = vmatpush1.bf16.msra.mxu0 0
      %4472 = vmatprep.subr.bf16.mxu0 0
      %4473 = vmatpush1.bf16.msra.mxu0 0
      %4474 = vmatprep.subr.bf16.mxu0 0
      %4475 = vmatpush1.bf16.msra.mxu0 0
      %4476 = vmatprep.mubr.bf16.mxu0 0
      %4477 = vmatmul.mubr.bf16.gmra.mrb[0].mxu0 %v4401
      %v4478 = vpop.f32.mrb[0].mxu0
      %v4479 = vadd.f32 0.0, %v4478
      %v4480 = vpop.f32.mrb[0].mxu0
      %v4481 = vpop.f32.mrb[0].mxu0
      %v4482 = vpop.f32.mrb[0].mxu0
      %4483 = vdwg.mxu0
      %v4484 = vmax.f32 %v4352, %v4438
      %v4485 = vmax.f32 %v4354, %v4440
      %v4486 = vmax.f32 %v4393, %v4479
      %v4487 = vpack.c.bf16 %v4484, %v4484
      %v4488 = vpack.c.bf16 %v4485, %v4485
      %v4489 = vpack.c.bf16 %v4486, %v4486
      %v4490 = vld [vmem:[%s8] sm:$0xff]
      %v4491 = vld [vmem:[%s8 + $0x8] sm:$0xff]
      %v4492 = vld [vmem:[%s8 + $0x10] sm:$0xff]
      %v4493 = vld [vmem:[%s8 + $0x18] sm:$0xff]
      %v4494 = vld [vmem:[%s8 + $0x20] sm:$0xff]
      %v4495 = vld [vmem:[%s8 + $0x28] sm:$0xff]
      %v4496 = vld [vmem:[%s8 + $0x30] sm:$0xff]
      %v4497 = vld [vmem:[%s8 + $0x38] sm:$0xff]
      %v4498 = vld [vmem:[%s8 + $0x40] sm:$0xff]
      %v4499 = vld [vmem:[%s8 + $0x48] sm:$0xff]
      %v4500 = vld [vmem:[%s8 + $0x50] sm:$0xff]
      %v4501 = vld [vmem:[%s8 + $0x58] sm:$0xff]
      %v4502 = vld [vmem:[%s8 + $0x60] sm:$0xff]
      %v4503 = vld [vmem:[%s8 + $0x68] sm:$0xff]
      %v4504 = vld [vmem:[%s8 + $0x70] sm:$0xff]
      %v4505 = vld [vmem:[%s8 + $0x78] sm:$0xff]
      %v4506 = vld [vmem:[%s8 + $0x80] sm:$0xff]
      %v4507 = vld [vmem:[%s8 + $0x88] sm:$0xff]
      %v4508 = vld [vmem:[%s8 + $0x90] sm:$0xff]
      %v4509 = vld [vmem:[%s8 + $0x98] sm:$0xff]
      %v4510 = vld [vmem:[%s8 + $0xa0] sm:$0xff]
      %v4511 = vld [vmem:[%s8 + $0xa8] sm:$0xff]
      %v4512 = vld [vmem:[%s8 + $0xb0] sm:$0xff]
      %v4513 = vld [vmem:[%s8 + $0xb8] sm:$0xff]
      %v4514 = vld [vmem:[%s8 + $0xc0] sm:$0xff]
      %v4515 = vld [vmem:[%s8 + $0xc8] sm:$0xff]
      %v4516 = vld [vmem:[%s8 + $0xd0] sm:$0xff]
      %v4517 = vld [vmem:[%s8 + $0xd8] sm:$0xff]
      %v4518 = vld [vmem:[%s8 + $0xe0] sm:$0xff]
      %v4519 = vld [vmem:[%s8 + $0xe8] sm:$0xff]
      %v4520 = vld [vmem:[%s8 + $0xf0] sm:$0xff]
      %v4521 = vld [vmem:[%s8 + $0xf8] sm:$0xff]
      %v4522 = vld [vmem:[%s8 + $0x100] sm:$0xff]
      %v4523 = vld [vmem:[%s8 + $0x108] sm:$0xff]
      %v4524 = vld [vmem:[%s8 + $0x110] sm:$0xff]
      %v4525 = vld [vmem:[%s8 + $0x118] sm:$0xff]
      %v4526 = vld [vmem:[%s8 + $0x120] sm:$0xff]
      %v4527 = vld [vmem:[%s8 + $0x128] sm:$0xff]
      %v4528 = vld [vmem:[%s8 + $0x130] sm:$0xff]
      %v4529 = vld [vmem:[%s8 + $0x138] sm:$0xff]
      %v4570 = vunpack.c.l.b16 %v4490
      %v4571 = vunpack.c.h.b16 %v4490
      %v4572 = vunpack.c.l.b16 %v4491
      %v4573 = vunpack.c.h.b16 %v4491
      %v4574 = vunpack.c.l.b16 %v4492
      %v4575 = vunpack.c.h.b16 %v4492
      %v4576 = vunpack.c.l.b16 %v4493
      %v4577 = vunpack.c.h.b16 %v4493
      %v4578 = vunpack.c.l.b16 %v4494
      %v4579 = vunpack.c.h.b16 %v4494
      %v4580 = vunpack.c.l.b16 %v4495
      %v4581 = vunpack.c.h.b16 %v4495
      %v4582 = vunpack.c.l.b16 %v4496
      %v4583 = vunpack.c.h.b16 %v4496
      %v4584 = vunpack.c.l.b16 %v4497
      %v4585 = vunpack.c.h.b16 %v4497
      %v4586 = vunpack.c.l.b16 %v4498
      %v4587 = vunpack.c.h.b16 %v4498
      %v4588 = vunpack.c.l.b16 %v4499
      %v4589 = vunpack.c.h.b16 %v4499
      %v4590 = vunpack.c.l.b16 %v4500
      %v4591 = vunpack.c.h.b16 %v4500
      %v4592 = vunpack.c.l.b16 %v4501
      %v4593 = vunpack.c.h.b16 %v4501
      %v4594 = vunpack.c.l.b16 %v4502
      %v4595 = vunpack.c.h.b16 %v4502
      %v4596 = vunpack.c.l.b16 %v4503
      %v4597 = vunpack.c.h.b16 %v4503
      %v4598 = vunpack.c.l.b16 %v4504
      %v4599 = vunpack.c.h.b16 %v4504
      %v4600 = vunpack.c.l.b16 %v4505
      %v4601 = vunpack.c.h.b16 %v4505
      %v4602 = vunpack.c.l.b16 %v4506
      %v4603 = vunpack.c.h.b16 %v4506
      %v4604 = vunpack.c.l.b16 %v4507
      %v4605 = vunpack.c.h.b16 %v4507
      %v4606 = vunpack.c.l.b16 %v4508
      %v4607 = vunpack.c.h.b16 %v4508
      %v4608 = vunpack.c.l.b16 %v4509
      %v4609 = vunpack.c.h.b16 %v4509
      %v4610 = vunpack.c.l.b16 %v4510
      %v4611 = vunpack.c.h.b16 %v4510
      %v4612 = vunpack.c.l.b16 %v4511
      %v4613 = vunpack.c.h.b16 %v4511
      %v4614 = vunpack.c.l.b16 %v4512
      %v4615 = vunpack.c.h.b16 %v4512
      %v4616 = vunpack.c.l.b16 %v4513
      %v4617 = vunpack.c.h.b16 %v4513
      %v4618 = vunpack.c.l.b16 %v4514
      %v4619 = vunpack.c.h.b16 %v4514
      %v4620 = vunpack.c.l.b16 %v4515
      %v4621 = vunpack.c.h.b16 %v4515
      %v4622 = vunpack.c.l.b16 %v4516
      %v4623 = vunpack.c.h.b16 %v4516
      %v4624 = vunpack.c.l.b16 %v4517
      %v4625 = vunpack.c.h.b16 %v4517
      %v4626 = vunpack.c.l.b16 %v4518
      %v4627 = vunpack.c.h.b16 %v4518
      %v4628 = vunpack.c.l.b16 %v4519
      %v4629 = vunpack.c.h.b16 %v4519
      %v4630 = vunpack.c.l.b16 %v4520
      %v4631 = vunpack.c.h.b16 %v4520
      %v4632 = vunpack.c.l.b16 %v4521
      %v4633 = vunpack.c.h.b16 %v4521
      %v4634 = vunpack.c.l.b16 %v4522
      %v4635 = vunpack.c.h.b16 %v4522
      %v4636 = vunpack.c.l.b16 %v4523
      %v4637 = vunpack.c.h.b16 %v4523
      %v4638 = vunpack.c.l.b16 %v4524
      %v4639 = vunpack.c.h.b16 %v4524
      %v4640 = vunpack.c.l.b16 %v4525
      %v4641 = vunpack.c.h.b16 %v4525
      %v4642 = vunpack.c.l.b16 %v4526
      %v4643 = vunpack.c.h.b16 %v4526
      %v4644 = vunpack.c.l.b16 %v4527
      %v4645 = vunpack.c.h.b16 %v4527
      %v4646 = vunpack.c.l.b16 %v4528
      %v4647 = vunpack.c.h.b16 %v4528
      %v4648 = vunpack.c.l.b16 %v4529
      %v4649 = vunpack.c.h.b16 %v4529
      %v4650 = vpack.c.b16 %v4572, %v4570
      %v4651 = vpack.c.b16 %v4573, %v4571
      %v4652 = vpack.c.b16 %v4576, %v4574
      %v4653 = vpack.c.b16 %v4577, %v4575
      %v4654 = vpack.c.b16 %v4580, %v4578
      %v4655 = vpack.c.b16 %v4581, %v4579
      %v4656 = vpack.c.b16 %v4584, %v4582
      %v4657 = vpack.c.b16 %v4585, %v4583
      %v4658 = vpack.c.b16 %v4588, %v4586
      %v4659 = vpack.c.b16 %v4589, %v4587
      %v4660 = vpack.c.b16 %v4592, %v4590
      %v4661 = vpack.c.b16 %v4593, %v4591
      %v4662 = vpack.c.b16 %v4596, %v4594
      %v4663 = vpack.c.b16 %v4597, %v4595
      %v4664 = vpack.c.b16 %v4600, %v4598
      %v4665 = vpack.c.b16 %v4601, %v4599
      %v4666 = vpack.c.b16 %v4604, %v4602
      %v4667 = vpack.c.b16 %v4605, %v4603
      %v4668 = vpack.c.b16 %v4608, %v4606
      %v4669 = vpack.c.b16 %v4609, %v4607
      %v4670 = vpack.c.b16 %v4612, %v4610
      %v4671 = vpack.c.b16 %v4613, %v4611
      %v4672 = vpack.c.b16 %v4616, %v4614
      %v4673 = vpack.c.b16 %v4617, %v4615
      %v4674 = vpack.c.b16 %v4620, %v4618
      %v4675 = vpack.c.b16 %v4621, %v4619
      %v4676 = vpack.c.b16 %v4624, %v4622
      %v4677 = vpack.c.b16 %v4625, %v4623
      %v4678 = vpack.c.b16 %v4628, %v4626
      %v4679 = vpack.c.b16 %v4629, %v4627
      %v4680 = vpack.c.b16 %v4632, %v4630
      %v4681 = vpack.c.b16 %v4633, %v4631
      %v4682 = vpack.c.b16 %v4636, %v4634
      %v4683 = vpack.c.b16 %v4637, %v4635
      %v4684 = vpack.c.b16 %v4640, %v4638
      %v4685 = vpack.c.b16 %v4641, %v4639
      %v4686 = vpack.c.b16 %v4644, %v4642
      %v4687 = vpack.c.b16 %v4645, %v4643
      %v4688 = vpack.c.b16 %v4648, %v4646
      %v4689 = vpack.c.b16 %v4649, %v4647
      %vm4730 = vcmask 523264
      %v4732 = vsel %vm4730, %v4489, 0
      %4734 = vmatprep.subr.bf16.mxu0 %v4651
      %4735 = vmatpush1.bf16.msra.mxu0 %v4650
      %4736 = vmatprep.subr.bf16.mxu0 %v4653
      %4737 = vmatpush1.bf16.msra.mxu0 %v4652
      %4738 = vmatprep.subr.bf16.mxu0 %v4655
      %4739 = vmatpush1.bf16.msra.mxu0 %v4654
      %4740 = vmatprep.subr.bf16.mxu0 %v4657
      %4741 = vmatpush1.bf16.msra.mxu0 %v4656
      %4742 = vmatprep.subr.bf16.mxu0 %v4659
      %4743 = vmatpush1.bf16.msra.mxu0 %v4658
      %4744 = vmatprep.subr.bf16.mxu0 %v4661
      %4745 = vmatpush1.bf16.msra.mxu0 %v4660
      %4746 = vmatprep.subr.bf16.mxu0 %v4663
      %4747 = vmatpush1.bf16.msra.mxu0 %v4662
      %4748 = vmatprep.subr.bf16.mxu0 %v4665
      %4749 = vmatpush1.bf16.msra.mxu0 %v4664
      %4750 = vmatprep.subr.bf16.mxu0 %v4667
      %4751 = vmatpush1.bf16.msra.mxu0 %v4666
      %4752 = vmatprep.subr.bf16.mxu0 %v4669
      %4753 = vmatpush1.bf16.msra.mxu0 %v4668
      %4754 = vmatprep.subr.bf16.mxu0 %v4671
      %4755 = vmatpush1.bf16.msra.mxu0 %v4670
      %4756 = vmatprep.subr.bf16.mxu0 %v4673
      %4757 = vmatpush1.bf16.msra.mxu0 %v4672
      %4758 = vmatprep.subr.bf16.mxu0 %v4675
      %4759 = vmatpush1.bf16.msra.mxu0 %v4674
      %4760 = vmatprep.subr.bf16.mxu0 %v4677
      %4761 = vmatpush1.bf16.msra.mxu0 %v4676
      %4762 = vmatprep.subr.bf16.mxu0 %v4679
      %4763 = vmatpush1.bf16.msra.mxu0 %v4678
      %4764 = vmatprep.subr.bf16.mxu0 %v4681
      %4765 = vmatpush1.bf16.msra.mxu0 %v4680
      %4766 = vmatprep.mubr.bf16.mxu0 %v4488
      %4767 = vmatmul.mubr.bf16.gmra.mrb[0].mxu0 %v4487
      %v4768 = vpop.f32.mrb[0].mxu0
      %v4769 = vadd.f32 0.0, %v4768
      %v4770 = vpop.f32.mrb[0].mxu0
      %v4771 = vadd.f32 0.0, %v4770
      %v4772 = vpop.f32.mrb[0].mxu0
      %v4773 = vpop.f32.mrb[0].mxu0
      %4774 = vdwg.mxu0
      %4775 = vmatprep.subr.bf16.mxu0 %v4683
      %4776 = vmatpush1.bf16.msra.mxu0 %v4682
      %4777 = vmatprep.subr.bf16.mxu0 %v4685
      %4778 = vmatpush1.bf16.msra.mxu0 %v4684
      %4779 = vmatprep.subr.bf16.mxu0 %v4687
      %4780 = vmatpush1.bf16.msra.mxu0 %v4686
      %4781 = vmatprep.subr.bf16.mxu0 %v4689
      %4782 = vmatpush1.bf16.msra.mxu0 %v4688
      %4783 = vmatprep.subr.bf16.mxu0 0
      %4784 = vmatpush1.bf16.msra.mxu0 0
      %4785 = vmatprep.subr.bf16.mxu0 0
      %4786 = vmatpush1.bf16.msra.mxu0 0
      %4787 = vmatprep.subr.bf16.mxu0 0
      %4788 = vmatpush1.bf16.msra.mxu0 0
      %4789 = vmatprep.subr.bf16.mxu0 0
      %4790 = vmatpush1.bf16.msra.mxu0 0
      %4791 = vmatprep.subr.bf16.mxu0 0
      %4792 = vmatpush1.bf16.msra.mxu0 0
      %4793 = vmatprep.subr.bf16.mxu0 0
      %4794 = vmatpush1.bf16.msra.mxu0 0
      %4795 = vmatprep.subr.bf16.mxu0 0
      %4796 = vmatpush1.bf16.msra.mxu0 0
      %4797 = vmatprep.subr.bf16.mxu0 0
      %4798 = vmatpush1.bf16.msra.mxu0 0
      %4799 = vmatprep.subr.bf16.mxu0 0
      %4800 = vmatpush1.bf16.msra.mxu0 0
      %4801 = vmatprep.subr.bf16.mxu0 0
      %4802 = vmatpush1.bf16.msra.mxu0 0
      %4803 = vmatprep.subr.bf16.mxu0 0
      %4804 = vmatpush1.bf16.msra.mxu0 0
      %4805 = vmatprep.subr.bf16.mxu0 0
      %4806 = vmatpush1.bf16.msra.mxu0 0
      %4807 = vmatprep.mubr.bf16.mxu0 0
      %4808 = vmatmul.mubr.bf16.gmra.mrb[0].mxu0 %v4732
      %v4809 = vpop.f32.mrb[0].mxu0
      %v4810 = vadd.f32 %v4769, %v4809
      %v4811 = vpop.f32.mrb[0].mxu0
      %v4812 = vadd.f32 %v4771, %v4811
      %v4813 = vpop.f32.mrb[0].mxu0
      %v4814 = vpop.f32.mrb[0].mxu0
      %4815 = vdwg.mxu0
      %s4816 = scalar_lea.vmem %s8, 320
      %v4817 = vld [vmem:[%s4816] sm:$0xff]
      %v4818 = vld [vmem:[%s4816 + $0x8] sm:$0xff]
      %v4819 = vld [vmem:[%s4816 + $0x10] sm:$0xff]
      %v4820 = vld [vmem:[%s4816 + $0x18] sm:$0xff]
      %v4821 = vld [vmem:[%s4816 + $0x20] sm:$0xff]
      %v4822 = vld [vmem:[%s4816 + $0x28] sm:$0xff]
      %v4823 = vld [vmem:[%s4816 + $0x30] sm:$0xff]
      %v4824 = vld [vmem:[%s4816 + $0x38] sm:$0xff]
      %v4825 = vld [vmem:[%s4816 + $0x40] sm:$0xff]
      %v4826 = vld [vmem:[%s4816 + $0x48] sm:$0xff]
      %v4827 = vld [vmem:[%s4816 + $0x50] sm:$0xff]
      %v4828 = vld [vmem:[%s4816 + $0x58] sm:$0xff]
      %v4829 = vld [vmem:[%s4816 + $0x60] sm:$0xff]
      %v4830 = vld [vmem:[%s4816 + $0x68] sm:$0xff]
      %v4831 = vld [vmem:[%s4816 + $0x70] sm:$0xff]
      %v4832 = vld [vmem:[%s4816 + $0x78] sm:$0xff]
      %v4833 = vld [vmem:[%s4816 + $0x80] sm:$0xff]
      %v4834 = vld [vmem:[%s4816 + $0x88] sm:$0xff]
      %v4835 = vld [vmem:[%s4816 + $0x90] sm:$0xff]
      %v4836 = vld [vmem:[%s4816 + $0x98] sm:$0xff]
      %v4837 = vld [vmem:[%s4816 + $0xa0] sm:$0xff]
      %v4838 = vld [vmem:[%s4816 + $0xa8] sm:$0xff]
      %v4839 = vld [vmem:[%s4816 + $0xb0] sm:$0xff]
      %v4840 = vld [vmem:[%s4816 + $0xb8] sm:$0xff]
      %v4841 = vld [vmem:[%s4816 + $0xc0] sm:$0xff]
      %v4842 = vld [vmem:[%s4816 + $0xc8] sm:$0xff]
      %v4843 = vld [vmem:[%s4816 + $0xd0] sm:$0xff]
      %v4844 = vld [vmem:[%s4816 + $0xd8] sm:$0xff]
      %v4845 = vld [vmem:[%s4816 + $0xe0] sm:$0xff]
      %v4846 = vld [vmem:[%s4816 + $0xe8] sm:$0xff]
      %v4847 = vld [vmem:[%s4816 + $0xf0] sm:$0xff]
      %v4848 = vld [vmem:[%s4816 + $0xf8] sm:$0xff]
      %v4849 = vld [vmem:[%s4816 + $0x100] sm:$0xff]
      %v4850 = vld [vmem:[%s4816 + $0x108] sm:$0xff]
      %v4851 = vld [vmem:[%s4816 + $0x110] sm:$0xff]
      %v4852 = vld [vmem:[%s4816 + $0x118] sm:$0xff]
      %v4853 = vld [vmem:[%s4816 + $0x120] sm:$0xff]
      %v4854 = vld [vmem:[%s4816 + $0x128] sm:$0xff]
      %v4855 = vld [vmem:[%s4816 + $0x130] sm:$0xff]
      %v4856 = vld [vmem:[%s4816 + $0x138] sm:$0xff]
      %v4897 = vunpack.c.l.b16 %v4817
      %v4898 = vunpack.c.h.b16 %v4817
      %v4899 = vunpack.c.l.b16 %v4818
      %v4900 = vunpack.c.h.b16 %v4818
      %v4901 = vunpack.c.l.b16 %v4819
      %v4902 = vunpack.c.h.b16 %v4819
      %v4903 = vunpack.c.l.b16 %v4820
      %v4904 = vunpack.c.h.b16 %v4820
      %v4905 = vunpack.c.l.b16 %v4821
      %v4906 = vunpack.c.h.b16 %v4821
      %v4907 = vunpack.c.l.b16 %v4822
      %v4908 = vunpack.c.h.b16 %v4822
      %v4909 = vunpack.c.l.b16 %v4823
      %v4910 = vunpack.c.h.b16 %v4823
      %v4911 = vunpack.c.l.b16 %v4824
      %v4912 = vunpack.c.h.b16 %v4824
      %v4913 = vunpack.c.l.b16 %v4825
      %v4914 = vunpack.c.h.b16 %v4825
      %v4915 = vunpack.c.l.b16 %v4826
      %v4916 = vunpack.c.h.b16 %v4826
      %v4917 = vunpack.c.l.b16 %v4827
      %v4918 = vunpack.c.h.b16 %v4827
      %v4919 = vunpack.c.l.b16 %v4828
      %v4920 = vunpack.c.h.b16 %v4828
      %v4921 = vunpack.c.l.b16 %v4829
      %v4922 = vunpack.c.h.b16 %v4829
      %v4923 = vunpack.c.l.b16 %v4830
      %v4924 = vunpack.c.h.b16 %v4830
      %v4925 = vunpack.c.l.b16 %v4831
      %v4926 = vunpack.c.h.b16 %v4831
      %v4927 = vunpack.c.l.b16 %v4832
      %v4928 = vunpack.c.h.b16 %v4832
      %v4929 = vunpack.c.l.b16 %v4833
      %v4930 = vunpack.c.h.b16 %v4833
      %v4931 = vunpack.c.l.b16 %v4834
      %v4932 = vunpack.c.h.b16 %v4834
      %v4933 = vunpack.c.l.b16 %v4835
      %v4934 = vunpack.c.h.b16 %v4835
      %v4935 = vunpack.c.l.b16 %v4836
      %v4936 = vunpack.c.h.b16 %v4836
      %v4937 = vunpack.c.l.b16 %v4837
      %v4938 = vunpack.c.h.b16 %v4837
      %v4939 = vunpack.c.l.b16 %v4838
      %v4940 = vunpack.c.h.b16 %v4838
      %v4941 = vunpack.c.l.b16 %v4839
      %v4942 = vunpack.c.h.b16 %v4839
      %v4943 = vunpack.c.l.b16 %v4840
      %v4944 = vunpack.c.h.b16 %v4840
      %v4945 = vunpack.c.l.b16 %v4841
      %v4946 = vunpack.c.h.b16 %v4841
      %v4947 = vunpack.c.l.b16 %v4842
      %v4948 = vunpack.c.h.b16 %v4842
      %v4949 = vunpack.c.l.b16 %v4843
      %v4950 = vunpack.c.h.b16 %v4843
      %v4951 = vunpack.c.l.b16 %v4844
      %v4952 = vunpack.c.h.b16 %v4844
      %v4953 = vunpack.c.l.b16 %v4845
      %v4954 = vunpack.c.h.b16 %v4845
      %v4955 = vunpack.c.l.b16 %v4846
      %v4956 = vunpack.c.h.b16 %v4846
      %v4957 = vunpack.c.l.b16 %v4847
      %v4958 = vunpack.c.h.b16 %v4847
      %v4959 = vunpack.c.l.b16 %v4848
      %v4960 = vunpack.c.h.b16 %v4848
      %v4961 = vunpack.c.l.b16 %v4849
      %v4962 = vunpack.c.h.b16 %v4849
      %v4963 = vunpack.c.l.b16 %v4850
      %v4964 = vunpack.c.h.b16 %v4850
      %v4965 = vunpack.c.l.b16 %v4851
      %v4966 = vunpack.c.h.b16 %v4851
      %v4967 = vunpack.c.l.b16 %v4852
      %v4968 = vunpack.c.h.b16 %v4852
      %v4969 = vunpack.c.l.b16 %v4853
      %v4970 = vunpack.c.h.b16 %v4853
      %v4971 = vunpack.c.l.b16 %v4854
      %v4972 = vunpack.c.h.b16 %v4854
      %v4973 = vunpack.c.l.b16 %v4855
      %v4974 = vunpack.c.h.b16 %v4855
      %v4975 = vunpack.c.l.b16 %v4856
      %v4976 = vunpack.c.h.b16 %v4856
      %v4977 = vpack.c.b16 %v4899, %v4897
      %v4978 = vpack.c.b16 %v4900, %v4898
      %v4979 = vpack.c.b16 %v4903, %v4901
      %v4980 = vpack.c.b16 %v4904, %v4902
      %v4981 = vpack.c.b16 %v4907, %v4905
      %v4982 = vpack.c.b16 %v4908, %v4906
      %v4983 = vpack.c.b16 %v4911, %v4909
      %v4984 = vpack.c.b16 %v4912, %v4910
      %v4985 = vpack.c.b16 %v4915, %v4913
      %v4986 = vpack.c.b16 %v4916, %v4914
      %v4987 = vpack.c.b16 %v4919, %v4917
      %v4988 = vpack.c.b16 %v4920, %v4918
      %v4989 = vpack.c.b16 %v4923, %v4921
      %v4990 = vpack.c.b16 %v4924, %v4922
      %v4991 = vpack.c.b16 %v4927, %v4925
      %v4992 = vpack.c.b16 %v4928, %v4926
      %v4993 = vpack.c.b16 %v4931, %v4929
      %v4994 = vpack.c.b16 %v4932, %v4930
      %v4995 = vpack.c.b16 %v4935, %v4933
      %v4996 = vpack.c.b16 %v4936, %v4934
      %v4997 = vpack.c.b16 %v4939, %v4937
      %v4998 = vpack.c.b16 %v4940, %v4938
      %v4999 = vpack.c.b16 %v4943, %v4941
      %v5000 = vpack.c.b16 %v4944, %v4942
      %v5001 = vpack.c.b16 %v4947, %v4945
      %v5002 = vpack.c.b16 %v4948, %v4946
      %v5003 = vpack.c.b16 %v4951, %v4949
      %v5004 = vpack.c.b16 %v4952, %v4950
      %v5005 = vpack.c.b16 %v4955, %v4953
      %v5006 = vpack.c.b16 %v4956, %v4954
      %v5007 = vpack.c.b16 %v4959, %v4957
      %v5008 = vpack.c.b16 %v4960, %v4958
      %v5009 = vpack.c.b16 %v4963, %v4961
      %v5010 = vpack.c.b16 %v4964, %v4962
      %v5011 = vpack.c.b16 %v4967, %v4965
      %v5012 = vpack.c.b16 %v4968, %v4966
      %v5013 = vpack.c.b16 %v4971, %v4969
      %v5014 = vpack.c.b16 %v4972, %v4970
      %v5015 = vpack.c.b16 %v4975, %v4973
      %v5016 = vpack.c.b16 %v4976, %v4974
      %5057 = vmatprep.subr.bf16.mxu0 %v4978
      %5058 = vmatpush1.bf16.msra.mxu0 %v4977
      %5059 = vmatprep.subr.bf16.mxu0 %v4980
      %5060 = vmatpush1.bf16.msra.mxu0 %v4979
      %5061 = vmatprep.subr.bf16.mxu0 %v4982
      %5062 = vmatpush1.bf16.msra.mxu0 %v4981
      %5063 = vmatprep.subr.bf16.mxu0 %v4984
      %5064 = vmatpush1.bf16.msra.mxu0 %v4983
      %5065 = vmatprep.subr.bf16.mxu0 %v4986
      %5066 = vmatpush1.bf16.msra.mxu0 %v4985
      %5067 = vmatprep.subr.bf16.mxu0 %v4988
      %5068 = vmatpush1.bf16.msra.mxu0 %v4987
      %5069 = vmatprep.subr.bf16.mxu0 %v4990
      %5070 = vmatpush1.bf16.msra.mxu0 %v4989
      %5071 = vmatprep.subr.bf16.mxu0 %v4992
      %5072 = vmatpush1.bf16.msra.mxu0 %v4991
      %5073 = vmatprep.subr.bf16.mxu0 %v4994
      %5074 = vmatpush1.bf16.msra.mxu0 %v4993
      %5075 = vmatprep.subr.bf16.mxu0 %v4996
      %5076 = vmatpush1.bf16.msra.mxu0 %v4995
      %5077 = vmatprep.subr.bf16.mxu0 %v4998
      %5078 = vmatpush1.bf16.msra.mxu0 %v4997
      %5079 = vmatprep.subr.bf16.mxu0 %v5000
      %5080 = vmatpush1.bf16.msra.mxu0 %v4999
      %5081 = vmatprep.subr.bf16.mxu0 %v5002
      %5082 = vmatpush1.bf16.msra.mxu0 %v5001
      %5083 = vmatprep.subr.bf16.mxu0 %v5004
      %5084 = vmatpush1.bf16.msra.mxu0 %v5003
      %5085 = vmatprep.subr.bf16.mxu0 %v5006
      %5086 = vmatpush1.bf16.msra.mxu0 %v5005
      %5087 = vmatprep.subr.bf16.mxu0 %v5008
      %5088 = vmatpush1.bf16.msra.mxu0 %v5007
      %5089 = vmatprep.mubr.bf16.mxu0 %v4488
      %5090 = vmatmul.mubr.bf16.gmra.mrb[0].mxu0 %v4487
      %v5091 = vpop.f32.mrb[0].mxu0
      %v5092 = vadd.f32 0.0, %v5091
      %v5093 = vpop.f32.mrb[0].mxu0
      %v5094 = vadd.f32 0.0, %v5093
      %v5095 = vpop.f32.mrb[0].mxu0
      %v5096 = vpop.f32.mrb[0].mxu0
      %5097 = vdwg.mxu0
      %5098 = vmatprep.subr.bf16.mxu0 %v5010
      %5099 = vmatpush1.bf16.msra.mxu0 %v5009
      %5100 = vmatprep.subr.bf16.mxu0 %v5012
      %5101 = vmatpush1.bf16.msra.mxu0 %v5011
      %5102 = vmatprep.subr.bf16.mxu0 %v5014
      %5103 = vmatpush1.bf16.msra.mxu0 %v5013
      %5104 = vmatprep.subr.bf16.mxu0 %v5016
      %5105 = vmatpush1.bf16.msra.mxu0 %v5015
      %5106 = vmatprep.subr.bf16.mxu0 0
      %5107 = vmatpush1.bf16.msra.mxu0 0
      %5108 = vmatprep.subr.bf16.mxu0 0
      %5109 = vmatpush1.bf16.msra.mxu0 0
      %5110 = vmatprep.subr.bf16.mxu0 0
      %5111 = vmatpush1.bf16.msra.mxu0 0
      %5112 = vmatprep.subr.bf16.mxu0 0
      %5113 = vmatpush1.bf16.msra.mxu0 0
      %5114 = vmatprep.subr.bf16.mxu0 0
      %5115 = vmatpush1.bf16.msra.mxu0 0
      %5116 = vmatprep.subr.bf16.mxu0 0
      %5117 = vmatpush1.bf16.msra.mxu0 0
      %5118 = vmatprep.subr.bf16.mxu0 0
      %5119 = vmatpush1.bf16.msra.mxu0 0
      %5120 = vmatprep.subr.bf16.mxu0 0
      %5121 = vmatpush1.bf16.msra.mxu0 0
      %5122 = vmatprep.subr.bf16.mxu0 0
      %5123 = vmatpush1.bf16.msra.mxu0 0
      %5124 = vmatprep.subr.bf16.mxu0 0
      %5125 = vmatpush1.bf16.msra.mxu0 0
      %5126 = vmatprep.subr.bf16.mxu0 0
      %5127 = vmatpush1.bf16.msra.mxu0 0
      %5128 = vmatprep.subr.bf16.mxu0 0
      %5129 = vmatpush1.bf16.msra.mxu0 0
      %5130 = vmatprep.mubr.bf16.mxu0 0
      %5131 = vmatmul.mubr.bf16.gmra.mrb[0].mxu0 %v4732
      %v5132 = vpop.f32.mrb[0].mxu0
      %v5133 = vadd.f32 %v5092, %v5132
      %v5134 = vpop.f32.mrb[0].mxu0
      %v5135 = vadd.f32 %v5094, %v5134
      %v5136 = vpop.f32.mrb[0].mxu0
      %v5137 = vpop.f32.mrb[0].mxu0
      %5138 = vdwg.mxu0
      %v5139 = vmax.f32 %v4810, %v5133
      %v5140 = vmax.f32 %v4812, %v5135
      %v5141 = vpack.c.bf16 %v5139, %v5139
      %v5142 = vpack.c.bf16 %v5140, %v5140
      %v5143 = vld [vmem:[%s9] sm:$0xff]
      %v5144 = vld [vmem:[%s9 + $0x8] sm:$0xff]
      %v5145 = vld [vmem:[%s9 + $0x10] sm:$0xff]
      %v5146 = vld [vmem:[%s9 + $0x18] sm:$0xff]
      %v5147 = vld [vmem:[%s9 + $0x20] sm:$0xff]
      %v5148 = vld [vmem:[%s9 + $0x28] sm:$0xff]
      %v5149 = vld [vmem:[%s9 + $0x30] sm:$0xff]
      %v5150 = vld [vmem:[%s9 + $0x38] sm:$0xff]
      %v5151 = vld [vmem:[%s9 + $0x40] sm:$0xff]
      %v5152 = vld [vmem:[%s9 + $0x48] sm:$0xff]
      %v5153 = vld [vmem:[%s9 + $0x50] sm:$0xff]
      %v5154 = vld [vmem:[%s9 + $0x58] sm:$0xff]
      %v5155 = vld [vmem:[%s9 + $0x60] sm:$0xff]
      %v5156 = vld [vmem:[%s9 + $0x68] sm:$0xff]
      %v5157 = vld [vmem:[%s9 + $0x70] sm:$0xff]
      %v5158 = vld [vmem:[%s9 + $0x78] sm:$0xff]
      %v5159 = vld [vmem:[%s9 + $0x80] sm:$0xff]
      %v5160 = vld [vmem:[%s9 + $0x88] sm:$0xff]
      %v5161 = vld [vmem:[%s9 + $0x90] sm:$0xff]
      %v5162 = vld [vmem:[%s9 + $0x98] sm:$0xff]
      %s5163 = scalar_lea.vmem %s9, 160
      %v5164 = vld [vmem:[%s5163] sm:$0xff]
      %v5165 = vld [vmem:[%s5163 + $0x8] sm:$0xff]
      %v5166 = vld [vmem:[%s5163 + $0x10] sm:$0xff]
      %v5167 = vld [vmem:[%s5163 + $0x18] sm:$0xff]
      %v5168 = vld [vmem:[%s5163 + $0x20] sm:$0xff]
      %v5169 = vld [vmem:[%s5163 + $0x28] sm:$0xff]
      %v5170 = vld [vmem:[%s5163 + $0x30] sm:$0xff]
      %v5171 = vld [vmem:[%s5163 + $0x38] sm:$0xff]
      %v5172 = vld [vmem:[%s5163 + $0x40] sm:$0xff]
      %v5173 = vld [vmem:[%s5163 + $0x48] sm:$0xff]
      %v5174 = vld [vmem:[%s5163 + $0x50] sm:$0xff]
      %v5175 = vld [vmem:[%s5163 + $0x58] sm:$0xff]
      %v5176 = vld [vmem:[%s5163 + $0x60] sm:$0xff]
      %v5177 = vld [vmem:[%s5163 + $0x68] sm:$0xff]
      %v5178 = vld [vmem:[%s5163 + $0x70] sm:$0xff]
      %v5179 = vld [vmem:[%s5163 + $0x78] sm:$0xff]
      %v5180 = vld [vmem:[%s5163 + $0x80] sm:$0xff]
      %v5181 = vld [vmem:[%s5163 + $0x88] sm:$0xff]
      %v5182 = vld [vmem:[%s5163 + $0x90] sm:$0xff]
      %v5183 = vld [vmem:[%s5163 + $0x98] sm:$0xff]
      %v5185 = vshrl.u32 %v5141, 16
      %v5188 = vshrl.u32 %v5142, 16
      %v5211 = vunpack.c.l.b16 %v5164
      %v5212 = vunpack.c.h.b16 %v5164
      %v5213 = vunpack.c.l.b16 %v5165
      %v5214 = vunpack.c.h.b16 %v5165
      %v5215 = vunpack.c.l.b16 %v5166
      %v5216 = vunpack.c.h.b16 %v5166
      %v5217 = vunpack.c.l.b16 %v5167
      %v5218 = vunpack.c.h.b16 %v5167
      %v5219 = vunpack.c.l.b16 %v5168
      %v5220 = vunpack.c.h.b16 %v5168
      %v5221 = vunpack.c.l.b16 %v5169
      %v5222 = vunpack.c.h.b16 %v5169
      %v5223 = vunpack.c.l.b16 %v5170
      %v5224 = vunpack.c.h.b16 %v5170
      %v5225 = vunpack.c.l.b16 %v5171
      %v5226 = vunpack.c.h.b16 %v5171
      %v5227 = vunpack.c.l.b16 %v5172
      %v5228 = vunpack.c.h.b16 %v5172
      %v5229 = vunpack.c.l.b16 %v5173
      %v5230 = vunpack.c.h.b16 %v5173
      %v5231 = vunpack.c.l.b16 %v5174
      %v5232 = vunpack.c.h.b16 %v5174
      %v5233 = vunpack.c.l.b16 %v5175
      %v5234 = vunpack.c.h.b16 %v5175
      %v5235 = vunpack.c.l.b16 %v5176
      %v5236 = vunpack.c.h.b16 %v5176
      %v5237 = vunpack.c.l.b16 %v5177
      %v5238 = vunpack.c.h.b16 %v5177
      %v5239 = vunpack.c.l.b16 %v5178
      %v5240 = vunpack.c.h.b16 %v5178
      %v5241 = vunpack.c.l.b16 %v5179
      %v5242 = vunpack.c.h.b16 %v5179
      %v5243 = vunpack.c.l.b16 %v5180
      %v5244 = vunpack.c.h.b16 %v5180
      %v5245 = vunpack.c.l.b16 %v5181
      %v5246 = vunpack.c.h.b16 %v5181
      %v5247 = vunpack.c.l.b16 %v5182
      %v5248 = vunpack.c.h.b16 %v5182
      %v5249 = vunpack.c.l.b16 %v5183
      %v5250 = vunpack.c.h.b16 %v5183
      %v5251 = vpack.c.b16 %v5213, %v5211
      %v5252 = vpack.c.b16 %v5214, %v5212
      %v5253 = vpack.c.b16 %v5217, %v5215
      %v5254 = vpack.c.b16 %v5218, %v5216
      %v5255 = vpack.c.b16 %v5221, %v5219
      %v5256 = vpack.c.b16 %v5222, %v5220
      %v5257 = vpack.c.b16 %v5225, %v5223
      %v5258 = vpack.c.b16 %v5226, %v5224
      %v5259 = vpack.c.b16 %v5229, %v5227
      %v5260 = vpack.c.b16 %v5230, %v5228
      %v5261 = vpack.c.b16 %v5233, %v5231
      %v5262 = vpack.c.b16 %v5234, %v5232
      %v5263 = vpack.c.b16 %v5237, %v5235
      %v5264 = vpack.c.b16 %v5238, %v5236
      %v5265 = vpack.c.b16 %v5241, %v5239
      %v5266 = vpack.c.b16 %v5242, %v5240
      %v5267 = vpack.c.b16 %v5245, %v5243
      %v5268 = vpack.c.b16 %v5246, %v5244
      %v5269 = vpack.c.b16 %v5249, %v5247
      %v5270 = vpack.c.b16 %v5250, %v5248
      %vm5291 = vcmask 261120
      %v5293 = vsel %vm5291, %v5188, 0
      %5295 = vmatprep.subr.bf16.mxu0 %v5252
      %5296 = vmatpush1.bf16.msra.mxu0 %v5251
      %5297 = vmatprep.subr.bf16.mxu0 %v5254
      %5298 = vmatpush1.bf16.msra.mxu0 %v5253
      %5299 = vmatprep.subr.bf16.mxu0 %v5256
      %5300 = vmatpush1.bf16.msra.mxu0 %v5255
      %5301 = vmatprep.subr.bf16.mxu0 %v5258
      %5302 = vmatpush1.bf16.msra.mxu0 %v5257
      %5303 = vmatprep.subr.bf16.mxu0 %v5260
      %5304 = vmatpush1.bf16.msra.mxu0 %v5259
      %5305 = vmatprep.subr.bf16.mxu0 %v5262
      %5306 = vmatpush1.bf16.msra.mxu0 %v5261
      %5307 = vmatprep.subr.bf16.mxu0 %v5264
      %5308 = vmatpush1.bf16.msra.mxu0 %v5263
      %5309 = vmatprep.subr.bf16.mxu0 %v5266
      %5310 = vmatpush1.bf16.msra.mxu0 %v5265
      %5311 = vmatprep.subr.bf16.mxu0 %v5268
      %5312 = vmatpush1.bf16.msra.mxu0 %v5267
      %5313 = vmatprep.subr.bf16.mxu0 %v5270
      %5314 = vmatpush1.bf16.msra.mxu0 %v5269
      %5315 = vmatprep.subr.bf16.mxu0 0
      %5316 = vmatpush1.bf16.msra.mxu0 0
      %5317 = vmatprep.subr.bf16.mxu0 0
      %5318 = vmatpush1.bf16.msra.mxu0 0
      %5319 = vmatprep.subr.bf16.mxu0 0
      %5320 = vmatpush1.bf16.msra.mxu0 0
      %5321 = vmatprep.subr.bf16.mxu0 0
      %5322 = vmatpush1.bf16.msra.mxu0 0
      %5323 = vmatprep.subr.bf16.mxu0 0
      %5324 = vmatpush1.bf16.msra.mxu0 0
      %5325 = vmatprep.subr.bf16.mxu0 0
      %5326 = vmatpush1.bf16.msra.mxu0 0
      %5327 = vmatprep.mubr.bf16.mxu0 %v5293
      %5328 = vmatmul.mubr.bf16.gmra.mrb[0].mxu0 %v5185
      %v5329 = vpop.f32.mrb[0].mxu0
      %v5330 = vadd.f32 0.0, %v5329
      %v5331 = vpop.f32.mrb[0].mxu0
      %v5332 = vadd.f32 0.0, %v5331
      %v5333 = vpop.f32.mrb[0].mxu0
      %v5334 = vpop.f32.mrb[0].mxu0
      %5335 = vdwg.mxu0
      %v5356 = vunpack.c.l.b16 %v5143
      %v5357 = vunpack.c.h.b16 %v5143
      %v5358 = vunpack.c.l.b16 %v5144
      %v5359 = vunpack.c.h.b16 %v5144
      %v5360 = vunpack.c.l.b16 %v5145
      %v5361 = vunpack.c.h.b16 %v5145
      %v5362 = vunpack.c.l.b16 %v5146
      %v5363 = vunpack.c.h.b16 %v5146
      %v5364 = vunpack.c.l.b16 %v5147
      %v5365 = vunpack.c.h.b16 %v5147
      %v5366 = vunpack.c.l.b16 %v5148
      %v5367 = vunpack.c.h.b16 %v5148
      %v5368 = vunpack.c.l.b16 %v5149
      %v5369 = vunpack.c.h.b16 %v5149
      %v5370 = vunpack.c.l.b16 %v5150
      %v5371 = vunpack.c.h.b16 %v5150
      %v5372 = vunpack.c.l.b16 %v5151
      %v5373 = vunpack.c.h.b16 %v5151
      %v5374 = vunpack.c.l.b16 %v5152
      %v5375 = vunpack.c.h.b16 %v5152
      %v5376 = vunpack.c.l.b16 %v5153
      %v5377 = vunpack.c.h.b16 %v5153
      %v5378 = vunpack.c.l.b16 %v5154
      %v5379 = vunpack.c.h.b16 %v5154
      %v5380 = vunpack.c.l.b16 %v5155
      %v5381 = vunpack.c.h.b16 %v5155
      %v5382 = vunpack.c.l.b16 %v5156
      %v5383 = vunpack.c.h.b16 %v5156
      %v5384 = vunpack.c.l.b16 %v5157
      %v5385 = vunpack.c.h.b16 %v5157
      %v5386 = vunpack.c.l.b16 %v5158
      %v5387 = vunpack.c.h.b16 %v5158
      %v5388 = vunpack.c.l.b16 %v5159
      %v5389 = vunpack.c.h.b16 %v5159
      %v5390 = vunpack.c.l.b16 %v5160
      %v5391 = vunpack.c.h.b16 %v5160
      %v5392 = vunpack.c.l.b16 %v5161
      %v5393 = vunpack.c.h.b16 %v5161
      %v5394 = vunpack.c.l.b16 %v5162
      %v5395 = vunpack.c.h.b16 %v5162
      %v5396 = vpack.c.b16 %v5358, %v5356
      %v5397 = vpack.c.b16 %v5359, %v5357
      %v5398 = vpack.c.b16 %v5362, %v5360
      %v5399 = vpack.c.b16 %v5363, %v5361
      %v5400 = vpack.c.b16 %v5366, %v5364
      %v5401 = vpack.c.b16 %v5367, %v5365
      %v5402 = vpack.c.b16 %v5370, %v5368
      %v5403 = vpack.c.b16 %v5371, %v5369
      %v5404 = vpack.c.b16 %v5374, %v5372
      %v5405 = vpack.c.b16 %v5375, %v5373
      %v5406 = vpack.c.b16 %v5378, %v5376
      %v5407 = vpack.c.b16 %v5379, %v5377
      %v5408 = vpack.c.b16 %v5382, %v5380
      %v5409 = vpack.c.b16 %v5383, %v5381
      %v5410 = vpack.c.b16 %v5386, %v5384
      %v5411 = vpack.c.b16 %v5387, %v5385
      %v5412 = vpack.c.b16 %v5390, %v5388
      %v5413 = vpack.c.b16 %v5391, %v5389
      %v5414 = vpack.c.b16 %v5394, %v5392
      %v5415 = vpack.c.b16 %v5395, %v5393
      %v5436 = vsel %vm5291, %v5142, 0
      %5438 = vmatprep.subr.bf16.mxu0 %v5397
      %5439 = vmatpush1.bf16.msra.mxu0 %v5396
      %5440 = vmatprep.subr.bf16.mxu0 %v5399
      %5441 = vmatpush1.bf16.msra.mxu0 %v5398
      %5442 = vmatprep.subr.bf16.mxu0 %v5401
      %5443 = vmatpush1.bf16.msra.mxu0 %v5400
      %5444 = vmatprep.subr.bf16.mxu0 %v5403
      %5445 = vmatpush1.bf16.msra.mxu0 %v5402
      %5446 = vmatprep.subr.bf16.mxu0 %v5405
      %5447 = vmatpush1.bf16.msra.mxu0 %v5404
      %5448 = vmatprep.subr.bf16.mxu0 %v5407
      %5449 = vmatpush1.bf16.msra.mxu0 %v5406
      %5450 = vmatprep.subr.bf16.mxu0 %v5409
      %5451 = vmatpush1.bf16.msra.mxu0 %v5408
      %5452 = vmatprep.subr.bf16.mxu0 %v5411
      %5453 = vmatpush1.bf16.msra.mxu0 %v5410
      %5454 = vmatprep.subr.bf16.mxu0 %v5413
      %5455 = vmatpush1.bf16.msra.mxu0 %v5412
      %5456 = vmatprep.subr.bf16.mxu0 %v5415
      %5457 = vmatpush1.bf16.msra.mxu0 %v5414
      %5458 = vmatprep.subr.bf16.mxu0 0
      %5459 = vmatpush1.bf16.msra.mxu0 0
      %5460 = vmatprep.subr.bf16.mxu0 0
      %5461 = vmatpush1.bf16.msra.mxu0 0
      %5462 = vmatprep.subr.bf16.mxu0 0
      %5463 = vmatpush1.bf16.msra.mxu0 0
      %5464 = vmatprep.subr.bf16.mxu0 0
      %5465 = vmatpush1.bf16.msra.mxu0 0
      %5466 = vmatprep.subr.bf16.mxu0 0
      %5467 = vmatpush1.bf16.msra.mxu0 0
      %5468 = vmatprep.subr.bf16.mxu0 0
      %5469 = vmatpush1.bf16.msra.mxu0 0
      %5470 = vmatprep.mubr.bf16.mxu0 %v5436
      %5471 = vmatmul.mubr.bf16.gmra.mrb[0].mxu0 %v5141
      %v5472 = vpop.f32.mrb[0].mxu0
      %v5473 = vadd.f32 %v5330, %v5472
      %v5474 = vpop.f32.mrb[0].mxu0
      %v5475 = vadd.f32 %v5332, %v5474
      %v5476 = vpop.f32.mrb[0].mxu0
      %v5477 = vpop.f32.mrb[0].mxu0
      %5478 = vdwg.mxu0
      %s5479 = scalar_lea.vmem %s9, 320
      %v5480 = vld [vmem:[%s5479] sm:$0xff]
      %v5481 = vld [vmem:[%s5479 + $0x8] sm:$0xff]
      %v5482 = vld [vmem:[%s5479 + $0x10] sm:$0xff]
      %v5483 = vld [vmem:[%s5479 + $0x18] sm:$0xff]
      %v5484 = vld [vmem:[%s5479 + $0x20] sm:$0xff]
      %v5485 = vld [vmem:[%s5479 + $0x28] sm:$0xff]
      %v5486 = vld [vmem:[%s5479 + $0x30] sm:$0xff]
      %v5487 = vld [vmem:[%s5479 + $0x38] sm:$0xff]
      %v5488 = vld [vmem:[%s5479 + $0x40] sm:$0xff]
      %v5489 = vld [vmem:[%s5479 + $0x48] sm:$0xff]
      %v5490 = vld [vmem:[%s5479 + $0x50] sm:$0xff]
      %v5491 = vld [vmem:[%s5479 + $0x58] sm:$0xff]
      %v5492 = vld [vmem:[%s5479 + $0x60] sm:$0xff]
      %v5493 = vld [vmem:[%s5479 + $0x68] sm:$0xff]
      %v5494 = vld [vmem:[%s5479 + $0x70] sm:$0xff]
      %v5495 = vld [vmem:[%s5479 + $0x78] sm:$0xff]
      %v5496 = vld [vmem:[%s5479 + $0x80] sm:$0xff]
      %v5497 = vld [vmem:[%s5479 + $0x88] sm:$0xff]
      %v5498 = vld [vmem:[%s5479 + $0x90] sm:$0xff]
      %v5499 = vld [vmem:[%s5479 + $0x98] sm:$0xff]
      %v5502 = vrot.slane %v5141, 1
      %v5503 = vrot.slane %v5142, 1
      %v5525 = vunpack.c.l.b16 %v5480
      %v5526 = vunpack.c.h.b16 %v5480
      %v5527 = vunpack.c.l.b16 %v5481
      %v5528 = vunpack.c.h.b16 %v5481
      %v5529 = vunpack.c.l.b16 %v5482
      %v5530 = vunpack.c.h.b16 %v5482
      %v5531 = vunpack.c.l.b16 %v5483
      %v5532 = vunpack.c.h.b16 %v5483
      %v5533 = vunpack.c.l.b16 %v5484
      %v5534 = vunpack.c.h.b16 %v5484
      %v5535 = vunpack.c.l.b16 %v5485
      %v5536 = vunpack.c.h.b16 %v5485
      %v5537 = vunpack.c.l.b16 %v5486
      %v5538 = vunpack.c.h.b16 %v5486
      %v5539 = vunpack.c.l.b16 %v5487
      %v5540 = vunpack.c.h.b16 %v5487
      %v5541 = vunpack.c.l.b16 %v5488
      %v5542 = vunpack.c.h.b16 %v5488
      %v5543 = vunpack.c.l.b16 %v5489
      %v5544 = vunpack.c.h.b16 %v5489
      %v5545 = vunpack.c.l.b16 %v5490
      %v5546 = vunpack.c.h.b16 %v5490
      %v5547 = vunpack.c.l.b16 %v5491
      %v5548 = vunpack.c.h.b16 %v5491
      %v5549 = vunpack.c.l.b16 %v5492
      %v5550 = vunpack.c.h.b16 %v5492
      %v5551 = vunpack.c.l.b16 %v5493
      %v5552 = vunpack.c.h.b16 %v5493
      %v5553 = vunpack.c.l.b16 %v5494
      %v5554 = vunpack.c.h.b16 %v5494
      %v5555 = vunpack.c.l.b16 %v5495
      %v5556 = vunpack.c.h.b16 %v5495
      %v5557 = vunpack.c.l.b16 %v5496
      %v5558 = vunpack.c.h.b16 %v5496
      %v5559 = vunpack.c.l.b16 %v5497
      %v5560 = vunpack.c.h.b16 %v5497
      %v5561 = vunpack.c.l.b16 %v5498
      %v5562 = vunpack.c.h.b16 %v5498
      %v5563 = vunpack.c.l.b16 %v5499
      %v5564 = vunpack.c.h.b16 %v5499
      %v5565 = vpack.c.b16 %v5527, %v5525
      %v5566 = vpack.c.b16 %v5528, %v5526
      %v5567 = vpack.c.b16 %v5531, %v5529
      %v5568 = vpack.c.b16 %v5532, %v5530
      %v5569 = vpack.c.b16 %v5535, %v5533
      %v5570 = vpack.c.b16 %v5536, %v5534
      %v5571 = vpack.c.b16 %v5539, %v5537
      %v5572 = vpack.c.b16 %v5540, %v5538
      %v5573 = vpack.c.b16 %v5543, %v5541
      %v5574 = vpack.c.b16 %v5544, %v5542
      %v5575 = vpack.c.b16 %v5547, %v5545
      %v5576 = vpack.c.b16 %v5548, %v5546
      %v5577 = vpack.c.b16 %v5551, %v5549
      %v5578 = vpack.c.b16 %v5552, %v5550
      %v5579 = vpack.c.b16 %v5555, %v5553
      %v5580 = vpack.c.b16 %v5556, %v5554
      %v5581 = vpack.c.b16 %v5559, %v5557
      %v5582 = vpack.c.b16 %v5560, %v5558
      %v5583 = vpack.c.b16 %v5563, %v5561
      %v5584 = vpack.c.b16 %v5564, %v5562
      %v5606 = vsel %vm5291, %v5503, 0
      %5608 = vmatprep.subr.bf16.mxu0 %v5566
      %5609 = vmatpush1.bf16.msra.mxu0 %v5565
      %5610 = vmatprep.subr.bf16.mxu0 %v5568
      %5611 = vmatpush1.bf16.msra.mxu0 %v5567
      %5612 = vmatprep.subr.bf16.mxu0 %v5570
      %5613 = vmatpush1.bf16.msra.mxu0 %v5569
      %5614 = vmatprep.subr.bf16.mxu0 %v5572
      %5615 = vmatpush1.bf16.msra.mxu0 %v5571
      %5616 = vmatprep.subr.bf16.mxu0 %v5574
      %5617 = vmatpush1.bf16.msra.mxu0 %v5573
      %5618 = vmatprep.subr.bf16.mxu0 %v5576
      %5619 = vmatpush1.bf16.msra.mxu0 %v5575
      %5620 = vmatprep.subr.bf16.mxu0 %v5578
      %5621 = vmatpush1.bf16.msra.mxu0 %v5577
      %5622 = vmatprep.subr.bf16.mxu0 %v5580
      %5623 = vmatpush1.bf16.msra.mxu0 %v5579
      %5624 = vmatprep.subr.bf16.mxu0 %v5582
      %5625 = vmatpush1.bf16.msra.mxu0 %v5581
      %5626 = vmatprep.subr.bf16.mxu0 %v5584
      %5627 = vmatpush1.bf16.msra.mxu0 %v5583
      %5628 = vmatprep.subr.bf16.mxu0 0
      %5629 = vmatpush1.bf16.msra.mxu0 0
      %5630 = vmatprep.subr.bf16.mxu0 0
      %5631 = vmatpush1.bf16.msra.mxu0 0
      %5632 = vmatprep.subr.bf16.mxu0 0
      %5633 = vmatpush1.bf16.msra.mxu0 0
      %5634 = vmatprep.subr.bf16.mxu0 0
      %5635 = vmatpush1.bf16.msra.mxu0 0
      %5636 = vmatprep.subr.bf16.mxu0 0
      %5637 = vmatpush1.bf16.msra.mxu0 0
      %5638 = vmatprep.subr.bf16.mxu0 0
      %5639 = vmatpush1.bf16.msra.mxu0 0
      %5640 = vmatprep.mubr.bf16.mxu0 %v5606
      %5641 = vmatmul.mubr.bf16.gmra.mrb[0].mxu0 %v5502
      %v5642 = vpop.f32.mrb[0].mxu0
      %v5643 = vadd.f32 0.0, %v5642
      %v5644 = vpop.f32.mrb[0].mxu0
      %v5645 = vadd.f32 0.0, %v5644
      %v5646 = vpop.f32.mrb[0].mxu0
      %v5647 = vpop.f32.mrb[0].mxu0
      %5648 = vdwg.mxu0
      %v5649 = vadd.f32 %v5473, %v5643
      %v5650 = vadd.f32 %v5475, %v5645
      %s5651 = scalar_lea.vmem %s9, 480
      %v5652 = vld [vmem:[%s5651] sm:$0xff]
      %v5653 = vld [vmem:[%s5651 + $0x8] sm:$0xff]
      %v5654 = vld [vmem:[%s5651 + $0x10] sm:$0xff]
      %v5655 = vld [vmem:[%s5651 + $0x18] sm:$0xff]
      %v5656 = vld [vmem:[%s5651 + $0x20] sm:$0xff]
      %v5657 = vld [vmem:[%s5651 + $0x28] sm:$0xff]
      %v5658 = vld [vmem:[%s5651 + $0x30] sm:$0xff]
      %v5659 = vld [vmem:[%s5651 + $0x38] sm:$0xff]
      %v5660 = vld [vmem:[%s5651 + $0x40] sm:$0xff]
      %v5661 = vld [vmem:[%s5651 + $0x48] sm:$0xff]
      %v5662 = vld [vmem:[%s5651 + $0x50] sm:$0xff]
      %v5663 = vld [vmem:[%s5651 + $0x58] sm:$0xff]
      %v5664 = vld [vmem:[%s5651 + $0x60] sm:$0xff]
      %v5665 = vld [vmem:[%s5651 + $0x68] sm:$0xff]
      %v5666 = vld [vmem:[%s5651 + $0x70] sm:$0xff]
      %v5667 = vld [vmem:[%s5651 + $0x78] sm:$0xff]
      %v5668 = vld [vmem:[%s5651 + $0x80] sm:$0xff]
      %v5669 = vld [vmem:[%s5651 + $0x88] sm:$0xff]
      %v5670 = vld [vmem:[%s5651 + $0x90] sm:$0xff]
      %v5671 = vld [vmem:[%s5651 + $0x98] sm:$0xff]
      %v5672 = vrot.slane %v5185, 1
      %v5673 = vrot.slane %v5188, 1
      %v5695 = vunpack.c.l.b16 %v5652
      %v5696 = vunpack.c.h.b16 %v5652
      %v5697 = vunpack.c.l.b16 %v5653
      %v5698 = vunpack.c.h.b16 %v5653
      %v5699 = vunpack.c.l.b16 %v5654
      %v5700 = vunpack.c.h.b16 %v5654
      %v5701 = vunpack.c.l.b16 %v5655
      %v5702 = vunpack.c.h.b16 %v5655
      %v5703 = vunpack.c.l.b16 %v5656
      %v5704 = vunpack.c.h.b16 %v5656
      %v5705 = vunpack.c.l.b16 %v5657
      %v5706 = vunpack.c.h.b16 %v5657
      %v5707 = vunpack.c.l.b16 %v5658
      %v5708 = vunpack.c.h.b16 %v5658
      %v5709 = vunpack.c.l.b16 %v5659
      %v5710 = vunpack.c.h.b16 %v5659
      %v5711 = vunpack.c.l.b16 %v5660
      %v5712 = vunpack.c.h.b16 %v5660
      %v5713 = vunpack.c.l.b16 %v5661
      %v5714 = vunpack.c.h.b16 %v5661
      %v5715 = vunpack.c.l.b16 %v5662
      %v5716 = vunpack.c.h.b16 %v5662
      %v5717 = vunpack.c.l.b16 %v5663
      %v5718 = vunpack.c.h.b16 %v5663
      %v5719 = vunpack.c.l.b16 %v5664
      %v5720 = vunpack.c.h.b16 %v5664
      %v5721 = vunpack.c.l.b16 %v5665
      %v5722 = vunpack.c.h.b16 %v5665
      %v5723 = vunpack.c.l.b16 %v5666
      %v5724 = vunpack.c.h.b16 %v5666
      %v5725 = vunpack.c.l.b16 %v5667
      %v5726 = vunpack.c.h.b16 %v5667
      %v5727 = vunpack.c.l.b16 %v5668
      %v5728 = vunpack.c.h.b16 %v5668
      %v5729 = vunpack.c.l.b16 %v5669
      %v5730 = vunpack.c.h.b16 %v5669
      %v5731 = vunpack.c.l.b16 %v5670
      %v5732 = vunpack.c.h.b16 %v5670
      %v5733 = vunpack.c.l.b16 %v5671
      %v5734 = vunpack.c.h.b16 %v5671
      %v5735 = vpack.c.b16 %v5697, %v5695
      %v5736 = vpack.c.b16 %v5698, %v5696
      %v5737 = vpack.c.b16 %v5701, %v5699
      %v5738 = vpack.c.b16 %v5702, %v5700
      %v5739 = vpack.c.b16 %v5705, %v5703
      %v5740 = vpack.c.b16 %v5706, %v5704
      %v5741 = vpack.c.b16 %v5709, %v5707
      %v5742 = vpack.c.b16 %v5710, %v5708
      %v5743 = vpack.c.b16 %v5713, %v5711
      %v5744 = vpack.c.b16 %v5714, %v5712
      %v5745 = vpack.c.b16 %v5717, %v5715
      %v5746 = vpack.c.b16 %v5718, %v5716
      %v5747 = vpack.c.b16 %v5721, %v5719
      %v5748 = vpack.c.b16 %v5722, %v5720
      %v5749 = vpack.c.b16 %v5725, %v5723
      %v5750 = vpack.c.b16 %v5726, %v5724
      %v5751 = vpack.c.b16 %v5729, %v5727
      %v5752 = vpack.c.b16 %v5730, %v5728
      %v5753 = vpack.c.b16 %v5733, %v5731
      %v5754 = vpack.c.b16 %v5734, %v5732
      %v5776 = vsel %vm5291, %v5673, 0
      %5778 = vmatprep.subr.bf16.mxu0 %v5736
      %5779 = vmatpush1.bf16.msra.mxu0 %v5735
      %5780 = vmatprep.subr.bf16.mxu0 %v5738
      %5781 = vmatpush1.bf16.msra.mxu0 %v5737
      %5782 = vmatprep.subr.bf16.mxu0 %v5740
      %5783 = vmatpush1.bf16.msra.mxu0 %v5739
      %5784 = vmatprep.subr.bf16.mxu0 %v5742
      %5785 = vmatpush1.bf16.msra.mxu0 %v5741
      %5786 = vmatprep.subr.bf16.mxu0 %v5744
      %5787 = vmatpush1.bf16.msra.mxu0 %v5743
      %5788 = vmatprep.subr.bf16.mxu0 %v5746
      %5789 = vmatpush1.bf16.msra.mxu0 %v5745
      %5790 = vmatprep.subr.bf16.mxu0 %v5748
      %5791 = vmatpush1.bf16.msra.mxu0 %v5747
      %5792 = vmatprep.subr.bf16.mxu0 %v5750
      %5793 = vmatpush1.bf16.msra.mxu0 %v5749
      %5794 = vmatprep.subr.bf16.mxu0 %v5752
      %5795 = vmatpush1.bf16.msra.mxu0 %v5751
      %5796 = vmatprep.subr.bf16.mxu0 %v5754
      %5797 = vmatpush1.bf16.msra.mxu0 %v5753
      %5798 = vmatprep.subr.bf16.mxu0 0
      %5799 = vmatpush1.bf16.msra.mxu0 0
      %5800 = vmatprep.subr.bf16.mxu0 0
      %5801 = vmatpush1.bf16.msra.mxu0 0
      %5802 = vmatprep.subr.bf16.mxu0 0
      %5803 = vmatpush1.bf16.msra.mxu0 0
      %5804 = vmatprep.subr.bf16.mxu0 0
      %5805 = vmatpush1.bf16.msra.mxu0 0
      %5806 = vmatprep.subr.bf16.mxu0 0
      %5807 = vmatpush1.bf16.msra.mxu0 0
      %5808 = vmatprep.subr.bf16.mxu0 0
      %5809 = vmatpush1.bf16.msra.mxu0 0
      %5810 = vmatprep.mubr.bf16.mxu0 %v5776
      %5811 = vmatmul.mubr.bf16.gmra.mrb[0].mxu0 %v5672
      %v5812 = vpop.f32.mrb[0].mxu0
      %v5813 = vadd.f32 0.0, %v5812
      %v5814 = vpop.f32.mrb[0].mxu0
      %v5815 = vadd.f32 0.0, %v5814
      %v5816 = vpop.f32.mrb[0].mxu0
      %v5817 = vpop.f32.mrb[0].mxu0
      %5818 = vdwg.mxu0
      %v5819 = vadd.f32 %v5649, %v5813
      %v5820 = vadd.f32 %v5650, %v5815
      %s5821 = scalar_lea.vmem %s9, 640
      %v5822 = vld [vmem:[%s5821] sm:$0xff]
      %v5823 = vld [vmem:[%s5821 + $0x8] sm:$0xff]
      %v5824 = vld [vmem:[%s5821 + $0x10] sm:$0xff]
      %v5825 = vld [vmem:[%s5821 + $0x18] sm:$0xff]
      %v5826 = vld [vmem:[%s5821 + $0x20] sm:$0xff]
      %v5827 = vld [vmem:[%s5821 + $0x28] sm:$0xff]
      %v5828 = vld [vmem:[%s5821 + $0x30] sm:$0xff]
      %v5829 = vld [vmem:[%s5821 + $0x38] sm:$0xff]
      %v5830 = vld [vmem:[%s5821 + $0x40] sm:$0xff]
      %v5831 = vld [vmem:[%s5821 + $0x48] sm:$0xff]
      %v5832 = vld [vmem:[%s5821 + $0x50] sm:$0xff]
      %v5833 = vld [vmem:[%s5821 + $0x58] sm:$0xff]
      %v5834 = vld [vmem:[%s5821 + $0x60] sm:$0xff]
      %v5835 = vld [vmem:[%s5821 + $0x68] sm:$0xff]
      %v5836 = vld [vmem:[%s5821 + $0x70] sm:$0xff]
      %v5837 = vld [vmem:[%s5821 + $0x78] sm:$0xff]
      %v5838 = vld [vmem:[%s5821 + $0x80] sm:$0xff]
      %v5839 = vld [vmem:[%s5821 + $0x88] sm:$0xff]
      %v5840 = vld [vmem:[%s5821 + $0x90] sm:$0xff]
      %v5841 = vld [vmem:[%s5821 + $0x98] sm:$0xff]
      %v5842 = vrot.slane %v5141, 2
      %v5843 = vrot.slane %v5142, 2
      %v5865 = vunpack.c.l.b16 %v5822
      %v5866 = vunpack.c.h.b16 %v5822
      %v5867 = vunpack.c.l.b16 %v5823
      %v5868 = vunpack.c.h.b16 %v5823
      %v5869 = vunpack.c.l.b16 %v5824
      %v5870 = vunpack.c.h.b16 %v5824
      %v5871 = vunpack.c.l.b16 %v5825
      %v5872 = vunpack.c.h.b16 %v5825
      %v5873 = vunpack.c.l.b16 %v5826
      %v5874 = vunpack.c.h.b16 %v5826
      %v5875 = vunpack.c.l.b16 %v5827
      %v5876 = vunpack.c.h.b16 %v5827
      %v5877 = vunpack.c.l.b16 %v5828
      %v5878 = vunpack.c.h.b16 %v5828
      %v5879 = vunpack.c.l.b16 %v5829
      %v5880 = vunpack.c.h.b16 %v5829
      %v5881 = vunpack.c.l.b16 %v5830
      %v5882 = vunpack.c.h.b16 %v5830
      %v5883 = vunpack.c.l.b16 %v5831
      %v5884 = vunpack.c.h.b16 %v5831
      %v5885 = vunpack.c.l.b16 %v5832
      %v5886 = vunpack.c.h.b16 %v5832
      %v5887 = vunpack.c.l.b16 %v5833
      %v5888 = vunpack.c.h.b16 %v5833
      %v5889 = vunpack.c.l.b16 %v5834
      %v5890 = vunpack.c.h.b16 %v5834
      %v5891 = vunpack.c.l.b16 %v5835
      %v5892 = vunpack.c.h.b16 %v5835
      %v5893 = vunpack.c.l.b16 %v5836
      %v5894 = vunpack.c.h.b16 %v5836
      %v5895 = vunpack.c.l.b16 %v5837
      %v5896 = vunpack.c.h.b16 %v5837
      %v5897 = vunpack.c.l.b16 %v5838
      %v5898 = vunpack.c.h.b16 %v5838
      %v5899 = vunpack.c.l.b16 %v5839
      %v5900 = vunpack.c.h.b16 %v5839
      %v5901 = vunpack.c.l.b16 %v5840
      %v5902 = vunpack.c.h.b16 %v5840
      %v5903 = vunpack.c.l.b16 %v5841
      %v5904 = vunpack.c.h.b16 %v5841
      %v5905 = vpack.c.b16 %v5867, %v5865
      %v5906 = vpack.c.b16 %v5868, %v5866
      %v5907 = vpack.c.b16 %v5871, %v5869
      %v5908 = vpack.c.b16 %v5872, %v5870
      %v5909 = vpack.c.b16 %v5875, %v5873
      %v5910 = vpack.c.b16 %v5876, %v5874
      %v5911 = vpack.c.b16 %v5879, %v5877
      %v5912 = vpack.c.b16 %v5880, %v5878
      %v5913 = vpack.c.b16 %v5883, %v5881
      %v5914 = vpack.c.b16 %v5884, %v5882
      %v5915 = vpack.c.b16 %v5887, %v5885
      %v5916 = vpack.c.b16 %v5888, %v5886
      %v5917 = vpack.c.b16 %v5891, %v5889
      %v5918 = vpack.c.b16 %v5892, %v5890
      %v5919 = vpack.c.b16 %v5895, %v5893
      %v5920 = vpack.c.b16 %v5896, %v5894
      %v5921 = vpack.c.b16 %v5899, %v5897
      %v5922 = vpack.c.b16 %v5900, %v5898
      %v5923 = vpack.c.b16 %v5903, %v5901
      %v5924 = vpack.c.b16 %v5904, %v5902
      %v5946 = vsel %vm5291, %v5843, 0
      %5948 = vmatprep.subr.bf16.mxu0 %v5906
      %5949 = vmatpush1.bf16.msra.mxu0 %v5905
      %5950 = vmatprep.subr.bf16.mxu0 %v5908
      %5951 = vmatpush1.bf16.msra.mxu0 %v5907
      %5952 = vmatprep.subr.bf16.mxu0 %v5910
      %5953 = vmatpush1.bf16.msra.mxu0 %v5909
      %5954 = vmatprep.subr.bf16.mxu0 %v5912
      %5955 = vmatpush1.bf16.msra.mxu0 %v5911
      %5956 = vmatprep.subr.bf16.mxu0 %v5914
      %5957 = vmatpush1.bf16.msra.mxu0 %v5913
      %5958 = vmatprep.subr.bf16.mxu0 %v5916
      %5959 = vmatpush1.bf16.msra.mxu0 %v5915
      %5960 = vmatprep.subr.bf16.mxu0 %v5918
      %5961 = vmatpush1.bf16.msra.mxu0 %v5917
      %5962 = vmatprep.subr.bf16.mxu0 %v5920
      %5963 = vmatpush1.bf16.msra.mxu0 %v5919
      %5964 = vmatprep.subr.bf16.mxu0 %v5922
      %5965 = vmatpush1.bf16.msra.mxu0 %v5921
      %5966 = vmatprep.subr.bf16.mxu0 %v5924
      %5967 = vmatpush1.bf16.msra.mxu0 %v5923
      %5968 = vmatprep.subr.bf16.mxu0 0
      %5969 = vmatpush1.bf16.msra.mxu0 0
      %5970 = vmatprep.subr.bf16.mxu0 0
      %5971 = vmatpush1.bf16.msra.mxu0 0
      %5972 = vmatprep.subr.bf16.mxu0 0
      %5973 = vmatpush1.bf16.msra.mxu0 0
      %5974 = vmatprep.subr.bf16.mxu0 0
      %5975 = vmatpush1.bf16.msra.mxu0 0
      %5976 = vmatprep.subr.bf16.mxu0 0
      %5977 = vmatpush1.bf16.msra.mxu0 0
      %5978 = vmatprep.subr.bf16.mxu0 0
      %5979 = vmatpush1.bf16.msra.mxu0 0
      %5980 = vmatprep.mubr.bf16.mxu0 %v5946
      %5981 = vmatmul.mubr.bf16.gmra.mrb[0].mxu0 %v5842
      %v5982 = vpop.f32.mrb[0].mxu0
      %v5983 = vadd.f32 0.0, %v5982
      %v5984 = vpop.f32.mrb[0].mxu0
      %v5985 = vadd.f32 0.0, %v5984
      %v5986 = vpop.f32.mrb[0].mxu0
      %v5987 = vpop.f32.mrb[0].mxu0
      %5988 = vdwg.mxu0
      %v5989 = vadd.f32 %v5819, %v5983
      %v5990 = vadd.f32 %v5820, %v5985
      %v5991 = vld [vmem:[%s10] sm:$0x3]
      %v5993 = vlaneseq
      %v5994 = vshrl.u32 %v5993, 7
      %v5995 = vsub.s32 0, %v5994
      %v5996 = vrot.slane %v5991, %v5995
      %v5997 = vlaneseq
      %v5998 = vshrl.u32 %v5997, 7
      %v5999 = vsub.s32 1, %v5998
      %v6000 = vrot.slane %v5991, %v5999
      %v6003 = vadd.f32 %v5989, %v5996
      %v6004 = vadd.f32 %v5990, %v6000
      %v6005 = vmax.f32 %v6003, 0.0
      %v6006 = vmax.f32 %v6004, 0.0
      %v6007 = vpack.c.bf16 %v6005, %v6005
      %v6008 = vpack.c.bf16 %v6006, %v6006
      %v6009 = vld [vmem:[%s11] sm:$0xff]
      %v6010 = vld [vmem:[%s11 + $0x8] sm:$0xff]
      %v6011 = vld [vmem:[%s11 + $0x10] sm:$0xff]
      %v6012 = vld [vmem:[%s11 + $0x18] sm:$0xff]
      %v6013 = vld [vmem:[%s11 + $0x20] sm:$0xff]
      %v6014 = vld [vmem:[%s11 + $0x28] sm:$0xff]
      %v6015 = vld [vmem:[%s11 + $0x30] sm:$0xff]
      %v6016 = vld [vmem:[%s11 + $0x38] sm:$0xff]
      %v6017 = vld [vmem:[%s11 + $0x40] sm:$0xff]
      %v6018 = vld [vmem:[%s11 + $0x48] sm:$0xff]
      %v6019 = vld [vmem:[%s11 + $0x50] sm:$0xff]
      %v6020 = vld [vmem:[%s11 + $0x58] sm:$0xff]
      %v6021 = vld [vmem:[%s11 + $0x60] sm:$0xff]
      %v6022 = vld [vmem:[%s11 + $0x68] sm:$0xff]
      %v6023 = vld [vmem:[%s11 + $0x70] sm:$0xff]
      %v6024 = vld [vmem:[%s11 + $0x78] sm:$0xff]
      %v6025 = vld [vmem:[%s11 + $0x80] sm:$0xff]
      %v6026 = vld [vmem:[%s11 + $0x88] sm:$0xff]
      %v6027 = vld [vmem:[%s11 + $0x90] sm:$0xff]
      %v6028 = vld [vmem:[%s11 + $0x98] sm:$0xff]
      %v6029 = vld [vmem:[%s11 + $0xa0] sm:$0xff]
      %v6030 = vld [vmem:[%s11 + $0xa8] sm:$0xff]
      %v6031 = vld [vmem:[%s11 + $0xb0] sm:$0xff]
      %v6032 = vld [vmem:[%s11 + $0xb8] sm:$0xff]
      %v6033 = vld [vmem:[%s11 + $0xc0] sm:$0xff]
      %v6034 = vld [vmem:[%s11 + $0xc8] sm:$0xff]
      %v6035 = vld [vmem:[%s11 + $0xd0] sm:$0xff]
      %v6036 = vld [vmem:[%s11 + $0xd8] sm:$0xff]
      %v6037 = vld [vmem:[%s11 + $0xe0] sm:$0xff]
      %v6038 = vld [vmem:[%s11 + $0xe8] sm:$0xff]
      %v6039 = vld [vmem:[%s12] sm:$0x3]
      %v6070 = vunpack.c.l.b16 %v6009
      %v6071 = vunpack.c.h.b16 %v6009
      %v6072 = vunpack.c.l.b16 %v6010
      %v6073 = vunpack.c.h.b16 %v6010
      %v6074 = vunpack.c.l.b16 %v6011
      %v6075 = vunpack.c.h.b16 %v6011
      %v6076 = vunpack.c.l.b16 %v6012
      %v6077 = vunpack.c.h.b16 %v6012
      %v6078 = vunpack.c.l.b16 %v6013
      %v6079 = vunpack.c.h.b16 %v6013
      %v6080 = vunpack.c.l.b16 %v6014
      %v6081 = vunpack.c.h.b16 %v6014
      %v6082 = vunpack.c.l.b16 %v6015
      %v6083 = vunpack.c.h.b16 %v6015
      %v6084 = vunpack.c.l.b16 %v6016
      %v6085 = vunpack.c.h.b16 %v6016
      %v6086 = vunpack.c.l.b16 %v6017
      %v6087 = vunpack.c.h.b16 %v6017
      %v6088 = vunpack.c.l.b16 %v6018
      %v6089 = vunpack.c.h.b16 %v6018
      %v6090 = vunpack.c.l.b16 %v6019
      %v6091 = vunpack.c.h.b16 %v6019
      %v6092 = vunpack.c.l.b16 %v6020
      %v6093 = vunpack.c.h.b16 %v6020
      %v6094 = vunpack.c.l.b16 %v6021
      %v6095 = vunpack.c.h.b16 %v6021
      %v6096 = vunpack.c.l.b16 %v6022
      %v6097 = vunpack.c.h.b16 %v6022
      %v6098 = vunpack.c.l.b16 %v6023
      %v6099 = vunpack.c.h.b16 %v6023
      %v6100 = vunpack.c.l.b16 %v6024
      %v6101 = vunpack.c.h.b16 %v6024
      %v6102 = vunpack.c.l.b16 %v6025
      %v6103 = vunpack.c.h.b16 %v6025
      %v6104 = vunpack.c.l.b16 %v6026
      %v6105 = vunpack.c.h.b16 %v6026
      %v6106 = vunpack.c.l.b16 %v6027
      %v6107 = vunpack.c.h.b16 %v6027
      %v6108 = vunpack.c.l.b16 %v6028
      %v6109 = vunpack.c.h.b16 %v6028
      %v6110 = vunpack.c.l.b16 %v6029
      %v6111 = vunpack.c.h.b16 %v6029
      %v6112 = vunpack.c.l.b16 %v6030
      %v6113 = vunpack.c.h.b16 %v6030
      %v6114 = vunpack.c.l.b16 %v6031
      %v6115 = vunpack.c.h.b16 %v6031
      %v6116 = vunpack.c.l.b16 %v6032
      %v6117 = vunpack.c.h.b16 %v6032
      %v6118 = vunpack.c.l.b16 %v6033
      %v6119 = vunpack.c.h.b16 %v6033
      %v6120 = vunpack.c.l.b16 %v6034
      %v6121 = vunpack.c.h.b16 %v6034
      %v6122 = vunpack.c.l.b16 %v6035
      %v6123 = vunpack.c.h.b16 %v6035
      %v6124 = vunpack.c.l.b16 %v6036
      %v6125 = vunpack.c.h.b16 %v6036
      %v6126 = vunpack.c.l.b16 %v6037
      %v6127 = vunpack.c.h.b16 %v6037
      %v6128 = vunpack.c.l.b16 %v6038
      %v6129 = vunpack.c.h.b16 %v6038
      %v6130 = vpack.c.b16 %v6072, %v6070
      %v6131 = vpack.c.b16 %v6073, %v6071
      %v6132 = vpack.c.b16 %v6076, %v6074
      %v6133 = vpack.c.b16 %v6077, %v6075
      %v6134 = vpack.c.b16 %v6080, %v6078
      %v6135 = vpack.c.b16 %v6081, %v6079
      %v6136 = vpack.c.b16 %v6084, %v6082
      %v6137 = vpack.c.b16 %v6085, %v6083
      %v6138 = vpack.c.b16 %v6088, %v6086
      %v6139 = vpack.c.b16 %v6089, %v6087
      %v6140 = vpack.c.b16 %v6092, %v6090
      %v6141 = vpack.c.b16 %v6093, %v6091
      %v6142 = vpack.c.b16 %v6096, %v6094
      %v6143 = vpack.c.b16 %v6097, %v6095
      %v6144 = vpack.c.b16 %v6100, %v6098
      %v6145 = vpack.c.b16 %v6101, %v6099
      %v6146 = vpack.c.b16 %v6104, %v6102
      %v6147 = vpack.c.b16 %v6105, %v6103
      %v6148 = vpack.c.b16 %v6108, %v6106
      %v6149 = vpack.c.b16 %v6109, %v6107
      %v6150 = vpack.c.b16 %v6112, %v6110
      %v6151 = vpack.c.b16 %v6113, %v6111
      %v6152 = vpack.c.b16 %v6116, %v6114
      %v6153 = vpack.c.b16 %v6117, %v6115
      %v6154 = vpack.c.b16 %v6120, %v6118
      %v6155 = vpack.c.b16 %v6121, %v6119
      %v6156 = vpack.c.b16 %v6124, %v6122
      %v6157 = vpack.c.b16 %v6125, %v6123
      %v6158 = vpack.c.b16 %v6128, %v6126
      %v6159 = vpack.c.b16 %v6129, %v6127
      %v6191 = vlaneseq
      %v6192 = vshrl.u32 %v6191, 7
      %v6193 = vsub.s32 0, %v6192
      %v6194 = vrot.slane %v6039, %v6193
      %v6195 = vlaneseq
      %v6196 = vshrl.u32 %v6195, 7
      %v6197 = vsub.s32 1, %v6196
      %v6198 = vrot.slane %v6039, %v6197
      %vm6201 = vcmask 916480
      %v6203 = vsel %vm6201, %v6008, 0
      %6205 = vmatprep.subr.bf16.mxu0 %v6131
      %6206 = vmatpush1.bf16.msra.mxu0 %v6130
      %6207 = vmatprep.subr.bf16.mxu0 %v6133
      %6208 = vmatpush1.bf16.msra.mxu0 %v6132
      %6209 = vmatprep.subr.bf16.mxu0 %v6135
      %6210 = vmatpush1.bf16.msra.mxu0 %v6134
      %6211 = vmatprep.subr.bf16.mxu0 %v6137
      %6212 = vmatpush1.bf16.msra.mxu0 %v6136
      %6213 = vmatprep.subr.bf16.mxu0 %v6139
      %6214 = vmatpush1.bf16.msra.mxu0 %v6138
      %6215 = vmatprep.subr.bf16.mxu0 %v6141
      %6216 = vmatpush1.bf16.msra.mxu0 %v6140
      %6217 = vmatprep.subr.bf16.mxu0 %v6143
      %6218 = vmatpush1.bf16.msra.mxu0 %v6142
      %6219 = vmatprep.subr.bf16.mxu0 %v6145
      %6220 = vmatpush1.bf16.msra.mxu0 %v6144
      %6221 = vmatprep.subr.bf16.mxu0 %v6147
      %6222 = vmatpush1.bf16.msra.mxu0 %v6146
      %6223 = vmatprep.subr.bf16.mxu0 %v6149
      %6224 = vmatpush1.bf16.msra.mxu0 %v6148
      %6225 = vmatprep.subr.bf16.mxu0 %v6151
      %6226 = vmatpush1.bf16.msra.mxu0 %v6150
      %6227 = vmatprep.subr.bf16.mxu0 %v6153
      %6228 = vmatpush1.bf16.msra.mxu0 %v6152
      %6229 = vmatprep.subr.bf16.mxu0 %v6155
      %6230 = vmatpush1.bf16.msra.mxu0 %v6154
      %6231 = vmatprep.subr.bf16.mxu0 %v6157
      %6232 = vmatpush1.bf16.msra.mxu0 %v6156
      %6233 = vmatprep.subr.bf16.mxu0 %v6159
      %6234 = vmatpush1.bf16.msra.mxu0 %v6158
      %6235 = vmatprep.subr.bf16.mxu0 0
      %6236 = vmatpush1.bf16.msra.mxu0 0
      %6237 = vmatprep.mubr.bf16.mxu0 %v6203
      %6238 = vmatmul.mubr.bf16.gmra.mrb[0].mxu0 %v6007
      %v6239 = vpop.f32.mrb[0].mxu0
      %v6240 = vadd.f32 %v6194, %v6239
      %v6241 = vpop.f32.mrb[0].mxu0
      %v6242 = vadd.f32 %v6198, %v6241
      %v6243 = vpop.f32.mrb[0].mxu0
      %v6244 = vpop.f32.mrb[0].mxu0
      %6245 = vdwg.mxu0
      %v6246 = vmax.f32 %v6240, 0.0
      %v6247 = vmax.f32 %v6242, 0.0
      %v6248 = vpack.c.bf16 %v6246, %v6246
      %v6249 = vpack.c.bf16 %v6247, %v6247
      %v6250 = vld [vmem:[%s13] sm:$0xf]
      %v6251 = vld [vmem:[%s13 + $0x4] sm:$0xf]
      %v6252 = vld [vmem:[%s13 + $0x8] sm:$0xf]
      %v6253 = vld [vmem:[%s13 + $0xc] sm:$0xf]
      %v6254 = vld [vmem:[%s13 + $0x10] sm:$0xf]
      %v6255 = vld [vmem:[%s13 + $0x14] sm:$0xf]
      %v6256 = vld [vmem:[%s13 + $0x18] sm:$0xf]
      %v6257 = vld [vmem:[%s13 + $0x1c] sm:$0xf]
      %v6258 = vld [vmem:[%s13 + $0x20] sm:$0xf]
      %v6259 = vld [vmem:[%s13 + $0x24] sm:$0xf]
      %v6260 = vld [vmem:[%s13 + $0x28] sm:$0xf]
      %v6261 = vld [vmem:[%s13 + $0x2c] sm:$0xf]
      %v6262 = vld [vmem:[%s13 + $0x30] sm:$0xf]
      %v6263 = vld [vmem:[%s13 + $0x34] sm:$0xf]
      %v6264 = vld [vmem:[%s13 + $0x38] sm:$0xf]
      %v6265 = vld [vmem:[%s13 + $0x3c] sm:$0xf]
      %v6266 = vld [vmem:[%s13 + $0x40] sm:$0xf]
      %v6267 = vld [vmem:[%s13 + $0x44] sm:$0xf]
      %v6268 = vld [vmem:[%s13 + $0x48] sm:$0xf]
      %v6269 = vld [vmem:[%s13 + $0x4c] sm:$0xf]
      %v6270 = vld [vmem:[%s13 + $0x50] sm:$0xf]
      %v6271 = vld [vmem:[%s14] sm:$0x1]
      %v6293 = vunpack.c.l.b16 %v6250
      %v6294 = vunpack.c.l.b16 %v6251
      %v6295 = vunpack.c.l.b16 %v6252
      %v6296 = vunpack.c.l.b16 %v6253
      %v6297 = vunpack.c.l.b16 %v6254
      %v6298 = vunpack.c.l.b16 %v6255
      %v6299 = vunpack.c.l.b16 %v6256
      %v6300 = vunpack.c.l.b16 %v6257
      %v6301 = vunpack.c.l.b16 %v6258
      %v6302 = vunpack.c.l.b16 %v6259
      %v6303 = vunpack.c.l.b16 %v6260
      %v6304 = vunpack.c.l.b16 %v6261
      %v6305 = vunpack.c.l.b16 %v6262
      %v6306 = vunpack.c.l.b16 %v6263
      %v6307 = vunpack.c.l.b16 %v6264
      %v6308 = vunpack.c.l.b16 %v6265
      %v6309 = vunpack.c.l.b16 %v6266
      %v6310 = vunpack.c.l.b16 %v6267
      %v6311 = vunpack.c.l.b16 %v6268
      %v6312 = vunpack.c.l.b16 %v6269
      %v6313 = vunpack.c.l.b16 %v6270
      %v6314 = vpack.c.b16 %v6294, %v6293
      %v6315 = vpack.c.b16 %v6296, %v6295
      %v6316 = vpack.c.b16 %v6298, %v6297
      %v6317 = vpack.c.b16 %v6300, %v6299
      %v6318 = vpack.c.b16 %v6302, %v6301
      %v6319 = vpack.c.b16 %v6304, %v6303
      %v6320 = vpack.c.b16 %v6306, %v6305
      %v6321 = vpack.c.b16 %v6308, %v6307
      %v6322 = vpack.c.b16 %v6310, %v6309
      %v6323 = vpack.c.b16 %v6312, %v6311
      %v6324 = vpack.c.b16 %v6313, %v6313
      %v6336 = vsel %vm2955, %v6249, 0
      %v6339 = vsel %vm2959, %v6324, 0
      %6341 = vmatprep.subr.bf16.mxu0 0
      %6342 = vmatpush1.bf16.msra.mxu0 %v6314
      %6343 = vmatprep.subr.bf16.mxu0 0
      %6344 = vmatpush1.bf16.msra.mxu0 %v6315
      %6345 = vmatprep.subr.bf16.mxu0 0
      %6346 = vmatpush1.bf16.msra.mxu0 %v6316
      %6347 = vmatprep.subr.bf16.mxu0 0
      %6348 = vmatpush1.bf16.msra.mxu0 %v6317
      %6349 = vmatprep.subr.bf16.mxu0 0
      %6350 = vmatpush1.bf16.msra.mxu0 %v6318
      %6351 = vmatprep.subr.bf16.mxu0 0
      %6352 = vmatpush1.bf16.msra.mxu0 %v6319
      %6353 = vmatprep.subr.bf16.mxu0 0
      %6354 = vmatpush1.bf16.msra.mxu0 %v6320
      %6355 = vmatprep.subr.bf16.mxu0 0
      %6356 = vmatpush1.bf16.msra.mxu0 %v6321
      %6357 = vmatprep.subr.bf16.mxu0 0
      %6358 = vmatpush1.bf16.msra.mxu0 %v6322
      %6359 = vmatprep.subr.bf16.mxu0 0
      %6360 = vmatpush1.bf16.msra.mxu0 %v6323
      %6361 = vmatprep.subr.bf16.mxu0 0
      %6362 = vmatpush1.bf16.msra.mxu0 %v6339
      %6363 = vmatprep.subr.bf16.mxu0 0
      %6364 = vmatpush1.bf16.msra.mxu0 0
      %6365 = vmatprep.subr.bf16.mxu0 0
      %6366 = vmatpush1.bf16.msra.mxu0 0
      %6367 = vmatprep.subr.bf16.mxu0 0
      %6368 = vmatpush1.bf16.msra.mxu0 0
      %6369 = vmatprep.subr.bf16.mxu0 0
      %6370 = vmatpush1.bf16.msra.mxu0 0
      %6371 = vmatprep.subr.bf16.mxu0 0
      %6372 = vmatpush1.bf16.msra.mxu0 0
      %6373 = vmatprep.mubr.bf16.mxu0 %v6336
      %6374 = vmatmul.mubr.bf16.gmra.mrb[0].mxu0 %v6248
      %v6375 = vpop.f32.mrb[0].mxu0
      %v6376 = vadd.f32 %v6271, %v6375
      %v6377 = vpop.f32.mrb[0].mxu0
      %v6378 = vpop.f32.mrb[0].mxu0
      %v6379 = vpop.f32.mrb[0].mxu0
      %6380 = vdwg.mxu0
      %6381 = vst [vmem:[%s490] sm:$0x1] %v6376
      %p6382 = scmp.lt.s32.totalorder %s26, 1
      %s6383 = scalar_select %p6382, %s26, 1
      %s6384 = scalar_lea.vmem %s15, %s6383
      // Predicated region
      $region81: #{lenet_apply.1} parent=79 // pred_check
        %p6385 = pneg %p364
      $region82: #{lenet_apply.1} parent=79 // pred_check_branch
        %6387 = sbr.rel (%p6385) target = $region84
      $region83: #{lenet_apply.1} parent=79 // pred_region
        _
      $region84: #{lenet_apply.1} parent=79 // pred_fallthru
        _
    $region80: #{lenet_apply.1} parent=5 // pred_fallthru
      _
    %p6388 = scmp.le.s32.totalorder 2, %s21
    // Predicated region
    $region85: #{lenet_apply.1} parent=5 // pred_check
      %p6389 = pneg %p6388
    $region86: #{lenet_apply.1} parent=5 // pred_check_branch
      %6391 = sbr.rel (%p6389) target = $region88
    $region87: #{lenet_apply.1} parent=5 // pred_region
      %s6392 = ssub.s32 %s21, 2
      // Predicated region
      $region89: #{lenet_apply.1} parent=87 // pred_check
        %p6393 = pneg %p370
      $region90: #{lenet_apply.1} parent=87 // pred_check_branch
        %6395 = sbr.rel (%p6393) target = $region92
      $region91: #{lenet_apply.1} parent=87 // pred_region
        %p6396 = scmp.lt.s32.totalorder %s27, 1
        %s6397 = scalar_select %p6396, %s27, 1
        %s6398 = scalar_lea.vmem %s15, %s6397
      $region92: #{lenet_apply.1} parent=87 // pred_fallthru
        _
    $region88: #{lenet_apply.1} parent=5 // pred_fallthru
      _
  $region6: #{lenet_apply.1} parent=0 // loop_footer
    %s25 = sadd.s32 1, %s21
  $region7: #{lenet_apply.1} parent=0 // loop_footer_branch
    %20 = sbr.rel target = $region3
  $region8: #{lenet_apply.1} parent=0 // loop_exit
    _

</llo_original>
